<compile_context>
chip_gen: v7x
topology: tpu7x:2x2x1
jax: 0.10.0
libtpu: 0.0.40
codegen_flags: <defaults>
</compile_context>

<pallas_src>
import functools

import jax
import jax.numpy as jnp
from jax.experimental import pallas as pl
from jax.experimental.pallas import tpu as pltpu

NEG_INF = -9e15
ALPHA = 0.2      # LeakyReLU slope inside GAT attention
LANES = 128      # TPU lane width; final heads / outputs padded to this


def _leaky_relu(x):
    return jnp.where(x > 0, x, ALPHA * x)


def _elu(x):
    return jnp.where(x > 0, x, jnp.exp(x) - 1.0)


def _relu(x):
    return jnp.maximum(x, 0.0)


# ----------------------------------------------------------------------------
# Pallas kernel: full actor + critic forward for ONE graph state per grid step
# ----------------------------------------------------------------------------
def actor_critic_kernel(dims, offs, x_ref, spec_ref, adj_ref, slab_ref, out_ref):
    (N, D, F, H, Cg, S, nhid_fc, C, nhid_f) = dims
    nh = 2 * H                       # actor heads followed by critic heads

    def p(name):                     # static slab slice -> one parameter tile
        off, r, c = offs[name]
        return slab_ref[off:off + r, 0:c]

    x = x_ref[0]                     # [N, D]
    spec = spec_ref[0]               # [1, S]
    adj = adj_ref[0]                 # [N, N]
    # adjacency bias computed ONCE, reused by all 2*H + 2 attention softmaxes
    adj_bias = jnp.where(adj > 0, 0.0, NEG_INF)

    def masked_softmax(e):
        e = e + adj_bias
        e = e - jnp.max(e, axis=1, keepdims=True)
        pe = jnp.exp(e)
        return pe * pl.reciprocal(jnp.sum(pe, axis=1, keepdims=True), approx=True)

    # ---- layer 1: all heads of BOTH branches in one lane-dense matmul ------
    Wh_all = jnp.dot(x, p("W_all"), preferred_element_type=jnp.float32)    # [N, 2HF]
    # all (src, dst) attention projections in one matmul (block-diag A1)
    f1 = jnp.dot(Wh_all, p("A1"), preferred_element_type=jnp.float32)      # [N, 2*nh]
    f1_t = f1.T                                                            # one small transpose
    heads = []
    for k in range(nh):              # static unroll; per-head softmax + mix
        e = _leaky_relu(f1[:, k:k + 1] + f1_t[nh + k:nh + k + 1, :])       # [N, N]
        att = masked_softmax(e)
        heads.append(_elu(jnp.dot(att, Wh_all[:, k * F:(k + 1) * F],
                                  preferred_element_type=jnp.float32)))
    h1 = jnp.concatenate(heads, axis=1)                                    # [N, 2HF]

    # ---- layer 2: out-attention of both branches (block-diag Wo / A2) ------
    Wh2 = jnp.dot(h1, p("Wo_bd"), preferred_element_type=jnp.float32)      # [N, 2Cg]
    f2 = jnp.dot(Wh2, p("A2"), preferred_element_type=jnp.float32)         # [N, 4]
    f2_t = f2.T
    gat = []
    for b in range(2):               # 0 = actor, 1 = critic
        e = _leaky_relu(f2[:, b:b + 1] + f2_t[2 + b:3 + b, :])
        att = masked_softmax(e)
        gat.append(_elu(jnp.dot(att, Wh2[:, b * Cg:(b + 1) * Cg],
                                preferred_element_type=jnp.float32)))
    a_gat, c_gat = gat

    # ---- spec FC branch, both heads fused (dropout = identity at inference) -
    spec_h = _relu(jnp.dot(spec, p("F1w"), preferred_element_type=jnp.float32)
                   + p("F1b"))                                             # [1, 2*nhid_fc]
    a_spec = spec_h[:, :nhid_fc]
    c_spec = spec_h[:, nhid_fc:]

    # ---- actor head: per-node softmax over lane-padded logits --------------
    a_bias = jnp.dot(a_spec, p("F2s_a"), preferred_element_type=jnp.float32) + p("F2b_a")
    z = _relu(jnp.dot(a_gat, p("F2g_a"), preferred_element_type=jnp.float32) + a_bias)
    # F3w_a / F3b_a are host-padded to 128 lanes; pad lanes carry a NEG_INF
    # bias so the 128-lane softmax equals the C-lane softmax exactly.
    logits = jnp.dot(z, p("F3w_a"), preferred_element_type=jnp.float32) + p("F3b_a")
    logits = logits - jnp.max(logits, axis=1, keepdims=True)
    pe = jnp.exp(logits)
    probs = pe * pl.reciprocal(jnp.sum(pe, axis=1, keepdims=True), approx=True)  # [N, 128]

    # ---- critic head: mean-pool over nodes ----------------------------------
    g = jnp.mean(c_gat, axis=0, keepdims=True)                             # [1, Cg]
    zc = _relu(jnp.dot(g, p("F2g_c"), preferred_element_type=jnp.float32)
               + jnp.dot(c_spec, p("F2s_c"), preferred_element_type=jnp.float32)
               + p("F2b_c"))
    value_row = jnp.dot(zc, p("F3w_c"), preferred_element_type=jnp.float32) + p("F3b_c")  # [1,128]

    # ---- lane-dense output slab: rows [0,N) = probs, row N lane 0 = value ---
    out_ref[0, 0:N, :] = probs
    out_ref[0, N:N + 8, :] = jnp.broadcast_to(value_row, (8, LANES))


# ----------------------------------------------------------------------------
# Host-side parameter fusion + packing into one lane-padded VMEM slab
# ----------------------------------------------------------------------------
def build_param_slab(actor_p, critic_p, dims):
    (N, D, F, H, Cg, S, nhid_fc, C, nhid_f) = dims
    (Wa, Asa, Ada, Woa, Aosa, Aoda, F1wa, F1ba,
     F2ga, F2sa, F2ba, F3wa, F3ba) = actor_p
    (Wc, Asc, Adc, Woc, Aosc, Aodc, F1wc, F1bc,
     F2gc, F2sc, F2bc, F3wc, F3bc) = critic_p

    HF = H * F
    nh = 2 * H

    # layer-1 fused projection [D, 2*H*F]: actor heads then critic heads
    W_all = jnp.concatenate(
        [jnp.transpose(Wa, (1, 0, 2)).reshape(D, HF),
         jnp.transpose(Wc, (1, 0, 2)).reshape(D, HF)], axis=1)

    # layer-1 attention vectors, block-diagonal [2*H*F, 4*H]
    # columns 0..nh-1 -> per-head src scores, columns nh..2nh-1 -> dst scores
    A1 = jnp.zeros((2 * HF, 2 * nh), jnp.float32)
    for k in range(nh):
        a_s = (Asa if k < H else Asc)[k % H][:, 0]
        a_d = (Ada if k < H else Adc)[k % H][:, 0]
        A1 = A1.at[k * F:(k + 1) * F, k].set(a_s)
        A1 = A1.at[k * F:(k + 1) * F, nh + k].set(a_d)

    # layer-2 block-diagonal head mixing [2*H*F, 2*Cg]
    Wo_bd = jnp.zeros((2 * HF, 2 * Cg), jnp.float32)
    Wo_bd = Wo_bd.at[:HF, :Cg].set(Woa.reshape(HF, Cg))
    Wo_bd = Wo_bd.at[HF:, Cg:].set(Woc.reshape(HF, Cg))

    # layer-2 attention vectors [2*Cg, 4]: cols = [src_a, src_c, dst_a, dst_c]
    A2 = jnp.zeros((2 * Cg, 4), jnp.float32)
    A2 = A2.at[:Cg, 0].set(Aosa[:, 0])
    A2 = A2.at[Cg:, 1].set(Aosc[:, 0])
    A2 = A2.at[:Cg, 2].set(Aoda[:, 0])
    A2 = A2.at[Cg:, 3].set(Aodc[:, 0])

    F1w = jnp.concatenate([F1wa, F1wc], axis=1)          # [S, 2*nhid_fc]
    F1b = jnp.concatenate([F1ba, F1bc], axis=1)          # [1, 2*nhid_fc]

    # lane-pad the final heads. Actor bias pad lanes = NEG_INF so the in-kernel
    # 128-lane softmax is exactly the C-lane softmax (pad probs are exactly 0).
    F3wa_pad = jnp.zeros((nhid_f, LANES), jnp.float32).at[:, :C].set(F3wa)
    F3ba_pad = jnp.full((1, LANES), NEG_INF, jnp.float32).at[:, :C].set(F3ba)
    F3wc_pad = jnp.zeros((nhid_f, LANES), jnp.float32).at[:, :1].set(F3wc)
    F3bc_pad = jnp.zeros((1, LANES), jnp.float32).at[:, :1].set(F3bc)

    entries = [
        ("W_all", W_all), ("A1", A1), ("Wo_bd", Wo_bd), ("A2", A2),
        ("F1w", F1w), ("F1b", F1b),
        ("F2g_a", F2ga), ("F2s_a", F2sa), ("F2b_a", F2ba),
        ("F3w_a", F3wa_pad), ("F3b_a", F3ba_pad),
        ("F2g_c", F2gc), ("F2s_c", F2sc), ("F2b_c", F2bc),
        ("F3w_c", F3wc_pad), ("F3b_c", F3bc_pad),
    ]
    width = max(a.shape[1] for _, a in entries)          # 256
    offs = {}
    row = 0
    for name, a in entries:
        r, c = a.shape
        offs[name] = (row, r, c)                         # static Python ints
        row += -(-r // 8) * 8                            # sublane-align blocks
    slab = jnp.zeros((row, width), jnp.float32)
    for name, a in entries:
        off, r, c = offs[name]
        slab = slab.at[off:off + r, :c].set(a)
    return slab, offs


# ----------------------------------------------------------------------------
# Wrapper: one pallas_call over a batch of B graph states
# ----------------------------------------------------------------------------
def actor_critic_forward(state_gan, state_spec, adj, slab, offs, dims):
    """state_gan [B,N,D], state_spec [B,1,S], adj [B,N,N] -> probs [B,N,C], value [B]."""
    B, N, D = state_gan.shape
    S = state_spec.shape[-1]
    C = dims[7]
    rows_out = N + 8                     # N probs rows + one (sublane-padded) value row
    kernel = functools.partial(actor_critic_kernel, dims, offs)
    out = pl.pallas_call(
        kernel,
        out_shape=jax.ShapeDtypeStruct((B, rows_out, LANES), jnp.float32),
        grid=(B,),                       # one rollout state per grid step
        in_specs=[
            pl.BlockSpec((1, N, D), lambda b: (b, 0, 0)),
            pl.BlockSpec((1, 1, S), lambda b: (b, 0, 0)),
            pl.BlockSpec((1, N, N), lambda b: (b, 0, 0)),
            # constant index_map: the packed parameter slab is DMA'd once and
            # stays VMEM-resident across every grid step.
            pl.BlockSpec(slab.shape, lambda b: (0, 0)),
        ],
        out_specs=pl.BlockSpec((1, rows_out, LANES), lambda b: (b, 0, 0)),
        compiler_params=pltpu.CompilerParams(
            dimension_semantics=("parallel",)),   # uses both TCs on v7x
    )(state_gan.astype(jnp.float32), state_spec.astype(jnp.float32),
      adj.astype(jnp.float32), slab)
    probs = out[:, :N, :C]
    value = out[:, N, 0]
    return probs, value


# ----------------------------------------------------------------------------
# Synthetic parameters + pure-JAX unfused reference (for validation)
# ----------------------------------------------------------------------------
def make_branch_params(key, state_gan_dim, n_latent_var, num_heads, nclass_gan,
                       state_spec_dim, nhid_fc, n_out, nhid_f):
    ks = jax.random.split(key, 16)
    s = 0.1
    p = [
        s * jax.random.normal(ks[0], (num_heads, state_gan_dim, n_latent_var)),  # W
        s * jax.random.normal(ks[1], (num_heads, n_latent_var, 1)),              # a_src
        s * jax.random.normal(ks[2], (num_heads, n_latent_var, 1)),              # a_dst
        s * jax.random.normal(ks[3], (num_heads, n_latent_var, nclass_gan)),     # Wo
        s * jax.random.normal(ks[4], (nclass_gan, 1)),                           # a_out_src
        s * jax.random.normal(ks[5], (nclass_gan, 1)),                           # a_out_dst
        s * jax.random.normal(ks[6], (state_spec_dim, nhid_fc)),                 # fc1 W
        s * jax.random.normal(ks[7], (1, nhid_fc)),                              # fc1 b
        s * jax.random.normal(ks[8], (nclass_gan, nhid_f)),                      # fc2 (gat)
        s * jax.random.normal(ks[9], (nhid_fc, nhid_f)),                         # fc2 (spec)
        s * jax.random.normal(ks[10], (1, nhid_f)),                              # fc2 b
        s * jax.random.normal(ks[11], (nhid_f, n_out)),                          # fc3 W
        s * jax.random.normal(ks[12], (1, n_out)),                               # fc3 b
    ]
    return [jnp.asarray(a, jnp.float32) for a in p]


def _gat_attention_ref(x, adj, W, a_src, a_dst):
    Wh = x @ W
    e = _leaky_relu(Wh @ a_src + (Wh @ a_dst).T)
    e = jnp.where(adj > 0, e, NEG_INF)
    e = e - jnp.max(e, axis=1, keepdims=True)
    p = jnp.exp(e)
    return (p / jnp.sum(p, axis=1, keepdims=True)) @ Wh


def _trunk_ref(x, spec, adj, params, H):
    W, As, Ad, Wo, Aos, Aod, F1w, F1b = params[:8]
    Wh2 = None
    for h in range(H):
        contrib = _elu(_gat_attention_ref(x, adj, W[h], As[h], Ad[h])) @ Wo[h]
        Wh2 = contrib if Wh2 is None else Wh2 + contrib
    e = _leaky_relu(Wh2 @ Aos + (Wh2 @ Aod).T)
    e = jnp.where(adj > 0, e, NEG_INF)
    e = e - jnp.max(e, axis=1, keepdims=True)
    p = jnp.exp(e)
    h_gat = _elu((p / jnp.sum(p, axis=1, keepdims=True)) @ Wh2)
    spec_h = _relu(spec @ F1w + F1b)
    return h_gat, spec_h


def reference_forward(x, spec, adj, actor_p, critic_p, H):
    a_gat, a_spec = _trunk_ref(x, spec, adj, actor_p, H)
    F2g, F2s, F2b, F3w, F3b = actor_p[8:]
    z = _relu(a_gat @ F2g + a_spec @ F2s + F2b)
    probs = jax.nn.softmax(z @ F3w + F3b, axis=1)
    c_gat, c_spec = _trunk_ref(x, spec, adj, critic_p, H)
    F2g, F2s, F2b, F3w, F3b = critic_p[8:]
    g = jnp.mean(c_gat, axis=0, keepdims=True)
    zc = _relu(g @ F2g + c_spec @ F2s + F2b)
    value = zc @ F3w + F3b
    return probs, value


if __name__ == "__main__":
    # Module-consistent small sizes; B rollout states batched behind one grid.
    B = 4
    N = 8
    state_gan_dim = 16
    n_latent_var = 32
    num_heads = 4
    nclass_gan = 16
    state_spec_dim = 8
    nhid_fc = 32
    nclass_f = 6
    nhid_f = 32

    dims = (N, state_gan_dim, n_latent_var, num_heads, nclass_gan,
            state_spec_dim, nhid_fc, nclass_f, nhid_f)

    root = jax.random.PRNGKey(0)
    k_x, k_s, k_adj, k_act, k_a, k_c = jax.random.split(root, 6)

    state_gan = jax.random.normal(k_x, (B, N, state_gan_dim), dtype=jnp.float32)
    state_spec = jax.random.normal(k_s, (B, 1, state_spec_dim), dtype=jnp.float32)
    adj = (jax.random.uniform(k_adj, (B, N, N)) > 0.5).astype(jnp.float32)
    adj = jnp.maximum(adj, jnp.eye(N, dtype=jnp.float32)[None])      # self-loops

    actor_params = make_branch_params(k_a, state_gan_dim, n_latent_var, num_heads,
                                      nclass_gan, state_spec_dim, nhid_fc,
                                      nclass_f, nhid_f)
    critic_params = make_branch_params(k_c, state_gan_dim, n_latent_var, num_heads,
                                       nclass_gan, state_spec_dim, nhid_fc,
                                       1, nhid_f)

    slab, offs = build_param_slab(actor_params, critic_params, dims)

    probs, value = actor_critic_forward(state_gan, state_spec, adj, slab, offs, dims)
    probs, value = jax.block_until_ready((probs, value))

    # ---- validate the fused kernel against the unfused pure-JAX reference ----
    with jax.default_matmul_precision("float32"):
        ref_probs, ref_value = jax.vmap(
            lambda x, s, a: reference_forward(x, s, a, actor_params,
                                              critic_params, num_heads)
        )(state_gan, state_spec, adj)
    ref_value = ref_value.reshape(B)

    assert bool(jnp.all(jnp.isfinite(probs))) and bool(jnp.all(jnp.isfinite(value)))
    assert bool(jnp.allclose(jnp.sum(probs, axis=-1), 1.0, atol=1e-2))
    assert bool(jnp.allclose(probs, ref_probs, rtol=5e-2, atol=5e-3)), \
        float(jnp.max(jnp.abs(probs - ref_probs)))
    assert bool(jnp.allclose(value, ref_value, rtol=5e-2, atol=1e-2)), \
        float(jnp.max(jnp.abs(value - ref_value)))

    # `evaluate`-style glue (pure JAX, not the hot path).
    # TODO(synk): `act`'s Categorical.sample + memory appends are host-side /
    #             stateful and intentionally stay outside the kernel.
    action = jax.random.randint(k_act, (B, N), 0, nclass_f)
    logp = jnp.log(jnp.take_along_axis(probs, action[..., None], axis=-1))[..., 0]
    log_prob_sum = jnp.sum(logp, axis=-1)
    dist_entropy = -jnp.sum(probs * jnp.log(probs), axis=-1)
    jax.block_until_ready((log_prob_sum, dist_entropy, value))

    print("KERNEL_OK")
</pallas_src>

<mosaic_0001>
module attributes {stable_mosaic.version = 11 : i64} {
  func.func @actor_critic_kernel(%arg0: i32, %arg1: memref<1x8x16xf32, #tpu.memory_space<vmem>>, %arg2: memref<1x1x8xf32, #tpu.memory_space<vmem>>, %arg3: memref<1x8x8xf32, #tpu.memory_space<vmem>>, %arg4: memref<768x256xf32, #tpu.memory_space<vmem>>, %arg5: memref<1x16x128xf32, #tpu.memory_space<vmem>>) attributes {dimension_semantics = [#tpu.dimension_semantics<parallel>], iteration_bounds = array<i64: 4>, scalar_prefetch = 0 : i64, scratch_operands = 0 : i64, tpu.core_type = #tpu.core_type<tc>, window_params = [{transform_indices = @transform_0, window_bounds = array<i64: 1, 8, 16>}, {transform_indices = @transform_1, window_bounds = array<i64: 1, 1, 8>}, {transform_indices = @transform_2, window_bounds = array<i64: 1, 8, 8>}, {pipeline_mode = #tpu.pipeline_mode<synchronous>, transform_indices = @transform_3, window_bounds = array<i64: 768, 256>}, {transform_indices = @transform_4, window_bounds = array<i64: 1, 16, 128>}]} {
    %c0 = arith.constant 0 : index
    %c0_0 = arith.constant 0 : index
    %c0_1 = arith.constant 0 : index
    %0 = vector.load %arg1[%c0, %c0_0, %c0_1] : memref<1x8x16xf32, #tpu.memory_space<vmem>>, vector<1x8x16xf32>
    %1 = vector.shape_cast %0 : vector<1x8x16xf32> to vector<8x16xf32>
    %c0_2 = arith.constant 0 : index
    %c0_3 = arith.constant 0 : index
    %c0_4 = arith.constant 0 : index
    %2 = vector.load %arg2[%c0_2, %c0_3, %c0_4] : memref<1x1x8xf32, #tpu.memory_space<vmem>>, vector<1x1x8xf32>
    %3 = vector.shape_cast %2 : vector<1x1x8xf32> to vector<1x8xf32>
    %c0_5 = arith.constant 0 : index
    %c0_6 = arith.constant 0 : index
    %c0_7 = arith.constant 0 : index
    %4 = vector.load %arg3[%c0_5, %c0_6, %c0_7] : memref<1x8x8xf32, #tpu.memory_space<vmem>>, vector<1x8x8xf32>
    %5 = vector.shape_cast %4 : vector<1x8x8xf32> to vector<8x8xf32>
    %cst = arith.constant 0.000000e+00 : f32
    %6 = vector.broadcast %cst : f32 to vector<8x8xf32>
    %7 = arith.cmpf ogt, %5, %6 : vector<8x8xf32>
    %cst_8 = arith.constant 0.000000e+00 : f32
    %cst_9 = arith.constant -9.000000e+15 : f32
    %8 = vector.broadcast %cst_8 : f32 to vector<8x8xf32>
    %9 = vector.broadcast %cst_9 : f32 to vector<8x8xf32>
    %10 = arith.select %7, %8, %9 : vector<8x8xi1>, vector<8x8xf32>
    %c0_10 = arith.constant 0 : index
    %c0_11 = arith.constant 0 : index
    %11 = vector.load %arg4[%c0_10, %c0_11] : memref<768x256xf32, #tpu.memory_space<vmem>>, vector<16x256xf32>
    %cst_12 = arith.constant dense<0.000000e+00> : vector<8x256xf32>
    %12 = tpu.matmul %1, %11, %cst_12 {dimension_numbers = #tpu.dot_dimension_numbers<[1], [0], [0], [1], [0, 0, 1, 1], [], []>} : vector<8x16xf32>, vector<16x256xf32>, vector<8x256xf32> -> vector<8x256xf32>
    %c16 = arith.constant 16 : index
    %c0_13 = arith.constant 0 : index
    %13 = vector.load %arg4[%c16, %c0_13] : memref<768x256xf32, #tpu.memory_space<vmem>>, vector<256x16xf32>
    %cst_14 = arith.constant dense<0.000000e+00> : vector<8x16xf32>
    %14 = tpu.matmul %12, %13, %cst_14 {dimension_numbers = #tpu.dot_dimension_numbers<[1], [0], [0], [1], [0, 0, 1, 1], [], []>} : vector<8x256xf32>, vector<256x16xf32>, vector<8x16xf32> -> vector<8x16xf32>
    %15 = tpu.transpose %14, [1, 0] : vector<8x16xf32> -> vector<16x8xf32>
    %16 = vector.extract_strided_slice %14 {offsets = [0, 0], sizes = [8, 1], strides = [1, 1]} : vector<8x16xf32> to vector<8x1xf32>
    %17 = vector.extract_strided_slice %15 {offsets = [8, 0], sizes = [1, 8], strides = [1, 1]} : vector<16x8xf32> to vector<1x8xf32>
    %18 = vector.broadcast %16 : vector<8x1xf32> to vector<8x8xf32>
    %19 = vector.broadcast %17 : vector<1x8xf32> to vector<8x8xf32>
    %20 = arith.addf %18, %19 : vector<8x8xf32>
    %cst_15 = arith.constant 0.000000e+00 : f32
    %21 = vector.broadcast %cst_15 : f32 to vector<8x8xf32>
    %22 = arith.cmpf ogt, %20, %21 : vector<8x8xf32>
    %cst_16 = arith.constant 2.000000e-01 : f32
    %23 = vector.broadcast %cst_16 : f32 to vector<8x8xf32>
    %24 = arith.mulf %23, %20 : vector<8x8xf32>
    %25 = arith.select %22, %20, %24 : vector<8x8xi1>, vector<8x8xf32>
    %26 = arith.addf %25, %10 : vector<8x8xf32>
    %cst_17 = arith.constant dense<0xFF800000> : vector<8xf32>
    %27 = vector.multi_reduction <maximumf>, %26, %cst_17 [1] : vector<8x8xf32> to vector<8xf32>
    %28 = vector.shape_cast %27 : vector<8xf32> to vector<8x1xf32>
    %29 = vector.broadcast %28 : vector<8x1xf32> to vector<8x8xf32>
    %30 = arith.subf %26, %29 : vector<8x8xf32>
    %31 = math.exp %30 : vector<8x8xf32>
    %cst_18 = arith.constant dense<0.000000e+00> : vector<8xf32>
    %32 = vector.multi_reduction <add>, %31, %cst_18 [1] : vector<8x8xf32> to vector<8xf32>
    %33 = vector.shape_cast %32 : vector<8xf32> to vector<8x1xf32>
    %34 = tpu.reciprocal %33 {approx = true} : vector<8x1xf32> -> vector<8x1xf32>
    %35 = vector.broadcast %34 : vector<8x1xf32> to vector<8x8xf32>
    %36 = arith.mulf %31, %35 : vector<8x8xf32>
    %37 = vector.extract_strided_slice %12 {offsets = [0, 0], sizes = [8, 32], strides = [1, 1]} : vector<8x256xf32> to vector<8x32xf32>
    %cst_19 = arith.constant dense<0.000000e+00> : vector<8x32xf32>
    %38 = tpu.matmul %36, %37, %cst_19 {dimension_numbers = #tpu.dot_dimension_numbers<[1], [0], [0], [1], [0, 0, 1, 1], [], []>} : vector<8x8xf32>, vector<8x32xf32>, vector<8x32xf32> -> vector<8x32xf32>
    %cst_20 = arith.constant 0.000000e+00 : f32
    %39 = vector.broadcast %cst_20 : f32 to vector<8x32xf32>
    %40 = arith.cmpf ogt, %38, %39 : vector<8x32xf32>
    %41 = math.exp %38 : vector<8x32xf32>
    %cst_21 = arith.constant 1.000000e+00 : f32
    %42 = vector.broadcast %cst_21 : f32 to vector<8x32xf32>
    %43 = arith.subf %41, %42 : vector<8x32xf32>
    %44 = arith.select %40, %38, %43 : vector<8x32xi1>, vector<8x32xf32>
    %45 = vector.extract_strided_slice %14 {offsets = [0, 1], sizes = [8, 1], strides = [1, 1]} : vector<8x16xf32> to vector<8x1xf32>
    %46 = vector.extract_strided_slice %15 {offsets = [9, 0], sizes = [1, 8], strides = [1, 1]} : vector<16x8xf32> to vector<1x8xf32>
    %47 = vector.broadcast %45 : vector<8x1xf32> to vector<8x8xf32>
    %48 = vector.broadcast %46 : vector<1x8xf32> to vector<8x8xf32>
    %49 = arith.addf %47, %48 : vector<8x8xf32>
    %cst_22 = arith.constant 0.000000e+00 : f32
    %50 = vector.broadcast %cst_22 : f32 to vector<8x8xf32>
    %51 = arith.cmpf ogt, %49, %50 : vector<8x8xf32>
    %cst_23 = arith.constant 2.000000e-01 : f32
    %52 = vector.broadcast %cst_23 : f32 to vector<8x8xf32>
    %53 = arith.mulf %52, %49 : vector<8x8xf32>
    %54 = arith.select %51, %49, %53 : vector<8x8xi1>, vector<8x8xf32>
    %55 = arith.addf %54, %10 : vector<8x8xf32>
    %cst_24 = arith.constant dense<0xFF800000> : vector<8xf32>
    %56 = vector.multi_reduction <maximumf>, %55, %cst_24 [1] : vector<8x8xf32> to vector<8xf32>
    %57 = vector.shape_cast %56 : vector<8xf32> to vector<8x1xf32>
    %58 = vector.broadcast %57 : vector<8x1xf32> to vector<8x8xf32>
    %59 = arith.subf %55, %58 : vector<8x8xf32>
    %60 = math.exp %59 : vector<8x8xf32>
    %cst_25 = arith.constant dense<0.000000e+00> : vector<8xf32>
    %61 = vector.multi_reduction <add>, %60, %cst_25 [1] : vector<8x8xf32> to vector<8xf32>
    %62 = vector.shape_cast %61 : vector<8xf32> to vector<8x1xf32>
    %63 = tpu.reciprocal %62 {approx = true} : vector<8x1xf32> -> vector<8x1xf32>
    %64 = vector.broadcast %63 : vector<8x1xf32> to vector<8x8xf32>
    %65 = arith.mulf %60, %64 : vector<8x8xf32>
    %66 = vector.extract_strided_slice %12 {offsets = [0, 32], sizes = [8, 32], strides = [1, 1]} : vector<8x256xf32> to vector<8x32xf32>
    %cst_26 = arith.constant dense<0.000000e+00> : vector<8x32xf32>
    %67 = tpu.matmul %65, %66, %cst_26 {dimension_numbers = #tpu.dot_dimension_numbers<[1], [0], [0], [1], [0, 0, 1, 1], [], []>} : vector<8x8xf32>, vector<8x32xf32>, vector<8x32xf32> -> vector<8x32xf32>
    %cst_27 = arith.constant 0.000000e+00 : f32
    %68 = vector.broadcast %cst_27 : f32 to vector<8x32xf32>
    %69 = arith.cmpf ogt, %67, %68 : vector<8x32xf32>
    %70 = math.exp %67 : vector<8x32xf32>
    %cst_28 = arith.constant 1.000000e+00 : f32
    %71 = vector.broadcast %cst_28 : f32 to vector<8x32xf32>
    %72 = arith.subf %70, %71 : vector<8x32xf32>
    %73 = arith.select %69, %67, %72 : vector<8x32xi1>, vector<8x32xf32>
    %74 = vector.extract_strided_slice %14 {offsets = [0, 2], sizes = [8, 1], strides = [1, 1]} : vector<8x16xf32> to vector<8x1xf32>
    %75 = vector.extract_strided_slice %15 {offsets = [10, 0], sizes = [1, 8], strides = [1, 1]} : vector<16x8xf32> to vector<1x8xf32>
    %76 = vector.broadcast %74 : vector<8x1xf32> to vector<8x8xf32>
    %77 = vector.broadcast %75 : vector<1x8xf32> to vector<8x8xf32>
    %78 = arith.addf %76, %77 : vector<8x8xf32>
    %cst_29 = arith.constant 0.000000e+00 : f32
    %79 = vector.broadcast %cst_29 : f32 to vector<8x8xf32>
    %80 = arith.cmpf ogt, %78, %79 : vector<8x8xf32>
    %cst_30 = arith.constant 2.000000e-01 : f32
    %81 = vector.broadcast %cst_30 : f32 to vector<8x8xf32>
    %82 = arith.mulf %81, %78 : vector<8x8xf32>
    %83 = arith.select %80, %78, %82 : vector<8x8xi1>, vector<8x8xf32>
    %84 = arith.addf %83, %10 : vector<8x8xf32>
    %cst_31 = arith.constant dense<0xFF800000> : vector<8xf32>
    %85 = vector.multi_reduction <maximumf>, %84, %cst_31 [1] : vector<8x8xf32> to vector<8xf32>
    %86 = vector.shape_cast %85 : vector<8xf32> to vector<8x1xf32>
    %87 = vector.broadcast %86 : vector<8x1xf32> to vector<8x8xf32>
    %88 = arith.subf %84, %87 : vector<8x8xf32>
    %89 = math.exp %88 : vector<8x8xf32>
    %cst_32 = arith.constant dense<0.000000e+00> : vector<8xf32>
    %90 = vector.multi_reduction <add>, %89, %cst_32 [1] : vector<8x8xf32> to vector<8xf32>
    %91 = vector.shape_cast %90 : vector<8xf32> to vector<8x1xf32>
    %92 = tpu.reciprocal %91 {approx = true} : vector<8x1xf32> -> vector<8x1xf32>
    %93 = vector.broadcast %92 : vector<8x1xf32> to vector<8x8xf32>
    %94 = arith.mulf %89, %93 : vector<8x8xf32>
    %95 = vector.extract_strided_slice %12 {offsets = [0, 64], sizes = [8, 32], strides = [1, 1]} : vector<8x256xf32> to vector<8x32xf32>
    %cst_33 = arith.constant dense<0.000000e+00> : vector<8x32xf32>
    %96 = tpu.matmul %94, %95, %cst_33 {dimension_numbers = #tpu.dot_dimension_numbers<[1], [0], [0], [1], [0, 0, 1, 1], [], []>} : vector<8x8xf32>, vector<8x32xf32>, vector<8x32xf32> -> vector<8x32xf32>
    %cst_34 = arith.constant 0.000000e+00 : f32
    %97 = vector.broadcast %cst_34 : f32 to vector<8x32xf32>
    %98 = arith.cmpf ogt, %96, %97 : vector<8x32xf32>
    %99 = math.exp %96 : vector<8x32xf32>
    %cst_35 = arith.constant 1.000000e+00 : f32
    %100 = vector.broadcast %cst_35 : f32 to vector<8x32xf32>
    %101 = arith.subf %99, %100 : vector<8x32xf32>
    %102 = arith.select %98, %96, %101 : vector<8x32xi1>, vector<8x32xf32>
    %103 = vector.extract_strided_slice %14 {offsets = [0, 3], sizes = [8, 1], strides = [1, 1]} : vector<8x16xf32> to vector<8x1xf32>
    %104 = vector.extract_strided_slice %15 {offsets = [11, 0], sizes = [1, 8], strides = [1, 1]} : vector<16x8xf32> to vector<1x8xf32>
    %105 = vector.broadcast %103 : vector<8x1xf32> to vector<8x8xf32>
    %106 = vector.broadcast %104 : vector<1x8xf32> to vector<8x8xf32>
    %107 = arith.addf %105, %106 : vector<8x8xf32>
    %cst_36 = arith.constant 0.000000e+00 : f32
    %108 = vector.broadcast %cst_36 : f32 to vector<8x8xf32>
    %109 = arith.cmpf ogt, %107, %108 : vector<8x8xf32>
    %cst_37 = arith.constant 2.000000e-01 : f32
    %110 = vector.broadcast %cst_37 : f32 to vector<8x8xf32>
    %111 = arith.mulf %110, %107 : vector<8x8xf32>
    %112 = arith.select %109, %107, %111 : vector<8x8xi1>, vector<8x8xf32>
    %113 = arith.addf %112, %10 : vector<8x8xf32>
    %cst_38 = arith.constant dense<0xFF800000> : vector<8xf32>
    %114 = vector.multi_reduction <maximumf>, %113, %cst_38 [1] : vector<8x8xf32> to vector<8xf32>
    %115 = vector.shape_cast %114 : vector<8xf32> to vector<8x1xf32>
    %116 = vector.broadcast %115 : vector<8x1xf32> to vector<8x8xf32>
    %117 = arith.subf %113, %116 : vector<8x8xf32>
    %118 = math.exp %117 : vector<8x8xf32>
    %cst_39 = arith.constant dense<0.000000e+00> : vector<8xf32>
    %119 = vector.multi_reduction <add>, %118, %cst_39 [1] : vector<8x8xf32> to vector<8xf32>
    %120 = vector.shape_cast %119 : vector<8xf32> to vector<8x1xf32>
    %121 = tpu.reciprocal %120 {approx = true} : vector<8x1xf32> -> vector<8x1xf32>
    %122 = vector.broadcast %121 : vector<8x1xf32> to vector<8x8xf32>
    %123 = arith.mulf %118, %122 : vector<8x8xf32>
    %124 = vector.extract_strided_slice %12 {offsets = [0, 96], sizes = [8, 32], strides = [1, 1]} : vector<8x256xf32> to vector<8x32xf32>
    %cst_40 = arith.constant dense<0.000000e+00> : vector<8x32xf32>
    %125 = tpu.matmul %123, %124, %cst_40 {dimension_numbers = #tpu.dot_dimension_numbers<[1], [0], [0], [1], [0, 0, 1, 1], [], []>} : vector<8x8xf32>, vector<8x32xf32>, vector<8x32xf32> -> vector<8x32xf32>
    %cst_41 = arith.constant 0.000000e+00 : f32
    %126 = vector.broadcast %cst_41 : f32 to vector<8x32xf32>
    %127 = arith.cmpf ogt, %125, %126 : vector<8x32xf32>
    %128 = math.exp %125 : vector<8x32xf32>
    %cst_42 = arith.constant 1.000000e+00 : f32
    %129 = vector.broadcast %cst_42 : f32 to vector<8x32xf32>
    %130 = arith.subf %128, %129 : vector<8x32xf32>
    %131 = arith.select %127, %125, %130 : vector<8x32xi1>, vector<8x32xf32>
    %132 = vector.extract_strided_slice %14 {offsets = [0, 4], sizes = [8, 1], strides = [1, 1]} : vector<8x16xf32> to vector<8x1xf32>
    %133 = vector.extract_strided_slice %15 {offsets = [12, 0], sizes = [1, 8], strides = [1, 1]} : vector<16x8xf32> to vector<1x8xf32>
    %134 = vector.broadcast %132 : vector<8x1xf32> to vector<8x8xf32>
    %135 = vector.broadcast %133 : vector<1x8xf32> to vector<8x8xf32>
    %136 = arith.addf %134, %135 : vector<8x8xf32>
    %cst_43 = arith.constant 0.000000e+00 : f32
    %137 = vector.broadcast %cst_43 : f32 to vector<8x8xf32>
    %138 = arith.cmpf ogt, %136, %137 : vector<8x8xf32>
    %cst_44 = arith.constant 2.000000e-01 : f32
    %139 = vector.broadcast %cst_44 : f32 to vector<8x8xf32>
    %140 = arith.mulf %139, %136 : vector<8x8xf32>
    %141 = arith.select %138, %136, %140 : vector<8x8xi1>, vector<8x8xf32>
    %142 = arith.addf %141, %10 : vector<8x8xf32>
    %cst_45 = arith.constant dense<0xFF800000> : vector<8xf32>
    %143 = vector.multi_reduction <maximumf>, %142, %cst_45 [1] : vector<8x8xf32> to vector<8xf32>
    %144 = vector.shape_cast %143 : vector<8xf32> to vector<8x1xf32>
    %145 = vector.broadcast %144 : vector<8x1xf32> to vector<8x8xf32>
    %146 = arith.subf %142, %145 : vector<8x8xf32>
    %147 = math.exp %146 : vector<8x8xf32>
    %cst_46 = arith.constant dense<0.000000e+00> : vector<8xf32>
    %148 = vector.multi_reduction <add>, %147, %cst_46 [1] : vector<8x8xf32> to vector<8xf32>
    %149 = vector.shape_cast %148 : vector<8xf32> to vector<8x1xf32>
    %150 = tpu.reciprocal %149 {approx = true} : vector<8x1xf32> -> vector<8x1xf32>
    %151 = vector.broadcast %150 : vector<8x1xf32> to vector<8x8xf32>
    %152 = arith.mulf %147, %151 : vector<8x8xf32>
    %153 = vector.extract_strided_slice %12 {offsets = [0, 128], sizes = [8, 32], strides = [1, 1]} : vector<8x256xf32> to vector<8x32xf32>
    %cst_47 = arith.constant dense<0.000000e+00> : vector<8x32xf32>
    %154 = tpu.matmul %152, %153, %cst_47 {dimension_numbers = #tpu.dot_dimension_numbers<[1], [0], [0], [1], [0, 0, 1, 1], [], []>} : vector<8x8xf32>, vector<8x32xf32>, vector<8x32xf32> -> vector<8x32xf32>
    %cst_48 = arith.constant 0.000000e+00 : f32
    %155 = vector.broadcast %cst_48 : f32 to vector<8x32xf32>
    %156 = arith.cmpf ogt, %154, %155 : vector<8x32xf32>
    %157 = math.exp %154 : vector<8x32xf32>
    %cst_49 = arith.constant 1.000000e+00 : f32
    %158 = vector.broadcast %cst_49 : f32 to vector<8x32xf32>
    %159 = arith.subf %157, %158 : vector<8x32xf32>
    %160 = arith.select %156, %154, %159 : vector<8x32xi1>, vector<8x32xf32>
    %161 = vector.extract_strided_slice %14 {offsets = [0, 5], sizes = [8, 1], strides = [1, 1]} : vector<8x16xf32> to vector<8x1xf32>
    %162 = vector.extract_strided_slice %15 {offsets = [13, 0], sizes = [1, 8], strides = [1, 1]} : vector<16x8xf32> to vector<1x8xf32>
    %163 = vector.broadcast %161 : vector<8x1xf32> to vector<8x8xf32>
    %164 = vector.broadcast %162 : vector<1x8xf32> to vector<8x8xf32>
    %165 = arith.addf %163, %164 : vector<8x8xf32>
    %cst_50 = arith.constant 0.000000e+00 : f32
    %166 = vector.broadcast %cst_50 : f32 to vector<8x8xf32>
    %167 = arith.cmpf ogt, %165, %166 : vector<8x8xf32>
    %cst_51 = arith.constant 2.000000e-01 : f32
    %168 = vector.broadcast %cst_51 : f32 to vector<8x8xf32>
    %169 = arith.mulf %168, %165 : vector<8x8xf32>
    %170 = arith.select %167, %165, %169 : vector<8x8xi1>, vector<8x8xf32>
    %171 = arith.addf %170, %10 : vector<8x8xf32>
    %cst_52 = arith.constant dense<0xFF800000> : vector<8xf32>
    %172 = vector.multi_reduction <maximumf>, %171, %cst_52 [1] : vector<8x8xf32> to vector<8xf32>
    %173 = vector.shape_cast %172 : vector<8xf32> to vector<8x1xf32>
    %174 = vector.broadcast %173 : vector<8x1xf32> to vector<8x8xf32>
    %175 = arith.subf %171, %174 : vector<8x8xf32>
    %176 = math.exp %175 : vector<8x8xf32>
    %cst_53 = arith.constant dense<0.000000e+00> : vector<8xf32>
    %177 = vector.multi_reduction <add>, %176, %cst_53 [1] : vector<8x8xf32> to vector<8xf32>
    %178 = vector.shape_cast %177 : vector<8xf32> to vector<8x1xf32>
    %179 = tpu.reciprocal %178 {approx = true} : vector<8x1xf32> -> vector<8x1xf32>
    %180 = vector.broadcast %179 : vector<8x1xf32> to vector<8x8xf32>
    %181 = arith.mulf %176, %180 : vector<8x8xf32>
    %182 = vector.extract_strided_slice %12 {offsets = [0, 160], sizes = [8, 32], strides = [1, 1]} : vector<8x256xf32> to vector<8x32xf32>
    %cst_54 = arith.constant dense<0.000000e+00> : vector<8x32xf32>
    %183 = tpu.matmul %181, %182, %cst_54 {dimension_numbers = #tpu.dot_dimension_numbers<[1], [0], [0], [1], [0, 0, 1, 1], [], []>} : vector<8x8xf32>, vector<8x32xf32>, vector<8x32xf32> -> vector<8x32xf32>
    %cst_55 = arith.constant 0.000000e+00 : f32
    %184 = vector.broadcast %cst_55 : f32 to vector<8x32xf32>
    %185 = arith.cmpf ogt, %183, %184 : vector<8x32xf32>
    %186 = math.exp %183 : vector<8x32xf32>
    %cst_56 = arith.constant 1.000000e+00 : f32
    %187 = vector.broadcast %cst_56 : f32 to vector<8x32xf32>
    %188 = arith.subf %186, %187 : vector<8x32xf32>
    %189 = arith.select %185, %183, %188 : vector<8x32xi1>, vector<8x32xf32>
    %190 = vector.extract_strided_slice %14 {offsets = [0, 6], sizes = [8, 1], strides = [1, 1]} : vector<8x16xf32> to vector<8x1xf32>
    %191 = vector.extract_strided_slice %15 {offsets = [14, 0], sizes = [1, 8], strides = [1, 1]} : vector<16x8xf32> to vector<1x8xf32>
    %192 = vector.broadcast %190 : vector<8x1xf32> to vector<8x8xf32>
    %193 = vector.broadcast %191 : vector<1x8xf32> to vector<8x8xf32>
    %194 = arith.addf %192, %193 : vector<8x8xf32>
    %cst_57 = arith.constant 0.000000e+00 : f32
    %195 = vector.broadcast %cst_57 : f32 to vector<8x8xf32>
    %196 = arith.cmpf ogt, %194, %195 : vector<8x8xf32>
    %cst_58 = arith.constant 2.000000e-01 : f32
    %197 = vector.broadcast %cst_58 : f32 to vector<8x8xf32>
    %198 = arith.mulf %197, %194 : vector<8x8xf32>
    %199 = arith.select %196, %194, %198 : vector<8x8xi1>, vector<8x8xf32>
    %200 = arith.addf %199, %10 : vector<8x8xf32>
    %cst_59 = arith.constant dense<0xFF800000> : vector<8xf32>
    %201 = vector.multi_reduction <maximumf>, %200, %cst_59 [1] : vector<8x8xf32> to vector<8xf32>
    %202 = vector.shape_cast %201 : vector<8xf32> to vector<8x1xf32>
    %203 = vector.broadcast %202 : vector<8x1xf32> to vector<8x8xf32>
    %204 = arith.subf %200, %203 : vector<8x8xf32>
    %205 = math.exp %204 : vector<8x8xf32>
    %cst_60 = arith.constant dense<0.000000e+00> : vector<8xf32>
    %206 = vector.multi_reduction <add>, %205, %cst_60 [1] : vector<8x8xf32> to vector<8xf32>
    %207 = vector.shape_cast %206 : vector<8xf32> to vector<8x1xf32>
    %208 = tpu.reciprocal %207 {approx = true} : vector<8x1xf32> -> vector<8x1xf32>
    %209 = vector.broadcast %208 : vector<8x1xf32> to vector<8x8xf32>
    %210 = arith.mulf %205, %209 : vector<8x8xf32>
    %211 = vector.extract_strided_slice %12 {offsets = [0, 192], sizes = [8, 32], strides = [1, 1]} : vector<8x256xf32> to vector<8x32xf32>
    %cst_61 = arith.constant dense<0.000000e+00> : vector<8x32xf32>
    %212 = tpu.matmul %210, %211, %cst_61 {dimension_numbers = #tpu.dot_dimension_numbers<[1], [0], [0], [1], [0, 0, 1, 1], [], []>} : vector<8x8xf32>, vector<8x32xf32>, vector<8x32xf32> -> vector<8x32xf32>
    %cst_62 = arith.constant 0.000000e+00 : f32
    %213 = vector.broadcast %cst_62 : f32 to vector<8x32xf32>
    %214 = arith.cmpf ogt, %212, %213 : vector<8x32xf32>
    %215 = math.exp %212 : vector<8x32xf32>
    %cst_63 = arith.constant 1.000000e+00 : f32
    %216 = vector.broadcast %cst_63 : f32 to vector<8x32xf32>
    %217 = arith.subf %215, %216 : vector<8x32xf32>
    %218 = arith.select %214, %212, %217 : vector<8x32xi1>, vector<8x32xf32>
    %219 = vector.extract_strided_slice %14 {offsets = [0, 7], sizes = [8, 1], strides = [1, 1]} : vector<8x16xf32> to vector<8x1xf32>
    %220 = vector.extract_strided_slice %15 {offsets = [15, 0], sizes = [1, 8], strides = [1, 1]} : vector<16x8xf32> to vector<1x8xf32>
    %221 = vector.broadcast %219 : vector<8x1xf32> to vector<8x8xf32>
    %222 = vector.broadcast %220 : vector<1x8xf32> to vector<8x8xf32>
    %223 = arith.addf %221, %222 : vector<8x8xf32>
    %cst_64 = arith.constant 0.000000e+00 : f32
    %224 = vector.broadcast %cst_64 : f32 to vector<8x8xf32>
    %225 = arith.cmpf ogt, %223, %224 : vector<8x8xf32>
    %cst_65 = arith.constant 2.000000e-01 : f32
    %226 = vector.broadcast %cst_65 : f32 to vector<8x8xf32>
    %227 = arith.mulf %226, %223 : vector<8x8xf32>
    %228 = arith.select %225, %223, %227 : vector<8x8xi1>, vector<8x8xf32>
    %229 = arith.addf %228, %10 : vector<8x8xf32>
    %cst_66 = arith.constant dense<0xFF800000> : vector<8xf32>
    %230 = vector.multi_reduction <maximumf>, %229, %cst_66 [1] : vector<8x8xf32> to vector<8xf32>
    %231 = vector.shape_cast %230 : vector<8xf32> to vector<8x1xf32>
    %232 = vector.broadcast %231 : vector<8x1xf32> to vector<8x8xf32>
    %233 = arith.subf %229, %232 : vector<8x8xf32>
    %234 = math.exp %233 : vector<8x8xf32>
    %cst_67 = arith.constant dense<0.000000e+00> : vector<8xf32>
    %235 = vector.multi_reduction <add>, %234, %cst_67 [1] : vector<8x8xf32> to vector<8xf32>
    %236 = vector.shape_cast %235 : vector<8xf32> to vector<8x1xf32>
    %237 = tpu.reciprocal %236 {approx = true} : vector<8x1xf32> -> vector<8x1xf32>
    %238 = vector.broadcast %237 : vector<8x1xf32> to vector<8x8xf32>
    %239 = arith.mulf %234, %238 : vector<8x8xf32>
    %240 = vector.extract_strided_slice %12 {offsets = [0, 224], sizes = [8, 32], strides = [1, 1]} : vector<8x256xf32> to vector<8x32xf32>
    %cst_68 = arith.constant dense<0.000000e+00> : vector<8x32xf32>
    %241 = tpu.matmul %239, %240, %cst_68 {dimension_numbers = #tpu.dot_dimension_numbers<[1], [0], [0], [1], [0, 0, 1, 1], [], []>} : vector<8x8xf32>, vector<8x32xf32>, vector<8x32xf32> -> vector<8x32xf32>
    %cst_69 = arith.constant 0.000000e+00 : f32
    %242 = vector.broadcast %cst_69 : f32 to vector<8x32xf32>
    %243 = arith.cmpf ogt, %241, %242 : vector<8x32xf32>
    %244 = math.exp %241 : vector<8x32xf32>
    %cst_70 = arith.constant 1.000000e+00 : f32
    %245 = vector.broadcast %cst_70 : f32 to vector<8x32xf32>
    %246 = arith.subf %244, %245 : vector<8x32xf32>
    %247 = arith.select %243, %241, %246 : vector<8x32xi1>, vector<8x32xf32>
    %248 = tpu.concatenate %44, %73, %102, %131, %160, %189, %218, %247 in 1 : vector<8x32xf32>, vector<8x32xf32>, vector<8x32xf32>, vector<8x32xf32>, vector<8x32xf32>, vector<8x32xf32>, vector<8x32xf32>, vector<8x32xf32> -> vector<8x256xf32>
    %c272 = arith.constant 272 : index
    %c0_71 = arith.constant 0 : index
    %249 = vector.load %arg4[%c272, %c0_71] : memref<768x256xf32, #tpu.memory_space<vmem>>, vector<256x32xf32>
    %cst_72 = arith.constant dense<0.000000e+00> : vector<8x32xf32>
    %250 = tpu.matmul %248, %249, %cst_72 {dimension_numbers = #tpu.dot_dimension_numbers<[1], [0], [0], [1], [0, 0, 1, 1], [], []>} : vector<8x256xf32>, vector<256x32xf32>, vector<8x32xf32> -> vector<8x32xf32>
    %c528 = arith.constant 528 : index
    %c0_73 = arith.constant 0 : index
    %251 = vector.load %arg4[%c528, %c0_73] : memref<768x256xf32, #tpu.memory_space<vmem>>, vector<32x4xf32>
    %cst_74 = arith.constant dense<0.000000e+00> : vector<8x4xf32>
    %252 = tpu.matmul %250, %251, %cst_74 {dimension_numbers = #tpu.dot_dimension_numbers<[1], [0], [0], [1], [0, 0, 1, 1], [], []>} : vector<8x32xf32>, vector<32x4xf32>, vector<8x4xf32> -> vector<8x4xf32>
    %253 = tpu.transpose %252, [1, 0] : vector<8x4xf32> -> vector<4x8xf32>
    %254 = vector.extract_strided_slice %252 {offsets = [0, 0], sizes = [8, 1], strides = [1, 1]} : vector<8x4xf32> to vector<8x1xf32>
    %255 = vector.extract_strided_slice %253 {offsets = [2, 0], sizes = [1, 8], strides = [1, 1]} : vector<4x8xf32> to vector<1x8xf32>
    %256 = vector.broadcast %254 : vector<8x1xf32> to vector<8x8xf32>
    %257 = vector.broadcast %255 : vector<1x8xf32> to vector<8x8xf32>
    %258 = arith.addf %256, %257 : vector<8x8xf32>
    %cst_75 = arith.constant 0.000000e+00 : f32
    %259 = vector.broadcast %cst_75 : f32 to vector<8x8xf32>
    %260 = arith.cmpf ogt, %258, %259 : vector<8x8xf32>
    %cst_76 = arith.constant 2.000000e-01 : f32
    %261 = vector.broadcast %cst_76 : f32 to vector<8x8xf32>
    %262 = arith.mulf %261, %258 : vector<8x8xf32>
    %263 = arith.select %260, %258, %262 : vector<8x8xi1>, vector<8x8xf32>
    %264 = arith.addf %263, %10 : vector<8x8xf32>
    %cst_77 = arith.constant dense<0xFF800000> : vector<8xf32>
    %265 = vector.multi_reduction <maximumf>, %264, %cst_77 [1] : vector<8x8xf32> to vector<8xf32>
    %266 = vector.shape_cast %265 : vector<8xf32> to vector<8x1xf32>
    %267 = vector.broadcast %266 : vector<8x1xf32> to vector<8x8xf32>
    %268 = arith.subf %264, %267 : vector<8x8xf32>
    %269 = math.exp %268 : vector<8x8xf32>
    %cst_78 = arith.constant dense<0.000000e+00> : vector<8xf32>
    %270 = vector.multi_reduction <add>, %269, %cst_78 [1] : vector<8x8xf32> to vector<8xf32>
    %271 = vector.shape_cast %270 : vector<8xf32> to vector<8x1xf32>
    %272 = tpu.reciprocal %271 {approx = true} : vector<8x1xf32> -> vector<8x1xf32>
    %273 = vector.broadcast %272 : vector<8x1xf32> to vector<8x8xf32>
    %274 = arith.mulf %269, %273 : vector<8x8xf32>
    %275 = vector.extract_strided_slice %250 {offsets = [0, 0], sizes = [8, 16], strides = [1, 1]} : vector<8x32xf32> to vector<8x16xf32>
    %cst_79 = arith.constant dense<0.000000e+00> : vector<8x16xf32>
    %276 = tpu.matmul %274, %275, %cst_79 {dimension_numbers = #tpu.dot_dimension_numbers<[1], [0], [0], [1], [0, 0, 1, 1], [], []>} : vector<8x8xf32>, vector<8x16xf32>, vector<8x16xf32> -> vector<8x16xf32>
    %cst_80 = arith.constant 0.000000e+00 : f32
    %277 = vector.broadcast %cst_80 : f32 to vector<8x16xf32>
    %278 = arith.cmpf ogt, %276, %277 : vector<8x16xf32>
    %279 = math.exp %276 : vector<8x16xf32>
    %cst_81 = arith.constant 1.000000e+00 : f32
    %280 = vector.broadcast %cst_81 : f32 to vector<8x16xf32>
    %281 = arith.subf %279, %280 : vector<8x16xf32>
    %282 = arith.select %278, %276, %281 : vector<8x16xi1>, vector<8x16xf32>
    %283 = vector.extract_strided_slice %252 {offsets = [0, 1], sizes = [8, 1], strides = [1, 1]} : vector<8x4xf32> to vector<8x1xf32>
    %284 = vector.extract_strided_slice %253 {offsets = [3, 0], sizes = [1, 8], strides = [1, 1]} : vector<4x8xf32> to vector<1x8xf32>
    %285 = vector.broadcast %283 : vector<8x1xf32> to vector<8x8xf32>
    %286 = vector.broadcast %284 : vector<1x8xf32> to vector<8x8xf32>
    %287 = arith.addf %285, %286 : vector<8x8xf32>
    %cst_82 = arith.constant 0.000000e+00 : f32
    %288 = vector.broadcast %cst_82 : f32 to vector<8x8xf32>
    %289 = arith.cmpf ogt, %287, %288 : vector<8x8xf32>
    %cst_83 = arith.constant 2.000000e-01 : f32
    %290 = vector.broadcast %cst_83 : f32 to vector<8x8xf32>
    %291 = arith.mulf %290, %287 : vector<8x8xf32>
    %292 = arith.select %289, %287, %291 : vector<8x8xi1>, vector<8x8xf32>
    %293 = arith.addf %292, %10 : vector<8x8xf32>
    %cst_84 = arith.constant dense<0xFF800000> : vector<8xf32>
    %294 = vector.multi_reduction <maximumf>, %293, %cst_84 [1] : vector<8x8xf32> to vector<8xf32>
    %295 = vector.shape_cast %294 : vector<8xf32> to vector<8x1xf32>
    %296 = vector.broadcast %295 : vector<8x1xf32> to vector<8x8xf32>
    %297 = arith.subf %293, %296 : vector<8x8xf32>
    %298 = math.exp %297 : vector<8x8xf32>
    %cst_85 = arith.constant dense<0.000000e+00> : vector<8xf32>
    %299 = vector.multi_reduction <add>, %298, %cst_85 [1] : vector<8x8xf32> to vector<8xf32>
    %300 = vector.shape_cast %299 : vector<8xf32> to vector<8x1xf32>
    %301 = tpu.reciprocal %300 {approx = true} : vector<8x1xf32> -> vector<8x1xf32>
    %302 = vector.broadcast %301 : vector<8x1xf32> to vector<8x8xf32>
    %303 = arith.mulf %298, %302 : vector<8x8xf32>
    %304 = vector.extract_strided_slice %250 {offsets = [0, 16], sizes = [8, 16], strides = [1, 1]} : vector<8x32xf32> to vector<8x16xf32>
    %cst_86 = arith.constant dense<0.000000e+00> : vector<8x16xf32>
    %305 = tpu.matmul %303, %304, %cst_86 {dimension_numbers = #tpu.dot_dimension_numbers<[1], [0], [0], [1], [0, 0, 1, 1], [], []>} : vector<8x8xf32>, vector<8x16xf32>, vector<8x16xf32> -> vector<8x16xf32>
    %cst_87 = arith.constant 0.000000e+00 : f32
    %306 = vector.broadcast %cst_87 : f32 to vector<8x16xf32>
    %307 = arith.cmpf ogt, %305, %306 : vector<8x16xf32>
    %308 = math.exp %305 : vector<8x16xf32>
    %cst_88 = arith.constant 1.000000e+00 : f32
    %309 = vector.broadcast %cst_88 : f32 to vector<8x16xf32>
    %310 = arith.subf %308, %309 : vector<8x16xf32>
    %311 = arith.select %307, %305, %310 : vector<8x16xi1>, vector<8x16xf32>
    %c560 = arith.constant 560 : index
    %c0_89 = arith.constant 0 : index
    %312 = vector.load %arg4[%c560, %c0_89] : memref<768x256xf32, #tpu.memory_space<vmem>>, vector<8x64xf32>
    %cst_90 = arith.constant dense<0.000000e+00> : vector<1x64xf32>
    %313 = tpu.matmul %3, %312, %cst_90 {dimension_numbers = #tpu.dot_dimension_numbers<[1], [0], [0], [1], [0, 0, 1, 1], [], []>} : vector<1x8xf32>, vector<8x64xf32>, vector<1x64xf32> -> vector<1x64xf32>
    %c568 = arith.constant 568 : index
    %c0_91 = arith.constant 0 : index
    %314 = vector.load %arg4[%c568, %c0_91] : memref<768x256xf32, #tpu.memory_space<vmem>>, vector<1x64xf32>
    %315 = arith.addf %313, %314 : vector<1x64xf32>
    %cst_92 = arith.constant 0.000000e+00 : f32
    %316 = vector.broadcast %cst_92 : f32 to vector<1x64xf32>
    %317 = arith.maximumf %315, %316 : vector<1x64xf32>
    %318 = vector.extract_strided_slice %317 {offsets = [0, 0], sizes = [1, 32], strides = [1, 1]} : vector<1x64xf32> to vector<1x32xf32>
    %319 = vector.extract_strided_slice %317 {offsets = [0, 32], sizes = [1, 32], strides = [1, 1]} : vector<1x64xf32> to vector<1x32xf32>
    %c592 = arith.constant 592 : index
    %c0_93 = arith.constant 0 : index
    %320 = vector.load %arg4[%c592, %c0_93] : memref<768x256xf32, #tpu.memory_space<vmem>>, vector<32x32xf32>
    %cst_94 = arith.constant dense<0.000000e+00> : vector<1x32xf32>
    %321 = tpu.matmul %318, %320, %cst_94 {dimension_numbers = #tpu.dot_dimension_numbers<[1], [0], [0], [1], [0, 0, 1, 1], [], []>} : vector<1x32xf32>, vector<32x32xf32>, vector<1x32xf32> -> vector<1x32xf32>
    %c624 = arith.constant 624 : index
    %c0_95 = arith.constant 0 : index
    %322 = vector.load %arg4[%c624, %c0_95] : memref<768x256xf32, #tpu.memory_space<vmem>>, vector<1x32xf32>
    %323 = arith.addf %321, %322 : vector<1x32xf32>
    %c576 = arith.constant 576 : index
    %c0_96 = arith.constant 0 : index
    %324 = vector.load %arg4[%c576, %c0_96] : memref<768x256xf32, #tpu.memory_space<vmem>>, vector<16x32xf32>
    %cst_97 = arith.constant dense<0.000000e+00> : vector<8x32xf32>
    %325 = tpu.matmul %282, %324, %cst_97 {dimension_numbers = #tpu.dot_dimension_numbers<[1], [0], [0], [1], [0, 0, 1, 1], [], []>} : vector<8x16xf32>, vector<16x32xf32>, vector<8x32xf32> -> vector<8x32xf32>
    %326 = vector.broadcast %323 : vector<1x32xf32> to vector<8x32xf32>
    %327 = arith.addf %325, %326 : vector<8x32xf32>
    %cst_98 = arith.constant 0.000000e+00 : f32
    %328 = vector.broadcast %cst_98 : f32 to vector<8x32xf32>
    %329 = arith.maximumf %327, %328 : vector<8x32xf32>
    %c632 = arith.constant 632 : index
    %c0_99 = arith.constant 0 : index
    %330 = vector.load %arg4[%c632, %c0_99] : memref<768x256xf32, #tpu.memory_space<vmem>>, vector<32x128xf32>
    %cst_100 = arith.constant dense<0.000000e+00> : vector<8x128xf32>
    %331 = tpu.matmul %329, %330, %cst_100 {dimension_numbers = #tpu.dot_dimension_numbers<[1], [0], [0], [1], [0, 0, 1, 1], [], []>} : vector<8x32xf32>, vector<32x128xf32>, vector<8x128xf32> -> vector<8x128xf32>
    %c664 = arith.constant 664 : index
    %c0_101 = arith.constant 0 : index
    %332 = vector.load %arg4[%c664, %c0_101] : memref<768x256xf32, #tpu.memory_space<vmem>>, vector<1x128xf32>
    %333 = vector.broadcast %332 : vector<1x128xf32> to vector<8x128xf32>
    %334 = arith.addf %331, %333 : vector<8x128xf32>
    %cst_102 = arith.constant dense<0xFF800000> : vector<8xf32>
    %335 = vector.multi_reduction <maximumf>, %334, %cst_102 [1] : vector<8x128xf32> to vector<8xf32>
    %336 = vector.shape_cast %335 : vector<8xf32> to vector<8x1xf32>
    %337 = vector.broadcast %336 : vector<8x1xf32> to vector<8x128xf32>
    %338 = arith.subf %334, %337 : vector<8x128xf32>
    %339 = math.exp %338 : vector<8x128xf32>
    %cst_103 = arith.constant dense<0.000000e+00> : vector<8xf32>
    %340 = vector.multi_reduction <add>, %339, %cst_103 [1] : vector<8x128xf32> to vector<8xf32>
    %341 = vector.shape_cast %340 : vector<8xf32> to vector<8x1xf32>
    %342 = tpu.reciprocal %341 {approx = true} : vector<8x1xf32> -> vector<8x1xf32>
    %343 = vector.broadcast %342 : vector<8x1xf32> to vector<8x128xf32>
    %344 = arith.mulf %339, %343 : vector<8x128xf32>
    %cst_104 = arith.constant dense<0.000000e+00> : vector<16xf32>
    %345 = vector.multi_reduction <add>, %311, %cst_104 [0] : vector<8x16xf32> to vector<16xf32>
    %346 = vector.shape_cast %345 : vector<16xf32> to vector<1x16xf32>
    %cst_105 = arith.constant 8.000000e+00 : f32
    %347 = vector.broadcast %cst_105 : f32 to vector<1x16xf32>
    %348 = arith.divf %346, %347 : vector<1x16xf32>
    %c672 = arith.constant 672 : index
    %c0_106 = arith.constant 0 : index
    %349 = vector.load %arg4[%c672, %c0_106] : memref<768x256xf32, #tpu.memory_space<vmem>>, vector<16x32xf32>
    %cst_107 = arith.constant dense<0.000000e+00> : vector<1x32xf32>
    %350 = tpu.matmul %348, %349, %cst_107 {dimension_numbers = #tpu.dot_dimension_numbers<[1], [0], [0], [1], [0, 0, 1, 1], [], []>} : vector<1x16xf32>, vector<16x32xf32>, vector<1x32xf32> -> vector<1x32xf32>
    %c688 = arith.constant 688 : index
    %c0_108 = arith.constant 0 : index
    %351 = vector.load %arg4[%c688, %c0_108] : memref<768x256xf32, #tpu.memory_space<vmem>>, vector<32x32xf32>
    %cst_109 = arith.constant dense<0.000000e+00> : vector<1x32xf32>
    %352 = tpu.matmul %319, %351, %cst_109 {dimension_numbers = #tpu.dot_dimension_numbers<[1], [0], [0], [1], [0, 0, 1, 1], [], []>} : vector<1x32xf32>, vector<32x32xf32>, vector<1x32xf32> -> vector<1x32xf32>
    %353 = arith.addf %350, %352 : vector<1x32xf32>
    %c720 = arith.constant 720 : index
    %c0_110 = arith.constant 0 : index
    %354 = vector.load %arg4[%c720, %c0_110] : memref<768x256xf32, #tpu.memory_space<vmem>>, vector<1x32xf32>
    %355 = arith.addf %353, %354 : vector<1x32xf32>
    %cst_111 = arith.constant 0.000000e+00 : f32
    %356 = vector.broadcast %cst_111 : f32 to vector<1x32xf32>
    %357 = arith.maximumf %355, %356 : vector<1x32xf32>
    %c728 = arith.constant 728 : index
    %c0_112 = arith.constant 0 : index
    %358 = vector.load %arg4[%c728, %c0_112] : memref<768x256xf32, #tpu.memory_space<vmem>>, vector<32x128xf32>
    %cst_113 = arith.constant dense<0.000000e+00> : vector<1x128xf32>
    %359 = tpu.matmul %357, %358, %cst_113 {dimension_numbers = #tpu.dot_dimension_numbers<[1], [0], [0], [1], [0, 0, 1, 1], [], []>} : vector<1x32xf32>, vector<32x128xf32>, vector<1x128xf32> -> vector<1x128xf32>
    %c760 = arith.constant 760 : index
    %c0_114 = arith.constant 0 : index
    %360 = vector.load %arg4[%c760, %c0_114] : memref<768x256xf32, #tpu.memory_space<vmem>>, vector<1x128xf32>
    %361 = arith.addf %359, %360 : vector<1x128xf32>
    %c0_115 = arith.constant 0 : index
    %c0_116 = arith.constant 0 : index
    %c0_117 = arith.constant 0 : index
    %362 = vector.load %arg5[%c0_115, %c0_116, %c0_117] : memref<1x16x128xf32, #tpu.memory_space<vmem>>, vector<1x8x128xf32>
    %363 = vector.shape_cast %362 : vector<1x8x128xf32> to vector<8x128xf32>
    %364 = vector.shape_cast %344 : vector<8x128xf32> to vector<1x8x128xf32>
    tpu.vector_store %arg5[%c0_115, %c0_116, %c0_117], %364 {strides = array<i32>} : memref<1x16x128xf32, #tpu.memory_space<vmem>>, vector<1x8x128xf32>,
    %365 = vector.shape_cast %361 : vector<1x128xf32> to vector<1x128xf32>
    %366 = vector.broadcast %365 : vector<1x128xf32> to vector<8x128xf32>
    %c0_118 = arith.constant 0 : index
    %c8 = arith.constant 8 : index
    %c0_119 = arith.constant 0 : index
    %367 = vector.load %arg5[%c0_118, %c8, %c0_119] : memref<1x16x128xf32, #tpu.memory_space<vmem>>, vector<1x8x128xf32>
    %368 = vector.shape_cast %367 : vector<1x8x128xf32> to vector<8x128xf32>
    %369 = vector.shape_cast %366 : vector<8x128xf32> to vector<1x8x128xf32>
    tpu.vector_store %arg5[%c0_118, %c8, %c0_119], %369 {strides = array<i32>} : memref<1x16x128xf32, #tpu.memory_space<vmem>>, vector<1x8x128xf32>,
    return
  }
  func.func @transform_0(%arg0: i32) -> (i32, i32, i32) {
    %c0_i32 = arith.constant 0 : i32
    %c0_i32_0 = arith.constant 0 : i32
    %c0_i32_1 = arith.constant 0 : i32
    return %arg0, %c0_i32, %c0_i32_0 : i32, i32, i32
  }
  func.func @transform_1(%arg0: i32) -> (i32, i32, i32) {
    %c0_i32 = arith.constant 0 : i32
    %c0_i32_0 = arith.constant 0 : i32
    %c0_i32_1 = arith.constant 0 : i32
    return %arg0, %c0_i32, %c0_i32_0 : i32, i32, i32
  }
  func.func @transform_2(%arg0: i32) -> (i32, i32, i32) {
    %c0_i32 = arith.constant 0 : i32
    %c0_i32_0 = arith.constant 0 : i32
    %c0_i32_1 = arith.constant 0 : i32
    return %arg0, %c0_i32, %c0_i32_0 : i32, i32, i32
  }
  func.func @transform_3(%arg0: i32) -> (i32, i32) {
    %c0_i32 = arith.constant 0 : i32
    %c0_i32_0 = arith.constant 0 : i32
    %c0_i32_1 = arith.constant 0 : i32
    return %c0_i32, %c0_i32_0 : i32, i32
  }
  func.func @transform_4(%arg0: i32) -> (i32, i32, i32) {
    %c0_i32 = arith.constant 0 : i32
    %c0_i32_0 = arith.constant 0 : i32
    %c0_i32_1 = arith.constant 0 : i32
    return %arg0, %c0_i32, %c0_i32_0 : i32, i32, i32
  }
}

</mosaic_0001>

<llo_original>
// kernel: tpu_custom_call.1
$region0: #{tpu_custom_call.1}
  #allocation0 [shape = 'u32[]', space=smem, size = 0x4, offset = 0x4, fixed_abs, tag = 'smem constant byte address 0x4 - core index']
  #allocation1 [shape = 'u32[144,128]{1,0:T(1,128)}', space=vmem, size = 0x12000, scoped, tag = 'internal scratch']
  %s0 = inlined_call_operand.hbm [shape: f32[4,8,16], index: 0, kind: input, shape index: {}]
  %s1 = inlined_call_operand.hbm [shape: f32[4,1,8], index: 1, kind: input, shape index: {}]
  %s2 = inlined_call_operand.hbm [shape: f32[4,8,8], index: 2, kind: input, shape index: {}]
  %s3 = inlined_call_operand.hbm [shape: f32[768,256], index: 3, kind: input, shape index: {}]
  %s4 = inlined_call_operand.hbm [shape: f32[4,16,128], index: 4, kind: output, shape index: {}]
  %s5 = sld [smem:[#allocation0]]
  $region65: #{tpu_custom_call.1} parent=0
    _
  %s7 = ssub.s32 1, %s5
  %s8 = scalar_select 0, %s7, %s5
  $region1: #{tpu_custom_call.1} parent=0
    #allocation2 [shape = 'u8[8192]{0}', space=vmem, size = 0x2000, scoped, tag = 'input window, operand 0']
    #allocation3 [shape = 's32[2]{0}', space=sflag, size = 0x8, scoped, tag = 'scoped memory for tpu_custom_call.1']
    #allocation4 [shape = 's32[2]{0}', space=sflag, size = 0x8, scoped, tag = 'scoped memory for tpu_custom_call.1']
    #allocation5 [shape = 'u8[1024]{0}', space=vmem, size = 0x400, scoped, tag = 'input window, operand 1']
    #allocation6 [shape = 's32[2]{0}', space=sflag, size = 0x8, scoped, tag = 'scoped memory for tpu_custom_call.1']
    #allocation7 [shape = 'u8[8192]{0}', space=vmem, size = 0x2000, scoped, tag = 'input window, operand 2']
    #allocation8 [shape = 'u8[786432]{0}', space=vmem, size = 0xc0000, scoped, tag = 'input window, operand 3, single buffered']
    #allocation9 [shape = 's32[1]{0}', space=sflag, size = 0x4, scoped, tag = 'scoped memory for tpu_custom_call.1']
    #allocation10 [shape = 'u8[16384]{0}', space=vmem, size = 0x4000, scoped, tag = 'output window, operand 0']
    %9 = vsyncpa [#allocation3], 0
    %s10 = scalar_lea.sflag [#allocation3], 1
    %11 = vsyncpa %s10, 0
    %12 = vsyncpa [#allocation6], 0
    %s13 = scalar_lea.sflag [#allocation6], 1
    %14 = vsyncpa %s13, 0
    %15 = vsyncpa [#allocation9], 0
    %16 = vsyncpa [#allocation4], 0
    %s17 = scalar_lea.sflag [#allocation4], 1
    %18 = vsyncpa %s17, 0
    loop: start=0, step=1, limit=6
    $region2: #{tpu_custom_call.1} parent=1 // loop_pre_header
      _
    $region3: #{tpu_custom_call.1} parent=1 // loop_header
      %s20 = sphi 0, %s24
      %p21 = scmp.ge.s32.totalorder %s20, 6
      %s30 = sphi 0, %s32
      %s33 = sphi 0, %s30
      %s34 = sphi 0, %s33
      %s50 = sphi 0, %s34
      %s56 = sphi 0, %s58
      %s59 = sphi 0, %s56
      %s60 = sphi 0, %s59
      %s76 = sphi 0, %s60
      %s82 = sphi 0, %s84
      %s85 = sphi 0, %s82
      %s86 = sphi 0, %s85
      %s102 = sphi 0, %s86
      %s106 = sphi 0, %s106
      %s108 = sphi 0, %s106
      %s109 = sphi 0, %s108
      %s123 = sphi 0, %s109
      %s129 = sphi 0, %s131
      %s132 = sphi 0, %s129
      %s133 = sphi 0, %s132
      %s149 = sphi 0, %s133
    $region4: #{tpu_custom_call.1} parent=1 // loop_header_branch
      %23 = sbr.rel (%p21) target = $region8
    $region5: #{tpu_custom_call.1} parent=1 // loop_body
      %s25 = ssub.s32 %s20, 1
      %s26 = ssub.s32 %s20, 2
      %s27 = sadd.s32 %s20, 1
      %s28 = ssub.s32 %s20, %s27
      %p29 = scmp.eq.s32.totalorder %s28, 0
      %s31 = sadd.s32 %s30, 1
      %s32 = scalar_select %p29, %s30, %s31
      %p35 = pneg %p29
      %p36 = scmp.eq.s32.totalorder %s20, 3
      %p37 = por %p35, %p36
      %p38 = scmp.ne.s32.totalorder %s30, %s33
      %p39 = scmp.eq.s32.totalorder %s20, 0
      %p40 = por %p38, %p39
      %p41 = scmp.ne.s32.totalorder %s30, %s33
      %p42 = scmp.eq.s32.totalorder %s25, 3
      %p43 = por %p41, %p42
      %p44 = scmp.ne.s32.totalorder %s33, %s34
      %p45 = scmp.eq.s32.totalorder %s25, 0
      %p46 = por %p44, %p45
      %p47 = scmp.ne.s32.totalorder %s33, %s34
      %p48 = scmp.eq.s32.totalorder %s26, 3
      %p49 = por %p47, %p48
      %p51 = scmp.ne.s32.totalorder %s34, %s50
      %p52 = scmp.eq.s32.totalorder %s26, 0
      %p53 = por %p51, %p52
      %s54 = ssub.s32 %s20, %s27
      %p55 = scmp.eq.s32.totalorder %s54, 0
      %s57 = sadd.s32 %s56, 1
      %s58 = scalar_select %p55, %s56, %s57
      %p61 = pneg %p55
      %p62 = scmp.eq.s32.totalorder %s20, 3
      %p63 = por %p61, %p62
      %p64 = scmp.ne.s32.totalorder %s56, %s59
      %p65 = scmp.eq.s32.totalorder %s20, 0
      %p66 = por %p64, %p65
      %p67 = scmp.ne.s32.totalorder %s56, %s59
      %p68 = scmp.eq.s32.totalorder %s25, 3
      %p69 = por %p67, %p68
      %p70 = scmp.ne.s32.totalorder %s59, %s60
      %p71 = scmp.eq.s32.totalorder %s25, 0
      %p72 = por %p70, %p71
      %p73 = scmp.ne.s32.totalorder %s59, %s60
      %p74 = scmp.eq.s32.totalorder %s26, 3
      %p75 = por %p73, %p74
      %p77 = scmp.ne.s32.totalorder %s60, %s76
      %p78 = scmp.eq.s32.totalorder %s26, 0
      %p79 = por %p77, %p78
      %s80 = ssub.s32 %s20, %s27
      %p81 = scmp.eq.s32.totalorder %s80, 0
      %s83 = sadd.s32 %s82, 1
      %s84 = scalar_select %p81, %s82, %s83
      %p87 = pneg %p81
      %p88 = scmp.eq.s32.totalorder %s20, 3
      %p89 = por %p87, %p88
      %p90 = scmp.ne.s32.totalorder %s82, %s85
      %p91 = scmp.eq.s32.totalorder %s20, 0
      %p92 = por %p90, %p91
      %p93 = scmp.ne.s32.totalorder %s82, %s85
      %p94 = scmp.eq.s32.totalorder %s25, 3
      %p95 = por %p93, %p94
      %p96 = scmp.ne.s32.totalorder %s85, %s86
      %p97 = scmp.eq.s32.totalorder %s25, 0
      %p98 = por %p96, %p97
      %p99 = scmp.ne.s32.totalorder %s85, %s86
      %p100 = scmp.eq.s32.totalorder %s26, 3
      %p101 = por %p99, %p100
      %p103 = scmp.ne.s32.totalorder %s86, %s102
      %p104 = scmp.eq.s32.totalorder %s26, 0
      %p105 = por %p103, %p104
      %s107 = sadd.s32 %s106, 1
      %p110 = scmp.eq.s32.totalorder %s20, 3
      %p111 = scmp.ne.s32.totalorder %s106, %s108
      %p112 = scmp.eq.s32.totalorder %s20, 0
      %p113 = por %p111, %p112
      %p114 = scmp.ne.s32.totalorder %s106, %s108
      %p115 = scmp.eq.s32.totalorder %s25, 3
      %p116 = por %p114, %p115
      %p117 = scmp.ne.s32.totalorder %s108, %s109
      %p118 = scmp.eq.s32.totalorder %s25, 0
      %p119 = por %p117, %p118
      %p120 = scmp.ne.s32.totalorder %s108, %s109
      %p121 = scmp.eq.s32.totalorder %s26, 3
      %p122 = por %p120, %p121
      %p124 = scmp.ne.s32.totalorder %s109, %s123
      %p125 = scmp.eq.s32.totalorder %s26, 0
      %p126 = por %p124, %p125
      %s127 = ssub.s32 %s20, %s27
      %p128 = scmp.eq.s32.totalorder %s127, 0
      %s130 = sadd.s32 %s129, 1
      %s131 = scalar_select %p128, %s129, %s130
      %p134 = pneg %p128
      %p135 = scmp.eq.s32.totalorder %s20, 3
      %p136 = por %p134, %p135
      %p137 = scmp.ne.s32.totalorder %s129, %s132
      %p138 = scmp.eq.s32.totalorder %s20, 0
      %p139 = por %p137, %p138
      %p140 = scmp.ne.s32.totalorder %s129, %s132
      %p141 = scmp.eq.s32.totalorder %s25, 3
      %p142 = por %p140, %p141
      %p143 = scmp.ne.s32.totalorder %s132, %s133
      %p144 = scmp.eq.s32.totalorder %s25, 0
      %p145 = por %p143, %p144
      %p146 = scmp.ne.s32.totalorder %s132, %s133
      %p147 = scmp.eq.s32.totalorder %s26, 3
      %p148 = por %p146, %p147
      %p150 = scmp.ne.s32.totalorder %s133, %s149
      %p151 = scmp.eq.s32.totalorder %s26, 0
      %p152 = por %p150, %p151
      %p153 = scmp.le.s32.totalorder 1, %s20
      %p154 = scmp.lt.s32.totalorder %s20, 5
      %p155 = pnand %p153, %p154
      %p156 = pneg %p155
      // Predicated region
      $region9: #{tpu_custom_call.1} parent=5 // pred_check
        _
      $region10: #{tpu_custom_call.1} parent=5 // pred_check_branch
        %158 = sbr.rel (%p155) target = $region12
      $region11: #{tpu_custom_call.1} parent=5 // pred_region
        %s159 = ssub.s32 %s20, 1
        // Predicated region
        $region13: #{tpu_custom_call.1} parent=11 // pred_check
          %p160 = pneg %p119
        $region14: #{tpu_custom_call.1} parent=11 // pred_check_branch
          %162 = sbr.rel (%p160) target = $region16
        $region15: #{tpu_custom_call.1} parent=11 // pred_region
          %s164 = ssub.s32 24576, 24576
          %165 = vsyncadd [#allocation9], %s164
          %s166 = sshll.u32 [#allocation8], 4
          %s167 = int_to_ptr.vmem [resolvable:$true] %s166
          %172 = dma.hbm_to_vmem [thread:$0]  %s3, 24576, %s167, [#allocation9], 256, 256, 16
        $region16: #{tpu_custom_call.1} parent=11 // pred_fallthru
          _
      $region12: #{tpu_custom_call.1} parent=5 // pred_fallthru
        _
      %p173 = scmp.lt.s32.totalorder %s20, 4
      // Predicated region
      $region17: #{tpu_custom_call.1} parent=5 // pred_check
        %p174 = pneg %p173
      $region18: #{tpu_custom_call.1} parent=5 // pred_check_branch
        %176 = sbr.rel (%p174) target = $region20
      $region19: #{tpu_custom_call.1} parent=5 // pred_region
        // Predicated region
        $region21: #{tpu_custom_call.1} parent=19 // pred_check
          %p177 = pneg %p40
        $region22: #{tpu_custom_call.1} parent=19 // pred_check_branch
          %179 = sbr.rel (%p177) target = $region24
        $region23: #{tpu_custom_call.1} parent=19 // pred_region
          %s180 = sand.u32 %s30, 1
          %s181 = scalar_lea.sflag [#allocation3], %s180
          %s182 = sand.u32 %s30, 1
          %s183 = smul.addr %s182, 8
          %s184 = scalar_lea.vmem [#allocation2], %s183
          %s186 = ssub.s32 128, 128
          %187 = vsyncadd %s181, %s186
          %s188 = smul.addr %s20, 128
          %s189 = scalar_lea.hbm %s0, %s188
          %s191 = sshll.u32 %s184, 4
          %s192 = int_to_ptr.vmem [resolvable:$true] %s191
          %194 = dma.hbm_to_vmem [thread:$0]  %s189, 128, %s192, %s181
        $region24: #{tpu_custom_call.1} parent=19 // pred_fallthru
          _
        // Predicated region
        $region25: #{tpu_custom_call.1} parent=19 // pred_check
          %p195 = pneg %p66
        $region26: #{tpu_custom_call.1} parent=19 // pred_check_branch
          %197 = sbr.rel (%p195) target = $region28
        $region27: #{tpu_custom_call.1} parent=19 // pred_region
          %s198 = sand.u32 %s20, 1
          %s199 = scalar_lea.sflag [#allocation6], %s198
          %s200 = sand.u32 %s56, 1
          %s201 = scalar_lea.vmem [#allocation5], %s200
          %s203 = ssub.s32 16, 16
          %204 = vsyncadd %s199, %s203
          %s205 = smul.addr %s20, 16
          %s206 = scalar_lea.hbm %s1, %s205
          %s208 = sshll.u32 %s201, 4
          %s209 = int_to_ptr.vmem [resolvable:$true] %s208
          %211 = dma.hbm_to_vmem [thread:$0]  %s206, 16, %s209, %s199
        $region28: #{tpu_custom_call.1} parent=19 // pred_fallthru
          _
        // Predicated region
        $region29: #{tpu_custom_call.1} parent=19 // pred_check
          %p212 = pneg %p92
        $region30: #{tpu_custom_call.1} parent=19 // pred_check_branch
          %214 = sbr.rel (%p212) target = $region32
        $region31: #{tpu_custom_call.1} parent=19 // pred_region
          %s215 = sand.u32 %s20, 1
          %s216 = scalar_lea.sflag [#allocation6], %s215
          %s217 = sand.u32 %s82, 1
          %s218 = smul.addr %s217, 8
          %s219 = scalar_lea.vmem [#allocation7], %s218
          %s221 = ssub.s32 128, 128
          %222 = vsyncadd %s216, %s221
          %s223 = smul.addr %s20, 128
          %s224 = scalar_lea.hbm %s2, %s223
          %s226 = sshll.u32 %s219, 4
          %s227 = int_to_ptr.vmem [resolvable:$true] %s226
          %229 = dma.hbm_to_vmem [thread:$0]  %s224, 128, %s227, %s216
        $region32: #{tpu_custom_call.1} parent=19 // pred_fallthru
          _
      $region20: #{tpu_custom_call.1} parent=5 // pred_fallthru
        _
      %p230 = scmp.le.s32.totalorder 1, %s20
      %p231 = scmp.lt.s32.totalorder %s20, 5
      %p232 = pnand %p230, %p231
      %p233 = pneg %p232
      // Predicated region
      $region33: #{tpu_custom_call.1} parent=5 // pred_check
        _
      $region34: #{tpu_custom_call.1} parent=5 // pred_check_branch
        %235 = sbr.rel (%p232) target = $region36
      $region35: #{tpu_custom_call.1} parent=5 // pred_region
        %s236 = ssub.s32 %s20, 1
        %s237 = sand.u32 %s33, 1
        %s238 = scalar_lea.sflag [#allocation3], %s237
        %s239 = sand.u32 %s33, 1
        %s240 = smul.addr %s239, 8
        %s241 = scalar_lea.vmem [#allocation2], %s240
        // Predicated region
        $region37: #{tpu_custom_call.1} parent=35 // pred_check
          %p242 = pneg %p46
        $region38: #{tpu_custom_call.1} parent=35 // pred_check_branch
          %244 = sbr.rel (%p242) target = $region40
        $region39: #{tpu_custom_call.1} parent=35 // pred_region
          %245 = dma.done %s238, 128
        $region40: #{tpu_custom_call.1} parent=35 // pred_fallthru
          _
        %s246 = sand.u32 %s25, 1
        %s247 = scalar_lea.sflag [#allocation6], %s246
        %s248 = sand.u32 %s59, 1
        %s249 = scalar_lea.vmem [#allocation5], %s248
        // Predicated region
        $region41: #{tpu_custom_call.1} parent=35 // pred_check
          %p250 = pneg %p72
        $region42: #{tpu_custom_call.1} parent=35 // pred_check_branch
          %252 = sbr.rel (%p250) target = $region44
        $region43: #{tpu_custom_call.1} parent=35 // pred_region
          %253 = dma.done %s247, 16
        $region44: #{tpu_custom_call.1} parent=35 // pred_fallthru
          _
        %s254 = sand.u32 %s25, 1
        %s255 = scalar_lea.sflag [#allocation6], %s254
        %s256 = sand.u32 %s85, 1
        %s257 = smul.addr %s256, 8
        %s258 = scalar_lea.vmem [#allocation7], %s257
        // Predicated region
        $region45: #{tpu_custom_call.1} parent=35 // pred_check
          %p259 = pneg %p98
        $region46: #{tpu_custom_call.1} parent=35 // pred_check_branch
          %261 = sbr.rel (%p259) target = $region48
        $region47: #{tpu_custom_call.1} parent=35 // pred_region
          %262 = dma.done %s255, 128
        $region48: #{tpu_custom_call.1} parent=35 // pred_fallthru
          _
        // Predicated region
        $region49: #{tpu_custom_call.1} parent=35 // pred_check
          %p263 = pneg %p119
        $region50: #{tpu_custom_call.1} parent=35 // pred_check_branch
          %265 = sbr.rel (%p263) target = $region52
        $region51: #{tpu_custom_call.1} parent=35 // pred_region
          %266 = dma.done [#allocation9], 24576
        $region52: #{tpu_custom_call.1} parent=35 // pred_fallthru
          _
        %s267 = sand.u32 %s33, 1
        %s268 = scalar_lea.sflag [#allocation3], %s267
        %s269 = sand.u32 %s33, 1
        %s270 = smul.addr %s269, 8
        %s271 = scalar_lea.vmem [#allocation2], %s270
        %p272 = pneg %p46
        %p273 = pneg %p43
        %s274 = sand.u32 %s25, 1
        %s275 = scalar_lea.sflag [#allocation6], %s274
        %s276 = sand.u32 %s59, 1
        %s277 = scalar_lea.vmem [#allocation5], %s276
        %p278 = pneg %p72
        %p279 = pneg %p69
        %s280 = sand.u32 %s25, 1
        %s281 = scalar_lea.sflag [#allocation6], %s280
        %s282 = sand.u32 %s85, 1
        %s283 = smul.addr %s282, 8
        %s284 = scalar_lea.vmem [#allocation7], %s283
        %p285 = pneg %p98
        %p286 = pneg %p95
        %p287 = pneg %p119
        %p288 = pneg %p116
        %p289 = pneg %p145
        %p290 = pneg %p142
        %s291 = sand.u32 %s132, 1
        %s292 = scalar_lea.sflag [#allocation4], %s291
        %s293 = sand.u32 %s132, 1
        %s294 = smul.addr %s293, 16
        %s295 = scalar_lea.vmem [#allocation10], %s294
        %v296 = vld [vmem:[%s241] sm:$0xff]
        %v297 = vld [vmem:[%s249] sm:$0x1]
        %v298 = vld [vmem:[%s258] sm:$0xff]
        %vm299 = vcmp.gt.f32.partialorder %v298, 0.0
        %v300 = vsel %vm299, 0.0, -9e+15
        %v301 = vld [vmem:[#allocation8] sm:$0xff]
        %v302 = vld [vmem:[#allocation8 + $0x8] sm:$0xff]
        %v303 = vld [vmem:[#allocation8 + $0x10] sm:$0xff]
        %v304 = vld [vmem:[#allocation8 + $0x18] sm:$0xff]
        %vm305 = vcmask 130048
        %v307 = vsel %vm305, %v296, 0
        %309 = vmatprep.subr.mxu0 %v302
        %310 = vmatpush1.msra.mxu0 %v301
        %311 = vmatprep.subr.mxu0 %v304
        %312 = vmatpush1.msra.mxu0 %v303
        %313 = vmatprep.subr.mxu0 0.0
        %314 = vmatpush1.msra.mxu0 0.0
        %315 = vmatprep.subr.mxu0 0.0
        %316 = vmatpush1.msra.mxu0 0.0
        %317 = vmatprep.subr.mxu0 0.0
        %318 = vmatpush1.msra.mxu0 0.0
        %319 = vmatprep.subr.mxu0 0.0
        %320 = vmatpush1.msra.mxu0 0.0
        %321 = vmatprep.subr.mxu0 0.0
        %322 = vmatpush1.msra.mxu0 0.0
        %323 = vmatprep.subr.mxu0 0.0
        %324 = vmatpush1.msra.mxu0 0.0
        %325 = vmatprep.subr.mxu0 0.0
        %326 = vmatpush1.msra.mxu0 0.0
        %327 = vmatprep.subr.mxu0 0.0
        %328 = vmatpush1.msra.mxu0 0.0
        %329 = vmatprep.subr.mxu0 0.0
        %330 = vmatpush1.msra.mxu0 0.0
        %331 = vmatprep.subr.mxu0 0.0
        %332 = vmatpush1.msra.mxu0 0.0
        %333 = vmatprep.subr.mxu0 0.0
        %334 = vmatpush1.msra.mxu0 0.0
        %335 = vmatprep.subr.mxu0 0.0
        %336 = vmatpush1.msra.mxu0 0.0
        %337 = vmatprep.subr.mxu0 0.0
        %338 = vmatpush1.msra.mxu0 0.0
        %339 = vmatprep.subr.mxu0 0.0
        %340 = vmatpush1.msra.mxu0 0.0
        %341 = vmatprep.subr.mxu0 0.0
        %342 = vmatpush1.msra.mxu0 0.0
        %343 = vmatprep.subr.mxu0 0.0
        %344 = vmatpush1.msra.mxu0 0.0
        %345 = vmatprep.subr.mxu0 0.0
        %346 = vmatpush1.msra.mxu0 0.0
        %347 = vmatprep.subr.mxu0 0.0
        %348 = vmatpush1.msra.mxu0 0.0
        %349 = vmatprep.subr.mxu0 0.0
        %350 = vmatpush1.msra.mxu0 0.0
        %351 = vmatprep.subr.mxu0 0.0
        %352 = vmatpush1.msra.mxu0 0.0
        %353 = vmatprep.subr.mxu0 0.0
        %354 = vmatpush1.msra.mxu0 0.0
        %355 = vmatprep.subr.mxu0 0.0
        %356 = vmatpush1.msra.mxu0 0.0
        %357 = vmatprep.subr.mxu0 0.0
        %358 = vmatpush1.msra.mxu0 0.0
        %359 = vmatprep.subr.mxu0 0.0
        %360 = vmatpush1.msra.mxu0 0.0
        %361 = vmatprep.subr.mxu0 0.0
        %362 = vmatpush1.msra.mxu0 0.0
        %363 = vmatprep.subr.mxu0 0.0
        %364 = vmatpush1.msra.mxu0 0.0
        %365 = vmatprep.subr.mxu0 0.0
        %366 = vmatpush1.msra.mxu0 0.0
        %367 = vmatprep.subr.mxu0 0.0
        %368 = vmatpush1.msra.mxu0 0.0
        %369 = vmatprep.subr.mxu0 0.0
        %370 = vmatpush1.msra.mxu0 0.0
        %371 = vmatprep.subr.mxu0 0.0
        %372 = vmatpush1.msra.mxu0 0.0
        %373 = vmatprep.mubr.f32.mxu0 0.0
        %374 = vmatmul.mubr.f32.gmra.mrb[0].mxu0 %v307
        %v375 = vpop.f32.mrb[0].mxu0
        %v376 = vadd.f32 0.0, %v375
        %v377 = vpop.f32.mrb[0].mxu0
        %v378 = vadd.f32 0.0, %v377
        %379 = vdwg.mxu0
        %v380 = vld [vmem:[#allocation8 + $0x20] sm:$0xff]
        %v381 = vld [vmem:[#allocation8 + $0x30] sm:$0xff]
        %v382 = vld [vmem:[#allocation8 + $0x40] sm:$0xff]
        %v383 = vld [vmem:[#allocation8 + $0x50] sm:$0xff]
        %v384 = vld [vmem:[#allocation8 + $0x60] sm:$0xff]
        %v385 = vld [vmem:[#allocation8 + $0x70] sm:$0xff]
        %v386 = vld [vmem:[#allocation8 + $0x80] sm:$0xff]
        %v387 = vld [vmem:[#allocation8 + $0x90] sm:$0xff]
        %v388 = vld [vmem:[#allocation8 + $0xa0] sm:$0xff]
        %v389 = vld [vmem:[#allocation8 + $0xb0] sm:$0xff]
        %v390 = vld [vmem:[#allocation8 + $0xc0] sm:$0xff]
        %v391 = vld [vmem:[#allocation8 + $0xd0] sm:$0xff]
        %v392 = vld [vmem:[#allocation8 + $0xe0] sm:$0xff]
        %v393 = vld [vmem:[#allocation8 + $0xf0] sm:$0xff]
        %v394 = vld [vmem:[#allocation8 + $0x100] sm:$0xff]
        %v395 = vld [vmem:[#allocation8 + $0x110] sm:$0xff]
        %v396 = vld [vmem:[#allocation8 + $0x120] sm:$0xff]
        %v397 = vld [vmem:[#allocation8 + $0x130] sm:$0xff]
        %v398 = vld [vmem:[#allocation8 + $0x140] sm:$0xff]
        %v399 = vld [vmem:[#allocation8 + $0x150] sm:$0xff]
        %v400 = vld [vmem:[#allocation8 + $0x160] sm:$0xff]
        %v401 = vld [vmem:[#allocation8 + $0x170] sm:$0xff]
        %v402 = vld [vmem:[#allocation8 + $0x180] sm:$0xff]
        %v403 = vld [vmem:[#allocation8 + $0x190] sm:$0xff]
        %v404 = vld [vmem:[#allocation8 + $0x1a0] sm:$0xff]
        %v405 = vld [vmem:[#allocation8 + $0x1b0] sm:$0xff]
        %v406 = vld [vmem:[#allocation8 + $0x1c0] sm:$0xff]
        %v407 = vld [vmem:[#allocation8 + $0x1d0] sm:$0xff]
        %v408 = vld [vmem:[#allocation8 + $0x1e0] sm:$0xff]
        %v409 = vld [vmem:[#allocation8 + $0x1f0] sm:$0xff]
        %v410 = vld [vmem:[#allocation8 + $0x200] sm:$0xff]
        %v411 = vld [vmem:[#allocation8 + $0x210] sm:$0xff]
        %412 = vmatprep.subr.mxu0 0.0
        %413 = vmatpush1.msra.mxu0 %v380
        %414 = vmatprep.subr.mxu0 0.0
        %415 = vmatpush1.msra.mxu0 %v381
        %416 = vmatprep.subr.mxu0 0.0
        %417 = vmatpush1.msra.mxu0 %v382
        %418 = vmatprep.subr.mxu0 0.0
        %419 = vmatpush1.msra.mxu0 %v383
        %420 = vmatprep.subr.mxu0 0.0
        %421 = vmatpush1.msra.mxu0 %v384
        %422 = vmatprep.subr.mxu0 0.0
        %423 = vmatpush1.msra.mxu0 %v385
        %424 = vmatprep.subr.mxu0 0.0
        %425 = vmatpush1.msra.mxu0 %v386
        %426 = vmatprep.subr.mxu0 0.0
        %427 = vmatpush1.msra.mxu0 %v387
        %428 = vmatprep.subr.mxu0 0.0
        %429 = vmatpush1.msra.mxu0 %v388
        %430 = vmatprep.subr.mxu0 0.0
        %431 = vmatpush1.msra.mxu0 %v389
        %432 = vmatprep.subr.mxu0 0.0
        %433 = vmatpush1.msra.mxu0 %v390
        %434 = vmatprep.subr.mxu0 0.0
        %435 = vmatpush1.msra.mxu0 %v391
        %436 = vmatprep.subr.mxu0 0.0
        %437 = vmatpush1.msra.mxu0 %v392
        %438 = vmatprep.subr.mxu0 0.0
        %439 = vmatpush1.msra.mxu0 %v393
        %440 = vmatprep.subr.mxu0 0.0
        %441 = vmatpush1.msra.mxu0 %v394
        %442 = vmatprep.subr.mxu0 0.0
        %443 = vmatpush1.msra.mxu0 %v395
        %444 = vmatprep.subr.mxu0 0.0
        %445 = vmatpush1.msra.mxu0 %v396
        %446 = vmatprep.subr.mxu0 0.0
        %447 = vmatpush1.msra.mxu0 %v397
        %448 = vmatprep.subr.mxu0 0.0
        %449 = vmatpush1.msra.mxu0 %v398
        %450 = vmatprep.subr.mxu0 0.0
        %451 = vmatpush1.msra.mxu0 %v399
        %452 = vmatprep.subr.mxu0 0.0
        %453 = vmatpush1.msra.mxu0 %v400
        %454 = vmatprep.subr.mxu0 0.0
        %455 = vmatpush1.msra.mxu0 %v401
        %456 = vmatprep.subr.mxu0 0.0
        %457 = vmatpush1.msra.mxu0 %v402
        %458 = vmatprep.subr.mxu0 0.0
        %459 = vmatpush1.msra.mxu0 %v403
        %460 = vmatprep.subr.mxu0 0.0
        %461 = vmatpush1.msra.mxu0 %v404
        %462 = vmatprep.subr.mxu0 0.0
        %463 = vmatpush1.msra.mxu0 %v405
        %464 = vmatprep.subr.mxu0 0.0
        %465 = vmatpush1.msra.mxu0 %v406
        %466 = vmatprep.subr.mxu0 0.0
        %467 = vmatpush1.msra.mxu0 %v407
        %468 = vmatprep.subr.mxu0 0.0
        %469 = vmatpush1.msra.mxu0 %v408
        %470 = vmatprep.subr.mxu0 0.0
        %471 = vmatpush1.msra.mxu0 %v409
        %472 = vmatprep.subr.mxu0 0.0
        %473 = vmatpush1.msra.mxu0 %v410
        %474 = vmatprep.subr.mxu0 0.0
        %475 = vmatpush1.msra.mxu0 %v411
        %476 = vmatprep.mubr.f32.mxu0 %v378
        %477 = vmatmul.mubr.f32.gmra.mrb[0].mxu0 %v376
        %v478 = vpop.f32.mrb[0].mxu0
        %v479 = vadd.f32 0.0, %v478
        %v480 = vpop.f32.mrb[0].mxu0
        %481 = vdwg.mxu0
        %482 = vxpose.xlu0.b32.start [1/16] %v479, 128
        %483 = vxpose.xlu0.b32.cont [2/16] 0.0, 128
        %484 = vxpose.xlu0.b32.cont [3/16] 0.0, 128
        %485 = vxpose.xlu0.b32.cont [4/16] 0.0, 128
        %486 = vxpose.xlu0.b32.cont [5/16] 0.0, 128
        %487 = vxpose.xlu0.b32.cont [6/16] 0.0, 128
        %488 = vxpose.xlu0.b32.cont [7/16] 0.0, 128
        %489 = vxpose.xlu0.b32.cont [8/16] 0.0, 128
        %490 = vxpose.xlu0.b32.cont [9/16] 0.0, 128
        %491 = vxpose.xlu0.b32.cont [10/16] 0.0, 128
        %492 = vxpose.xlu0.b32.cont [11/16] 0.0, 128
        %493 = vxpose.xlu0.b32.cont [12/16] 0.0, 128
        %494 = vxpose.xlu0.b32.cont [13/16] 0.0, 128
        %495 = vxpose.xlu0.b32.cont [14/16] 0.0, 128
        %496 = vxpose.xlu0.b32.cont [15/16] 0.0, 128
        %497 = vxpose.xlu0.b32.end [16/16] 0.0, 128
        %v498 = vpop.trf.xlu0
        %v499 = vpop.trf.xlu0
        %v500 = vpop.trf.xlu0
        %v501 = vpop.trf.xlu0
        %v502 = vpop.trf.xlu0
        %v503 = vpop.trf.xlu0
        %v504 = vpop.trf.xlu0
        %v505 = vpop.trf.xlu0
        %v506 = vpop.trf.xlu0
        %v507 = vpop.trf.xlu0
        %v508 = vpop.trf.xlu0
        %v509 = vpop.trf.xlu0
        %v510 = vpop.trf.xlu0
        %v511 = vpop.trf.xlu0
        %v512 = vpop.trf.xlu0
        %v513 = vpop.trf.xlu0
        %515 = vset.pattern.permute.xlu0 0
        %516 = vperm.xlu0 %515, %v479
        %v517 = vpop.permute.xlu0 %516
        %v519 = vlaneseq
        %v520 = vshrl.u32 %v519, 7
        %v521 = vsub.s32 0, %v520
        %v522 = vrot.slane %v499, %v521
        %v523 = vadd.f32 %v517, %v522
        %vm524 = vcmp.gt.f32.partialorder %v523, 0.0
        %v525 = vmul.f32 %v523, 0.2
        %v526 = vsel %vm524, %v523, %v525
        %v527 = vadd.f32 %v526, %v300
        %vm528 = vcmask 64512
        %v529 = vsel %vm528, %v527, -inf
        %530 = vmax.xlane.f32.xlu0 %v529
        %v531 = vpop.xlane.xlu0 %530
        %v532 = vsub.f32 %v527, %v531
        %v533 = vmul.f32 %v532, 1.442695
        %v534 = vpow.pop %v533
        %v535 = vsel %vm528, %v534, 0.0
        %536 = vadd.xlane.f32.xlu0 %v535
        %v537 = vpop.xlane.xlu0 %536
        %v538 = vrcp.pop %v537
        %v539 = vmul.f32 %v534, %v538
        %v541 = vsel %vm528, %v539, 0
        %543 = vmatprep.subr.mxu0 0.0
        %544 = vmatpush1.msra.mxu0 %v376
        %545 = vmatprep.subr.mxu0 0.0
        %546 = vmatpush1.msra.mxu0 0.0
        %547 = vmatprep.subr.mxu0 0.0
        %548 = vmatpush1.msra.mxu0 0.0
        %549 = vmatprep.subr.mxu0 0.0
        %550 = vmatpush1.msra.mxu0 0.0
        %551 = vmatprep.subr.mxu0 0.0
        %552 = vmatpush1.msra.mxu0 0.0
        %553 = vmatprep.subr.mxu0 0.0
        %554 = vmatpush1.msra.mxu0 0.0
        %555 = vmatprep.subr.mxu0 0.0
        %556 = vmatpush1.msra.mxu0 0.0
        %557 = vmatprep.subr.mxu0 0.0
        %558 = vmatpush1.msra.mxu0 0.0
        %559 = vmatprep.subr.mxu0 0.0
        %560 = vmatpush1.msra.mxu0 0.0
        %561 = vmatprep.subr.mxu0 0.0
        %562 = vmatpush1.msra.mxu0 0.0
        %563 = vmatprep.subr.mxu0 0.0
        %564 = vmatpush1.msra.mxu0 0.0
        %565 = vmatprep.subr.mxu0 0.0
        %566 = vmatpush1.msra.mxu0 0.0
        %567 = vmatprep.subr.mxu0 0.0
        %568 = vmatpush1.msra.mxu0 0.0
        %569 = vmatprep.subr.mxu0 0.0
        %570 = vmatpush1.msra.mxu0 0.0
        %571 = vmatprep.subr.mxu0 0.0
        %572 = vmatpush1.msra.mxu0 0.0
        %573 = vmatprep.subr.mxu0 0.0
        %574 = vmatpush1.msra.mxu0 0.0
        %575 = vmatprep.subr.mxu0 0.0
        %576 = vmatpush1.msra.mxu0 0.0
        %577 = vmatprep.subr.mxu0 0.0
        %578 = vmatpush1.msra.mxu0 0.0
        %579 = vmatprep.subr.mxu0 0.0
        %580 = vmatpush1.msra.mxu0 0.0
        %581 = vmatprep.subr.mxu0 0.0
        %582 = vmatpush1.msra.mxu0 0.0
        %583 = vmatprep.subr.mxu0 0.0
        %584 = vmatpush1.msra.mxu0 0.0
        %585 = vmatprep.subr.mxu0 0.0
        %586 = vmatpush1.msra.mxu0 0.0
        %587 = vmatprep.subr.mxu0 0.0
        %588 = vmatpush1.msra.mxu0 0.0
        %589 = vmatprep.subr.mxu0 0.0
        %590 = vmatpush1.msra.mxu0 0.0
        %591 = vmatprep.subr.mxu0 0.0
        %592 = vmatpush1.msra.mxu0 0.0
        %593 = vmatprep.subr.mxu0 0.0
        %594 = vmatpush1.msra.mxu0 0.0
        %595 = vmatprep.subr.mxu0 0.0
        %596 = vmatpush1.msra.mxu0 0.0
        %597 = vmatprep.subr.mxu0 0.0
        %598 = vmatpush1.msra.mxu0 0.0
        %599 = vmatprep.subr.mxu0 0.0
        %600 = vmatpush1.msra.mxu0 0.0
        %601 = vmatprep.subr.mxu0 0.0
        %602 = vmatpush1.msra.mxu0 0.0
        %603 = vmatprep.subr.mxu0 0.0
        %604 = vmatpush1.msra.mxu0 0.0
        %605 = vmatprep.subr.mxu0 0.0
        %606 = vmatpush1.msra.mxu0 0.0
        %607 = vmatprep.mubr.f32.mxu0 0.0
        %608 = vmatmul.mubr.f32.gmra.mrb[0].mxu0 %v541
        %v609 = vpop.f32.mrb[0].mxu0
        %v610 = vadd.f32 0.0, %v609
        %v611 = vpop.f32.mrb[0].mxu0
        %612 = vdwg.mxu0
        %vm613 = vcmp.gt.f32.partialorder %v610, 0.0
        %v614 = vmul.f32 %v610, 1.442695
        %v615 = vpow.pop %v614
        %v616 = vsub.f32 %v615, 1.0
        %v617 = vsel %vm613, %v610, %v616
        %618 = vset.pattern.permute.xlu0 1
        %619 = vperm.xlu0 %618, %v479
        %v620 = vpop.permute.xlu0 %619
        %v622 = vlaneseq
        %v623 = vshrl.u32 %v622, 7
        %v624 = vsub.s32 1, %v623
        %v625 = vrot.slane %v499, %v624
        %v626 = vadd.f32 %v620, %v625
        %vm627 = vcmp.gt.f32.partialorder %v626, 0.0
        %v628 = vmul.f32 %v626, 0.2
        %v629 = vsel %vm627, %v626, %v628
        %v630 = vadd.f32 %v629, %v300
        %v631 = vsel %vm528, %v630, -inf
        %632 = vmax.xlane.f32.xlu0 %v631
        %v633 = vpop.xlane.xlu0 %632
        %v634 = vsub.f32 %v630, %v633
        %v635 = vmul.f32 %v634, 1.442695
        %v636 = vpow.pop %v635
        %v637 = vsel %vm528, %v636, 0.0
        %638 = vadd.xlane.f32.xlu0 %v637
        %v639 = vpop.xlane.xlu0 %638
        %v640 = vrcp.pop %v639
        %v641 = vmul.f32 %v636, %v640
        %643 = vrot.lane.b32.xlu0 %v376, 96
        %v644 = vpop.permute.xlu0 %643
        %v647 = vsel %vm528, %v641, 0
        %649 = vmatprep.subr.mxu0 0.0
        %650 = vmatpush1.msra.mxu0 %v644
        %651 = vmatprep.subr.mxu0 0.0
        %652 = vmatpush1.msra.mxu0 0.0
        %653 = vmatprep.subr.mxu0 0.0
        %654 = vmatpush1.msra.mxu0 0.0
        %655 = vmatprep.subr.mxu0 0.0
        %656 = vmatpush1.msra.mxu0 0.0
        %657 = vmatprep.subr.mxu0 0.0
        %658 = vmatpush1.msra.mxu0 0.0
        %659 = vmatprep.subr.mxu0 0.0
        %660 = vmatpush1.msra.mxu0 0.0
        %661 = vmatprep.subr.mxu0 0.0
        %662 = vmatpush1.msra.mxu0 0.0
        %663 = vmatprep.subr.mxu0 0.0
        %664 = vmatpush1.msra.mxu0 0.0
        %665 = vmatprep.subr.mxu0 0.0
        %666 = vmatpush1.msra.mxu0 0.0
        %667 = vmatprep.subr.mxu0 0.0
        %668 = vmatpush1.msra.mxu0 0.0
        %669 = vmatprep.subr.mxu0 0.0
        %670 = vmatpush1.msra.mxu0 0.0
        %671 = vmatprep.subr.mxu0 0.0
        %672 = vmatpush1.msra.mxu0 0.0
        %673 = vmatprep.subr.mxu0 0.0
        %674 = vmatpush1.msra.mxu0 0.0
        %675 = vmatprep.subr.mxu0 0.0
        %676 = vmatpush1.msra.mxu0 0.0
        %677 = vmatprep.subr.mxu0 0.0
        %678 = vmatpush1.msra.mxu0 0.0
        %679 = vmatprep.subr.mxu0 0.0
        %680 = vmatpush1.msra.mxu0 0.0
        %681 = vmatprep.subr.mxu0 0.0
        %682 = vmatpush1.msra.mxu0 0.0
        %683 = vmatprep.subr.mxu0 0.0
        %684 = vmatpush1.msra.mxu0 0.0
        %685 = vmatprep.subr.mxu0 0.0
        %686 = vmatpush1.msra.mxu0 0.0
        %687 = vmatprep.subr.mxu0 0.0
        %688 = vmatpush1.msra.mxu0 0.0
        %689 = vmatprep.subr.mxu0 0.0
        %690 = vmatpush1.msra.mxu0 0.0
        %691 = vmatprep.subr.mxu0 0.0
        %692 = vmatpush1.msra.mxu0 0.0
        %693 = vmatprep.subr.mxu0 0.0
        %694 = vmatpush1.msra.mxu0 0.0
        %695 = vmatprep.subr.mxu0 0.0
        %696 = vmatpush1.msra.mxu0 0.0
        %697 = vmatprep.subr.mxu0 0.0
        %698 = vmatpush1.msra.mxu0 0.0
        %699 = vmatprep.subr.mxu0 0.0
        %700 = vmatpush1.msra.mxu0 0.0
        %701 = vmatprep.subr.mxu0 0.0
        %702 = vmatpush1.msra.mxu0 0.0
        %703 = vmatprep.subr.mxu0 0.0
        %704 = vmatpush1.msra.mxu0 0.0
        %705 = vmatprep.subr.mxu0 0.0
        %706 = vmatpush1.msra.mxu0 0.0
        %707 = vmatprep.subr.mxu0 0.0
        %708 = vmatpush1.msra.mxu0 0.0
        %709 = vmatprep.subr.mxu0 0.0
        %710 = vmatpush1.msra.mxu0 0.0
        %711 = vmatprep.subr.mxu0 0.0
        %712 = vmatpush1.msra.mxu0 0.0
        %713 = vmatprep.mubr.f32.mxu0 0.0
        %714 = vmatmul.mubr.f32.gmra.mrb[0].mxu0 %v647
        %v715 = vpop.f32.mrb[0].mxu0
        %v716 = vadd.f32 0.0, %v715
        %v717 = vpop.f32.mrb[0].mxu0
        %718 = vdwg.mxu0
        %vm719 = vcmp.gt.f32.partialorder %v716, 0.0
        %v720 = vmul.f32 %v716, 1.442695
        %v721 = vpow.pop %v720
        %v722 = vsub.f32 %v721, 1.0
        %v723 = vsel %vm719, %v716, %v722
        %724 = vset.pattern.permute.xlu0 2
        %725 = vperm.xlu0 %724, %v479
        %v726 = vpop.permute.xlu0 %725
        %v728 = vlaneseq
        %v729 = vshrl.u32 %v728, 7
        %v730 = vsub.s32 2, %v729
        %v731 = vrot.slane %v499, %v730
        %v732 = vadd.f32 %v726, %v731
        %vm733 = vcmp.gt.f32.partialorder %v732, 0.0
        %v734 = vmul.f32 %v732, 0.2
        %v735 = vsel %vm733, %v732, %v734
        %v736 = vadd.f32 %v735, %v300
        %v737 = vsel %vm528, %v736, -inf
        %738 = vmax.xlane.f32.xlu0 %v737
        %v739 = vpop.xlane.xlu0 %738
        %v740 = vsub.f32 %v736, %v739
        %v741 = vmul.f32 %v740, 1.442695
        %v742 = vpow.pop %v741
        %v743 = vsel %vm528, %v742, 0.0
        %744 = vadd.xlane.f32.xlu0 %v743
        %v745 = vpop.xlane.xlu0 %744
        %v746 = vrcp.pop %v745
        %v747 = vmul.f32 %v742, %v746
        %748 = vrot.lane.b32.xlu0 %v376, 64
        %v749 = vpop.permute.xlu0 %748
        %v752 = vsel %vm528, %v747, 0
        %754 = vmatprep.subr.mxu0 0.0
        %755 = vmatpush1.msra.mxu0 %v749
        %756 = vmatprep.subr.mxu0 0.0
        %757 = vmatpush1.msra.mxu0 0.0
        %758 = vmatprep.subr.mxu0 0.0
        %759 = vmatpush1.msra.mxu0 0.0
        %760 = vmatprep.subr.mxu0 0.0
        %761 = vmatpush1.msra.mxu0 0.0
        %762 = vmatprep.subr.mxu0 0.0
        %763 = vmatpush1.msra.mxu0 0.0
        %764 = vmatprep.subr.mxu0 0.0
        %765 = vmatpush1.msra.mxu0 0.0
        %766 = vmatprep.subr.mxu0 0.0
        %767 = vmatpush1.msra.mxu0 0.0
        %768 = vmatprep.subr.mxu0 0.0
        %769 = vmatpush1.msra.mxu0 0.0
        %770 = vmatprep.subr.mxu0 0.0
        %771 = vmatpush1.msra.mxu0 0.0
        %772 = vmatprep.subr.mxu0 0.0
        %773 = vmatpush1.msra.mxu0 0.0
        %774 = vmatprep.subr.mxu0 0.0
        %775 = vmatpush1.msra.mxu0 0.0
        %776 = vmatprep.subr.mxu0 0.0
        %777 = vmatpush1.msra.mxu0 0.0
        %778 = vmatprep.subr.mxu0 0.0
        %779 = vmatpush1.msra.mxu0 0.0
        %780 = vmatprep.subr.mxu0 0.0
        %781 = vmatpush1.msra.mxu0 0.0
        %782 = vmatprep.subr.mxu0 0.0
        %783 = vmatpush1.msra.mxu0 0.0
        %784 = vmatprep.subr.mxu0 0.0
        %785 = vmatpush1.msra.mxu0 0.0
        %786 = vmatprep.subr.mxu0 0.0
        %787 = vmatpush1.msra.mxu0 0.0
        %788 = vmatprep.subr.mxu0 0.0
        %789 = vmatpush1.msra.mxu0 0.0
        %790 = vmatprep.subr.mxu0 0.0
        %791 = vmatpush1.msra.mxu0 0.0
        %792 = vmatprep.subr.mxu0 0.0
        %793 = vmatpush1.msra.mxu0 0.0
        %794 = vmatprep.subr.mxu0 0.0
        %795 = vmatpush1.msra.mxu0 0.0
        %796 = vmatprep.subr.mxu0 0.0
        %797 = vmatpush1.msra.mxu0 0.0
        %798 = vmatprep.subr.mxu0 0.0
        %799 = vmatpush1.msra.mxu0 0.0
        %800 = vmatprep.subr.mxu0 0.0
        %801 = vmatpush1.msra.mxu0 0.0
        %802 = vmatprep.subr.mxu0 0.0
        %803 = vmatpush1.msra.mxu0 0.0
        %804 = vmatprep.subr.mxu0 0.0
        %805 = vmatpush1.msra.mxu0 0.0
        %806 = vmatprep.subr.mxu0 0.0
        %807 = vmatpush1.msra.mxu0 0.0
        %808 = vmatprep.subr.mxu0 0.0
        %809 = vmatpush1.msra.mxu0 0.0
        %810 = vmatprep.subr.mxu0 0.0
        %811 = vmatpush1.msra.mxu0 0.0
        %812 = vmatprep.subr.mxu0 0.0
        %813 = vmatpush1.msra.mxu0 0.0
        %814 = vmatprep.subr.mxu0 0.0
        %815 = vmatpush1.msra.mxu0 0.0
        %816 = vmatprep.subr.mxu0 0.0
        %817 = vmatpush1.msra.mxu0 0.0
        %818 = vmatprep.mubr.f32.mxu0 0.0
        %819 = vmatmul.mubr.f32.gmra.mrb[0].mxu0 %v752
        %v820 = vpop.f32.mrb[0].mxu0
        %v821 = vadd.f32 0.0, %v820
        %v822 = vpop.f32.mrb[0].mxu0
        %823 = vdwg.mxu0
        %vm824 = vcmp.gt.f32.partialorder %v821, 0.0
        %v825 = vmul.f32 %v821, 1.442695
        %v826 = vpow.pop %v825
        %v827 = vsub.f32 %v826, 1.0
        %v828 = vsel %vm824, %v821, %v827
        %829 = vset.pattern.permute.xlu0 3
        %830 = vperm.xlu0 %829, %v479
        %v831 = vpop.permute.xlu0 %830
        %v833 = vlaneseq
        %v834 = vshrl.u32 %v833, 7
        %v835 = vsub.s32 3, %v834
        %v836 = vrot.slane %v499, %v835
        %v837 = vadd.f32 %v831, %v836
        %vm838 = vcmp.gt.f32.partialorder %v837, 0.0
        %v839 = vmul.f32 %v837, 0.2
        %v840 = vsel %vm838, %v837, %v839
        %v841 = vadd.f32 %v840, %v300
        %v842 = vsel %vm528, %v841, -inf
        %843 = vmax.xlane.f32.xlu0 %v842
        %v844 = vpop.xlane.xlu0 %843
        %v845 = vsub.f32 %v841, %v844
        %v846 = vmul.f32 %v845, 1.442695
        %v847 = vpow.pop %v846
        %v848 = vsel %vm528, %v847, 0.0
        %849 = vadd.xlane.f32.xlu0 %v848
        %v850 = vpop.xlane.xlu0 %849
        %v851 = vrcp.pop %v850
        %v852 = vmul.f32 %v847, %v851
        %853 = vrot.lane.b32.xlu0 %v376, 32
        %v854 = vpop.permute.xlu0 %853
        %v857 = vsel %vm528, %v852, 0
        %859 = vmatprep.subr.mxu0 0.0
        %860 = vmatpush1.msra.mxu0 %v854
        %861 = vmatprep.subr.mxu0 0.0
        %862 = vmatpush1.msra.mxu0 0.0
        %863 = vmatprep.subr.mxu0 0.0
        %864 = vmatpush1.msra.mxu0 0.0
        %865 = vmatprep.subr.mxu0 0.0
        %866 = vmatpush1.msra.mxu0 0.0
        %867 = vmatprep.subr.mxu0 0.0
        %868 = vmatpush1.msra.mxu0 0.0
        %869 = vmatprep.subr.mxu0 0.0
        %870 = vmatpush1.msra.mxu0 0.0
        %871 = vmatprep.subr.mxu0 0.0
        %872 = vmatpush1.msra.mxu0 0.0
        %873 = vmatprep.subr.mxu0 0.0
        %874 = vmatpush1.msra.mxu0 0.0
        %875 = vmatprep.subr.mxu0 0.0
        %876 = vmatpush1.msra.mxu0 0.0
        %877 = vmatprep.subr.mxu0 0.0
        %878 = vmatpush1.msra.mxu0 0.0
        %879 = vmatprep.subr.mxu0 0.0
        %880 = vmatpush1.msra.mxu0 0.0
        %881 = vmatprep.subr.mxu0 0.0
        %882 = vmatpush1.msra.mxu0 0.0
        %883 = vmatprep.subr.mxu0 0.0
        %884 = vmatpush1.msra.mxu0 0.0
        %885 = vmatprep.subr.mxu0 0.0
        %886 = vmatpush1.msra.mxu0 0.0
        %887 = vmatprep.subr.mxu0 0.0
        %888 = vmatpush1.msra.mxu0 0.0
        %889 = vmatprep.subr.mxu0 0.0
        %890 = vmatpush1.msra.mxu0 0.0
        %891 = vmatprep.subr.mxu0 0.0
        %892 = vmatpush1.msra.mxu0 0.0
        %893 = vmatprep.subr.mxu0 0.0
        %894 = vmatpush1.msra.mxu0 0.0
        %895 = vmatprep.subr.mxu0 0.0
        %896 = vmatpush1.msra.mxu0 0.0
        %897 = vmatprep.subr.mxu0 0.0
        %898 = vmatpush1.msra.mxu0 0.0
        %899 = vmatprep.subr.mxu0 0.0
        %900 = vmatpush1.msra.mxu0 0.0
        %901 = vmatprep.subr.mxu0 0.0
        %902 = vmatpush1.msra.mxu0 0.0
        %903 = vmatprep.subr.mxu0 0.0
        %904 = vmatpush1.msra.mxu0 0.0
        %905 = vmatprep.subr.mxu0 0.0
        %906 = vmatpush1.msra.mxu0 0.0
        %907 = vmatprep.subr.mxu0 0.0
        %908 = vmatpush1.msra.mxu0 0.0
        %909 = vmatprep.subr.mxu0 0.0
        %910 = vmatpush1.msra.mxu0 0.0
        %911 = vmatprep.subr.mxu0 0.0
        %912 = vmatpush1.msra.mxu0 0.0
        %913 = vmatprep.subr.mxu0 0.0
        %914 = vmatpush1.msra.mxu0 0.0
        %915 = vmatprep.subr.mxu0 0.0
        %916 = vmatpush1.msra.mxu0 0.0
        %917 = vmatprep.subr.mxu0 0.0
        %918 = vmatpush1.msra.mxu0 0.0
        %919 = vmatprep.subr.mxu0 0.0
        %920 = vmatpush1.msra.mxu0 0.0
        %921 = vmatprep.subr.mxu0 0.0
        %922 = vmatpush1.msra.mxu0 0.0
        %923 = vmatprep.mubr.f32.mxu0 0.0
        %924 = vmatmul.mubr.f32.gmra.mrb[0].mxu0 %v857
        %v925 = vpop.f32.mrb[0].mxu0
        %v926 = vadd.f32 0.0, %v925
        %v927 = vpop.f32.mrb[0].mxu0
        %928 = vdwg.mxu0
        %vm929 = vcmp.gt.f32.partialorder %v926, 0.0
        %v930 = vmul.f32 %v926, 1.442695
        %v931 = vpow.pop %v930
        %v932 = vsub.f32 %v931, 1.0
        %v933 = vsel %vm929, %v926, %v932
        %934 = vset.pattern.permute.xlu0 4
        %935 = vperm.xlu0 %934, %v479
        %v936 = vpop.permute.xlu0 %935
        %v938 = vlaneseq
        %v939 = vshrl.u32 %v938, 7
        %v940 = vsub.s32 4, %v939
        %v941 = vrot.slane %v499, %v940
        %v942 = vadd.f32 %v936, %v941
        %vm943 = vcmp.gt.f32.partialorder %v942, 0.0
        %v944 = vmul.f32 %v942, 0.2
        %v945 = vsel %vm943, %v942, %v944
        %v946 = vadd.f32 %v945, %v300
        %v947 = vsel %vm528, %v946, -inf
        %948 = vmax.xlane.f32.xlu0 %v947
        %v949 = vpop.xlane.xlu0 %948
        %v950 = vsub.f32 %v946, %v949
        %v951 = vmul.f32 %v950, 1.442695
        %v952 = vpow.pop %v951
        %v953 = vsel %vm528, %v952, 0.0
        %954 = vadd.xlane.f32.xlu0 %v953
        %v955 = vpop.xlane.xlu0 %954
        %v956 = vrcp.pop %v955
        %v957 = vmul.f32 %v952, %v956
        %v959 = vsel %vm528, %v957, 0
        %961 = vmatprep.subr.mxu0 0.0
        %962 = vmatpush1.msra.mxu0 %v378
        %963 = vmatprep.subr.mxu0 0.0
        %964 = vmatpush1.msra.mxu0 0.0
        %965 = vmatprep.subr.mxu0 0.0
        %966 = vmatpush1.msra.mxu0 0.0
        %967 = vmatprep.subr.mxu0 0.0
        %968 = vmatpush1.msra.mxu0 0.0
        %969 = vmatprep.subr.mxu0 0.0
        %970 = vmatpush1.msra.mxu0 0.0
        %971 = vmatprep.subr.mxu0 0.0
        %972 = vmatpush1.msra.mxu0 0.0
        %973 = vmatprep.subr.mxu0 0.0
        %974 = vmatpush1.msra.mxu0 0.0
        %975 = vmatprep.subr.mxu0 0.0
        %976 = vmatpush1.msra.mxu0 0.0
        %977 = vmatprep.subr.mxu0 0.0
        %978 = vmatpush1.msra.mxu0 0.0
        %979 = vmatprep.subr.mxu0 0.0
        %980 = vmatpush1.msra.mxu0 0.0
        %981 = vmatprep.subr.mxu0 0.0
        %982 = vmatpush1.msra.mxu0 0.0
        %983 = vmatprep.subr.mxu0 0.0
        %984 = vmatpush1.msra.mxu0 0.0
        %985 = vmatprep.subr.mxu0 0.0
        %986 = vmatpush1.msra.mxu0 0.0
        %987 = vmatprep.subr.mxu0 0.0
        %988 = vmatpush1.msra.mxu0 0.0
        %989 = vmatprep.subr.mxu0 0.0
        %990 = vmatpush1.msra.mxu0 0.0
        %991 = vmatprep.subr.mxu0 0.0
        %992 = vmatpush1.msra.mxu0 0.0
        %993 = vmatprep.subr.mxu0 0.0
        %994 = vmatpush1.msra.mxu0 0.0
        %995 = vmatprep.subr.mxu0 0.0
        %996 = vmatpush1.msra.mxu0 0.0
        %997 = vmatprep.subr.mxu0 0.0
        %998 = vmatpush1.msra.mxu0 0.0
        %999 = vmatprep.subr.mxu0 0.0
        %1000 = vmatpush1.msra.mxu0 0.0
        %1001 = vmatprep.subr.mxu0 0.0
        %1002 = vmatpush1.msra.mxu0 0.0
        %1003 = vmatprep.subr.mxu0 0.0
        %1004 = vmatpush1.msra.mxu0 0.0
        %1005 = vmatprep.subr.mxu0 0.0
        %1006 = vmatpush1.msra.mxu0 0.0
        %1007 = vmatprep.subr.mxu0 0.0
        %1008 = vmatpush1.msra.mxu0 0.0
        %1009 = vmatprep.subr.mxu0 0.0
        %1010 = vmatpush1.msra.mxu0 0.0
        %1011 = vmatprep.subr.mxu0 0.0
        %1012 = vmatpush1.msra.mxu0 0.0
        %1013 = vmatprep.subr.mxu0 0.0
        %1014 = vmatpush1.msra.mxu0 0.0
        %1015 = vmatprep.subr.mxu0 0.0
        %1016 = vmatpush1.msra.mxu0 0.0
        %1017 = vmatprep.subr.mxu0 0.0
        %1018 = vmatpush1.msra.mxu0 0.0
        %1019 = vmatprep.subr.mxu0 0.0
        %1020 = vmatpush1.msra.mxu0 0.0
        %1021 = vmatprep.subr.mxu0 0.0
        %1022 = vmatpush1.msra.mxu0 0.0
        %1023 = vmatprep.subr.mxu0 0.0
        %1024 = vmatpush1.msra.mxu0 0.0
        %1025 = vmatprep.mubr.f32.mxu0 0.0
        %1026 = vmatmul.mubr.f32.gmra.mrb[0].mxu0 %v959
        %v1027 = vpop.f32.mrb[0].mxu0
        %v1028 = vadd.f32 0.0, %v1027
        %v1029 = vpop.f32.mrb[0].mxu0
        %1030 = vdwg.mxu0
        %vm1031 = vcmp.gt.f32.partialorder %v1028, 0.0
        %v1032 = vmul.f32 %v1028, 1.442695
        %v1033 = vpow.pop %v1032
        %v1034 = vsub.f32 %v1033, 1.0
        %v1035 = vsel %vm1031, %v1028, %v1034
        %1036 = vset.pattern.permute.xlu0 5
        %1037 = vperm.xlu0 %1036, %v479
        %v1038 = vpop.permute.xlu0 %1037
        %v1040 = vlaneseq
        %v1041 = vshrl.u32 %v1040, 7
        %v1042 = vsub.s32 5, %v1041
        %v1043 = vrot.slane %v499, %v1042
        %v1044 = vadd.f32 %v1038, %v1043
        %vm1045 = vcmp.gt.f32.partialorder %v1044, 0.0
        %v1046 = vmul.f32 %v1044, 0.2
        %v1047 = vsel %vm1045, %v1044, %v1046
        %v1048 = vadd.f32 %v1047, %v300
        %v1049 = vsel %vm528, %v1048, -inf
        %1050 = vmax.xlane.f32.xlu0 %v1049
        %v1051 = vpop.xlane.xlu0 %1050
        %v1052 = vsub.f32 %v1048, %v1051
        %v1053 = vmul.f32 %v1052, 1.442695
        %v1054 = vpow.pop %v1053
        %v1055 = vsel %vm528, %v1054, 0.0
        %1056 = vadd.xlane.f32.xlu0 %v1055
        %v1057 = vpop.xlane.xlu0 %1056
        %v1058 = vrcp.pop %v1057
        %v1059 = vmul.f32 %v1054, %v1058
        %1061 = vrot.lane.b32.xlu0 %v378, 96
        %v1062 = vpop.permute.xlu0 %1061
        %v1065 = vsel %vm528, %v1059, 0
        %1067 = vmatprep.subr.mxu0 0.0
        %1068 = vmatpush1.msra.mxu0 %v1062
        %1069 = vmatprep.subr.mxu0 0.0
        %1070 = vmatpush1.msra.mxu0 0.0
        %1071 = vmatprep.subr.mxu0 0.0
        %1072 = vmatpush1.msra.mxu0 0.0
        %1073 = vmatprep.subr.mxu0 0.0
        %1074 = vmatpush1.msra.mxu0 0.0
        %1075 = vmatprep.subr.mxu0 0.0
        %1076 = vmatpush1.msra.mxu0 0.0
        %1077 = vmatprep.subr.mxu0 0.0
        %1078 = vmatpush1.msra.mxu0 0.0
        %1079 = vmatprep.subr.mxu0 0.0
        %1080 = vmatpush1.msra.mxu0 0.0
        %1081 = vmatprep.subr.mxu0 0.0
        %1082 = vmatpush1.msra.mxu0 0.0
        %1083 = vmatprep.subr.mxu0 0.0
        %1084 = vmatpush1.msra.mxu0 0.0
        %1085 = vmatprep.subr.mxu0 0.0
        %1086 = vmatpush1.msra.mxu0 0.0
        %1087 = vmatprep.subr.mxu0 0.0
        %1088 = vmatpush1.msra.mxu0 0.0
        %1089 = vmatprep.subr.mxu0 0.0
        %1090 = vmatpush1.msra.mxu0 0.0
        %1091 = vmatprep.subr.mxu0 0.0
        %1092 = vmatpush1.msra.mxu0 0.0
        %1093 = vmatprep.subr.mxu0 0.0
        %1094 = vmatpush1.msra.mxu0 0.0
        %1095 = vmatprep.subr.mxu0 0.0
        %1096 = vmatpush1.msra.mxu0 0.0
        %1097 = vmatprep.subr.mxu0 0.0
        %1098 = vmatpush1.msra.mxu0 0.0
        %1099 = vmatprep.subr.mxu0 0.0
        %1100 = vmatpush1.msra.mxu0 0.0
        %1101 = vmatprep.subr.mxu0 0.0
        %1102 = vmatpush1.msra.mxu0 0.0
        %1103 = vmatprep.subr.mxu0 0.0
        %1104 = vmatpush1.msra.mxu0 0.0
        %1105 = vmatprep.subr.mxu0 0.0
        %1106 = vmatpush1.msra.mxu0 0.0
        %1107 = vmatprep.subr.mxu0 0.0
        %1108 = vmatpush1.msra.mxu0 0.0
        %1109 = vmatprep.subr.mxu0 0.0
        %1110 = vmatpush1.msra.mxu0 0.0
        %1111 = vmatprep.subr.mxu0 0.0
        %1112 = vmatpush1.msra.mxu0 0.0
        %1113 = vmatprep.subr.mxu0 0.0
        %1114 = vmatpush1.msra.mxu0 0.0
        %1115 = vmatprep.subr.mxu0 0.0
        %1116 = vmatpush1.msra.mxu0 0.0
        %1117 = vmatprep.subr.mxu0 0.0
        %1118 = vmatpush1.msra.mxu0 0.0
        %1119 = vmatprep.subr.mxu0 0.0
        %1120 = vmatpush1.msra.mxu0 0.0
        %1121 = vmatprep.subr.mxu0 0.0
        %1122 = vmatpush1.msra.mxu0 0.0
        %1123 = vmatprep.subr.mxu0 0.0
        %1124 = vmatpush1.msra.mxu0 0.0
        %1125 = vmatprep.subr.mxu0 0.0
        %1126 = vmatpush1.msra.mxu0 0.0
        %1127 = vmatprep.subr.mxu0 0.0
        %1128 = vmatpush1.msra.mxu0 0.0
        %1129 = vmatprep.subr.mxu0 0.0
        %1130 = vmatpush1.msra.mxu0 0.0
        %1131 = vmatprep.mubr.f32.mxu0 0.0
        %1132 = vmatmul.mubr.f32.gmra.mrb[0].mxu0 %v1065
        %v1133 = vpop.f32.mrb[0].mxu0
        %v1134 = vadd.f32 0.0, %v1133
        %v1135 = vpop.f32.mrb[0].mxu0
        %1136 = vdwg.mxu0
        %vm1137 = vcmp.gt.f32.partialorder %v1134, 0.0
        %v1138 = vmul.f32 %v1134, 1.442695
        %v1139 = vpow.pop %v1138
        %v1140 = vsub.f32 %v1139, 1.0
        %v1141 = vsel %vm1137, %v1134, %v1140
        %1142 = vset.pattern.permute.xlu0 6
        %1143 = vperm.xlu0 %1142, %v479
        %v1144 = vpop.permute.xlu0 %1143
        %v1146 = vlaneseq
        %v1147 = vshrl.u32 %v1146, 7
        %v1148 = vsub.s32 6, %v1147
        %v1149 = vrot.slane %v499, %v1148
        %v1150 = vadd.f32 %v1144, %v1149
        %vm1151 = vcmp.gt.f32.partialorder %v1150, 0.0
        %v1152 = vmul.f32 %v1150, 0.2
        %v1153 = vsel %vm1151, %v1150, %v1152
        %v1154 = vadd.f32 %v1153, %v300
        %v1155 = vsel %vm528, %v1154, -inf
        %1156 = vmax.xlane.f32.xlu0 %v1155
        %v1157 = vpop.xlane.xlu0 %1156
        %v1158 = vsub.f32 %v1154, %v1157
        %v1159 = vmul.f32 %v1158, 1.442695
        %v1160 = vpow.pop %v1159
        %v1161 = vsel %vm528, %v1160, 0.0
        %1162 = vadd.xlane.f32.xlu0 %v1161
        %v1163 = vpop.xlane.xlu0 %1162
        %v1164 = vrcp.pop %v1163
        %v1165 = vmul.f32 %v1160, %v1164
        %1166 = vrot.lane.b32.xlu0 %v378, 64
        %v1167 = vpop.permute.xlu0 %1166
        %v1170 = vsel %vm528, %v1165, 0
        %1172 = vmatprep.subr.mxu0 0.0
        %1173 = vmatpush1.msra.mxu0 %v1167
        %1174 = vmatprep.subr.mxu0 0.0
        %1175 = vmatpush1.msra.mxu0 0.0
        %1176 = vmatprep.subr.mxu0 0.0
        %1177 = vmatpush1.msra.mxu0 0.0
        %1178 = vmatprep.subr.mxu0 0.0
        %1179 = vmatpush1.msra.mxu0 0.0
        %1180 = vmatprep.subr.mxu0 0.0
        %1181 = vmatpush1.msra.mxu0 0.0
        %1182 = vmatprep.subr.mxu0 0.0
        %1183 = vmatpush1.msra.mxu0 0.0
        %1184 = vmatprep.subr.mxu0 0.0
        %1185 = vmatpush1.msra.mxu0 0.0
        %1186 = vmatprep.subr.mxu0 0.0
        %1187 = vmatpush1.msra.mxu0 0.0
        %1188 = vmatprep.subr.mxu0 0.0
        %1189 = vmatpush1.msra.mxu0 0.0
        %1190 = vmatprep.subr.mxu0 0.0
        %1191 = vmatpush1.msra.mxu0 0.0
        %1192 = vmatprep.subr.mxu0 0.0
        %1193 = vmatpush1.msra.mxu0 0.0
        %1194 = vmatprep.subr.mxu0 0.0
        %1195 = vmatpush1.msra.mxu0 0.0
        %1196 = vmatprep.subr.mxu0 0.0
        %1197 = vmatpush1.msra.mxu0 0.0
        %1198 = vmatprep.subr.mxu0 0.0
        %1199 = vmatpush1.msra.mxu0 0.0
        %1200 = vmatprep.subr.mxu0 0.0
        %1201 = vmatpush1.msra.mxu0 0.0
        %1202 = vmatprep.subr.mxu0 0.0
        %1203 = vmatpush1.msra.mxu0 0.0
        %1204 = vmatprep.subr.mxu0 0.0
        %1205 = vmatpush1.msra.mxu0 0.0
        %1206 = vmatprep.subr.mxu0 0.0
        %1207 = vmatpush1.msra.mxu0 0.0
        %1208 = vmatprep.subr.mxu0 0.0
        %1209 = vmatpush1.msra.mxu0 0.0
        %1210 = vmatprep.subr.mxu0 0.0
        %1211 = vmatpush1.msra.mxu0 0.0
        %1212 = vmatprep.subr.mxu0 0.0
        %1213 = vmatpush1.msra.mxu0 0.0
        %1214 = vmatprep.subr.mxu0 0.0
        %1215 = vmatpush1.msra.mxu0 0.0
        %1216 = vmatprep.subr.mxu0 0.0
        %1217 = vmatpush1.msra.mxu0 0.0
        %1218 = vmatprep.subr.mxu0 0.0
        %1219 = vmatpush1.msra.mxu0 0.0
        %1220 = vmatprep.subr.mxu0 0.0
        %1221 = vmatpush1.msra.mxu0 0.0
        %1222 = vmatprep.subr.mxu0 0.0
        %1223 = vmatpush1.msra.mxu0 0.0
        %1224 = vmatprep.subr.mxu0 0.0
        %1225 = vmatpush1.msra.mxu0 0.0
        %1226 = vmatprep.subr.mxu0 0.0
        %1227 = vmatpush1.msra.mxu0 0.0
        %1228 = vmatprep.subr.mxu0 0.0
        %1229 = vmatpush1.msra.mxu0 0.0
        %1230 = vmatprep.subr.mxu0 0.0
        %1231 = vmatpush1.msra.mxu0 0.0
        %1232 = vmatprep.subr.mxu0 0.0
        %1233 = vmatpush1.msra.mxu0 0.0
        %1234 = vmatprep.subr.mxu0 0.0
        %1235 = vmatpush1.msra.mxu0 0.0
        %1236 = vmatprep.mubr.f32.mxu0 0.0
        %1237 = vmatmul.mubr.f32.gmra.mrb[0].mxu0 %v1170
        %v1238 = vpop.f32.mrb[0].mxu0
        %v1239 = vadd.f32 0.0, %v1238
        %v1240 = vpop.f32.mrb[0].mxu0
        %1241 = vdwg.mxu0
        %vm1242 = vcmp.gt.f32.partialorder %v1239, 0.0
        %v1243 = vmul.f32 %v1239, 1.442695
        %v1244 = vpow.pop %v1243
        %v1245 = vsub.f32 %v1244, 1.0
        %v1246 = vsel %vm1242, %v1239, %v1245
        %1247 = vset.pattern.permute.xlu0 7
        %1248 = vperm.xlu0 %1247, %v479
        %v1249 = vpop.permute.xlu0 %1248
        %v1251 = vlaneseq
        %v1252 = vshrl.u32 %v1251, 7
        %v1253 = vsub.s32 7, %v1252
        %v1254 = vrot.slane %v499, %v1253
        %v1255 = vadd.f32 %v1249, %v1254
        %vm1256 = vcmp.gt.f32.partialorder %v1255, 0.0
        %v1257 = vmul.f32 %v1255, 0.2
        %v1258 = vsel %vm1256, %v1255, %v1257
        %v1259 = vadd.f32 %v1258, %v300
        %v1260 = vsel %vm528, %v1259, -inf
        %1261 = vmax.xlane.f32.xlu0 %v1260
        %v1262 = vpop.xlane.xlu0 %1261
        %v1263 = vsub.f32 %v1259, %v1262
        %v1264 = vmul.f32 %v1263, 1.442695
        %v1265 = vpow.pop %v1264
        %v1266 = vsel %vm528, %v1265, 0.0
        %1267 = vadd.xlane.f32.xlu0 %v1266
        %v1268 = vpop.xlane.xlu0 %1267
        %v1269 = vrcp.pop %v1268
        %v1270 = vmul.f32 %v1265, %v1269
        %1271 = vrot.lane.b32.xlu0 %v378, 32
        %v1272 = vpop.permute.xlu0 %1271
        %v1275 = vsel %vm528, %v1270, 0
        %1277 = vmatprep.subr.mxu0 0.0
        %1278 = vmatpush1.msra.mxu0 %v1272
        %1279 = vmatprep.subr.mxu0 0.0
        %1280 = vmatpush1.msra.mxu0 0.0
        %1281 = vmatprep.subr.mxu0 0.0
        %1282 = vmatpush1.msra.mxu0 0.0
        %1283 = vmatprep.subr.mxu0 0.0
        %1284 = vmatpush1.msra.mxu0 0.0
        %1285 = vmatprep.subr.mxu0 0.0
        %1286 = vmatpush1.msra.mxu0 0.0
        %1287 = vmatprep.subr.mxu0 0.0
        %1288 = vmatpush1.msra.mxu0 0.0
        %1289 = vmatprep.subr.mxu0 0.0
        %1290 = vmatpush1.msra.mxu0 0.0
        %1291 = vmatprep.subr.mxu0 0.0
        %1292 = vmatpush1.msra.mxu0 0.0
        %1293 = vmatprep.subr.mxu0 0.0
        %1294 = vmatpush1.msra.mxu0 0.0
        %1295 = vmatprep.subr.mxu0 0.0
        %1296 = vmatpush1.msra.mxu0 0.0
        %1297 = vmatprep.subr.mxu0 0.0
        %1298 = vmatpush1.msra.mxu0 0.0
        %1299 = vmatprep.subr.mxu0 0.0
        %1300 = vmatpush1.msra.mxu0 0.0
        %1301 = vmatprep.subr.mxu0 0.0
        %1302 = vmatpush1.msra.mxu0 0.0
        %1303 = vmatprep.subr.mxu0 0.0
        %1304 = vmatpush1.msra.mxu0 0.0
        %1305 = vmatprep.subr.mxu0 0.0
        %1306 = vmatpush1.msra.mxu0 0.0
        %1307 = vmatprep.subr.mxu0 0.0
        %1308 = vmatpush1.msra.mxu0 0.0
        %1309 = vmatprep.subr.mxu0 0.0
        %1310 = vmatpush1.msra.mxu0 0.0
        %1311 = vmatprep.subr.mxu0 0.0
        %1312 = vmatpush1.msra.mxu0 0.0
        %1313 = vmatprep.subr.mxu0 0.0
        %1314 = vmatpush1.msra.mxu0 0.0
        %1315 = vmatprep.subr.mxu0 0.0
        %1316 = vmatpush1.msra.mxu0 0.0
        %1317 = vmatprep.subr.mxu0 0.0
        %1318 = vmatpush1.msra.mxu0 0.0
        %1319 = vmatprep.subr.mxu0 0.0
        %1320 = vmatpush1.msra.mxu0 0.0
        %1321 = vmatprep.subr.mxu0 0.0
        %1322 = vmatpush1.msra.mxu0 0.0
        %1323 = vmatprep.subr.mxu0 0.0
        %1324 = vmatpush1.msra.mxu0 0.0
        %1325 = vmatprep.subr.mxu0 0.0
        %1326 = vmatpush1.msra.mxu0 0.0
        %1327 = vmatprep.subr.mxu0 0.0
        %1328 = vmatpush1.msra.mxu0 0.0
        %1329 = vmatprep.subr.mxu0 0.0
        %1330 = vmatpush1.msra.mxu0 0.0
        %1331 = vmatprep.subr.mxu0 0.0
        %1332 = vmatpush1.msra.mxu0 0.0
        %1333 = vmatprep.subr.mxu0 0.0
        %1334 = vmatpush1.msra.mxu0 0.0
        %1335 = vmatprep.subr.mxu0 0.0
        %1336 = vmatpush1.msra.mxu0 0.0
        %1337 = vmatprep.subr.mxu0 0.0
        %1338 = vmatpush1.msra.mxu0 0.0
        %1339 = vmatprep.subr.mxu0 0.0
        %1340 = vmatpush1.msra.mxu0 0.0
        %1341 = vmatprep.mubr.f32.mxu0 0.0
        %1342 = vmatmul.mubr.f32.gmra.mrb[0].mxu0 %v1275
        %v1343 = vpop.f32.mrb[0].mxu0
        %v1344 = vadd.f32 0.0, %v1343
        %v1345 = vpop.f32.mrb[0].mxu0
        %1346 = vdwg.mxu0
        %vm1347 = vcmp.gt.f32.partialorder %v1344, 0.0
        %v1348 = vmul.f32 %v1344, 1.442695
        %v1349 = vpow.pop %v1348
        %v1350 = vsub.f32 %v1349, 1.0
        %v1351 = vsel %vm1347, %v1344, %v1350
        %1353 = vrot.lane.b32.xlu0 %v723, 32
        %v1354 = vpop.permute.xlu0 %1353
        %1357 = vrot.lane.b32.xlu0 %v828, 64
        %v1358 = vpop.permute.xlu0 %1357
        %1361 = vrot.lane.b32.xlu0 %v933, 96
        %v1362 = vpop.permute.xlu0 %1361
        %1365 = vrot.lane.b32.xlu0 %v1141, 32
        %v1366 = vpop.permute.xlu0 %1365
        %1369 = vrot.lane.b32.xlu0 %v1246, 64
        %v1370 = vpop.permute.xlu0 %1369
        %1373 = vrot.lane.b32.xlu0 %v1351, 96
        %v1374 = vpop.permute.xlu0 %1373
        %vm1376 = vcmask 261120
        %v1377 = vsel %vm1376, %v617, %v1354
        %vm1378 = vcmask 523264
        %v1379 = vsel %vm1378, %v1377, %v1358
        %vm1380 = vcmask 785408
        %v1381 = vsel %vm1380, %v1379, %v1362
        %v1382 = vsel %vm1376, %v1035, %v1366
        %v1383 = vsel %vm1378, %v1382, %v1370
        %v1384 = vsel %vm1380, %v1383, %v1374
        %v1385 = vld [vmem:[#allocation8 + $0x220] sm:$0xff]
        %v1386 = vld [vmem:[#allocation8 + $0x230] sm:$0xff]
        %v1387 = vld [vmem:[#allocation8 + $0x240] sm:$0xff]
        %v1388 = vld [vmem:[#allocation8 + $0x250] sm:$0xff]
        %v1389 = vld [vmem:[#allocation8 + $0x260] sm:$0xff]
        %v1390 = vld [vmem:[#allocation8 + $0x270] sm:$0xff]
        %v1391 = vld [vmem:[#allocation8 + $0x280] sm:$0xff]
        %v1392 = vld [vmem:[#allocation8 + $0x290] sm:$0xff]
        %v1393 = vld [vmem:[#allocation8 + $0x2a0] sm:$0xff]
        %v1394 = vld [vmem:[#allocation8 + $0x2b0] sm:$0xff]
        %v1395 = vld [vmem:[#allocation8 + $0x2c0] sm:$0xff]
        %v1396 = vld [vmem:[#allocation8 + $0x2d0] sm:$0xff]
        %v1397 = vld [vmem:[#allocation8 + $0x2e0] sm:$0xff]
        %v1398 = vld [vmem:[#allocation8 + $0x2f0] sm:$0xff]
        %v1399 = vld [vmem:[#allocation8 + $0x300] sm:$0xff]
        %v1400 = vld [vmem:[#allocation8 + $0x310] sm:$0xff]
        %v1401 = vld [vmem:[#allocation8 + $0x320] sm:$0xff]
        %v1402 = vld [vmem:[#allocation8 + $0x330] sm:$0xff]
        %v1403 = vld [vmem:[#allocation8 + $0x340] sm:$0xff]
        %v1404 = vld [vmem:[#allocation8 + $0x350] sm:$0xff]
        %v1405 = vld [vmem:[#allocation8 + $0x360] sm:$0xff]
        %v1406 = vld [vmem:[#allocation8 + $0x370] sm:$0xff]
        %v1407 = vld [vmem:[#allocation8 + $0x380] sm:$0xff]
        %v1408 = vld [vmem:[#allocation8 + $0x390] sm:$0xff]
        %v1409 = vld [vmem:[#allocation8 + $0x3a0] sm:$0xff]
        %v1410 = vld [vmem:[#allocation8 + $0x3b0] sm:$0xff]
        %v1411 = vld [vmem:[#allocation8 + $0x3c0] sm:$0xff]
        %v1412 = vld [vmem:[#allocation8 + $0x3d0] sm:$0xff]
        %v1413 = vld [vmem:[#allocation8 + $0x3e0] sm:$0xff]
        %v1414 = vld [vmem:[#allocation8 + $0x3f0] sm:$0xff]
        %v1415 = vld [vmem:[#allocation8 + $0x400] sm:$0xff]
        %v1416 = vld [vmem:[#allocation8 + $0x410] sm:$0xff]
        %1417 = vmatprep.subr.mxu0 0.0
        %1418 = vmatpush1.msra.mxu0 %v1385
        %1419 = vmatprep.subr.mxu0 0.0
        %1420 = vmatpush1.msra.mxu0 %v1386
        %1421 = vmatprep.subr.mxu0 0.0
        %1422 = vmatpush1.msra.mxu0 %v1387
        %1423 = vmatprep.subr.mxu0 0.0
        %1424 = vmatpush1.msra.mxu0 %v1388
        %1425 = vmatprep.subr.mxu0 0.0
        %1426 = vmatpush1.msra.mxu0 %v1389
        %1427 = vmatprep.subr.mxu0 0.0
        %1428 = vmatpush1.msra.mxu0 %v1390
        %1429 = vmatprep.subr.mxu0 0.0
        %1430 = vmatpush1.msra.mxu0 %v1391
        %1431 = vmatprep.subr.mxu0 0.0
        %1432 = vmatpush1.msra.mxu0 %v1392
        %1433 = vmatprep.subr.mxu0 0.0
        %1434 = vmatpush1.msra.mxu0 %v1393
        %1435 = vmatprep.subr.mxu0 0.0
        %1436 = vmatpush1.msra.mxu0 %v1394
        %1437 = vmatprep.subr.mxu0 0.0
        %1438 = vmatpush1.msra.mxu0 %v1395
        %1439 = vmatprep.subr.mxu0 0.0
        %1440 = vmatpush1.msra.mxu0 %v1396
        %1441 = vmatprep.subr.mxu0 0.0
        %1442 = vmatpush1.msra.mxu0 %v1397
        %1443 = vmatprep.subr.mxu0 0.0
        %1444 = vmatpush1.msra.mxu0 %v1398
        %1445 = vmatprep.subr.mxu0 0.0
        %1446 = vmatpush1.msra.mxu0 %v1399
        %1447 = vmatprep.subr.mxu0 0.0
        %1448 = vmatpush1.msra.mxu0 %v1400
        %1449 = vmatprep.subr.mxu0 0.0
        %1450 = vmatpush1.msra.mxu0 %v1401
        %1451 = vmatprep.subr.mxu0 0.0
        %1452 = vmatpush1.msra.mxu0 %v1402
        %1453 = vmatprep.subr.mxu0 0.0
        %1454 = vmatpush1.msra.mxu0 %v1403
        %1455 = vmatprep.subr.mxu0 0.0
        %1456 = vmatpush1.msra.mxu0 %v1404
        %1457 = vmatprep.subr.mxu0 0.0
        %1458 = vmatpush1.msra.mxu0 %v1405
        %1459 = vmatprep.subr.mxu0 0.0
        %1460 = vmatpush1.msra.mxu0 %v1406
        %1461 = vmatprep.subr.mxu0 0.0
        %1462 = vmatpush1.msra.mxu0 %v1407
        %1463 = vmatprep.subr.mxu0 0.0
        %1464 = vmatpush1.msra.mxu0 %v1408
        %1465 = vmatprep.subr.mxu0 0.0
        %1466 = vmatpush1.msra.mxu0 %v1409
        %1467 = vmatprep.subr.mxu0 0.0
        %1468 = vmatpush1.msra.mxu0 %v1410
        %1469 = vmatprep.subr.mxu0 0.0
        %1470 = vmatpush1.msra.mxu0 %v1411
        %1471 = vmatprep.subr.mxu0 0.0
        %1472 = vmatpush1.msra.mxu0 %v1412
        %1473 = vmatprep.subr.mxu0 0.0
        %1474 = vmatpush1.msra.mxu0 %v1413
        %1475 = vmatprep.subr.mxu0 0.0
        %1476 = vmatpush1.msra.mxu0 %v1414
        %1477 = vmatprep.subr.mxu0 0.0
        %1478 = vmatpush1.msra.mxu0 %v1415
        %1479 = vmatprep.subr.mxu0 0.0
        %1480 = vmatpush1.msra.mxu0 %v1416
        %1481 = vmatprep.mubr.f32.mxu0 %v1384
        %1482 = vmatmul.mubr.f32.gmra.mrb[0].mxu0 %v1381
        %v1483 = vpop.f32.mrb[0].mxu0
        %v1484 = vadd.f32 0.0, %v1483
        %v1485 = vpop.f32.mrb[0].mxu0
        %1486 = vdwg.mxu0
        %v1487 = vld [vmem:[#allocation8 + $0x420] sm:$0xff]
        %v1488 = vld [vmem:[#allocation8 + $0x430] sm:$0xff]
        %v1489 = vld [vmem:[#allocation8 + $0x440] sm:$0xff]
        %v1490 = vld [vmem:[#allocation8 + $0x450] sm:$0xff]
        %v1492 = vsel %vm1376, %v1484, 0
        %1494 = vmatprep.subr.mxu0 0.0
        %1495 = vmatpush1.msra.mxu0 %v1487
        %1496 = vmatprep.subr.mxu0 0.0
        %1497 = vmatpush1.msra.mxu0 %v1488
        %1498 = vmatprep.subr.mxu0 0.0
        %1499 = vmatpush1.msra.mxu0 %v1489
        %1500 = vmatprep.subr.mxu0 0.0
        %1501 = vmatpush1.msra.mxu0 %v1490
        %1502 = vmatprep.subr.mxu0 0.0
        %1503 = vmatpush1.msra.mxu0 0.0
        %1504 = vmatprep.subr.mxu0 0.0
        %1505 = vmatpush1.msra.mxu0 0.0
        %1506 = vmatprep.subr.mxu0 0.0
        %1507 = vmatpush1.msra.mxu0 0.0
        %1508 = vmatprep.subr.mxu0 0.0
        %1509 = vmatpush1.msra.mxu0 0.0
        %1510 = vmatprep.subr.mxu0 0.0
        %1511 = vmatpush1.msra.mxu0 0.0
        %1512 = vmatprep.subr.mxu0 0.0
        %1513 = vmatpush1.msra.mxu0 0.0
        %1514 = vmatprep.subr.mxu0 0.0
        %1515 = vmatpush1.msra.mxu0 0.0
        %1516 = vmatprep.subr.mxu0 0.0
        %1517 = vmatpush1.msra.mxu0 0.0
        %1518 = vmatprep.subr.mxu0 0.0
        %1519 = vmatpush1.msra.mxu0 0.0
        %1520 = vmatprep.subr.mxu0 0.0
        %1521 = vmatpush1.msra.mxu0 0.0
        %1522 = vmatprep.subr.mxu0 0.0
        %1523 = vmatpush1.msra.mxu0 0.0
        %1524 = vmatprep.subr.mxu0 0.0
        %1525 = vmatpush1.msra.mxu0 0.0
        %1526 = vmatprep.subr.mxu0 0.0
        %1527 = vmatpush1.msra.mxu0 0.0
        %1528 = vmatprep.subr.mxu0 0.0
        %1529 = vmatpush1.msra.mxu0 0.0
        %1530 = vmatprep.subr.mxu0 0.0
        %1531 = vmatpush1.msra.mxu0 0.0
        %1532 = vmatprep.subr.mxu0 0.0
        %1533 = vmatpush1.msra.mxu0 0.0
        %1534 = vmatprep.subr.mxu0 0.0
        %1535 = vmatpush1.msra.mxu0 0.0
        %1536 = vmatprep.subr.mxu0 0.0
        %1537 = vmatpush1.msra.mxu0 0.0
        %1538 = vmatprep.subr.mxu0 0.0
        %1539 = vmatpush1.msra.mxu0 0.0
        %1540 = vmatprep.subr.mxu0 0.0
        %1541 = vmatpush1.msra.mxu0 0.0
        %1542 = vmatprep.subr.mxu0 0.0
        %1543 = vmatpush1.msra.mxu0 0.0
        %1544 = vmatprep.subr.mxu0 0.0
        %1545 = vmatpush1.msra.mxu0 0.0
        %1546 = vmatprep.subr.mxu0 0.0
        %1547 = vmatpush1.msra.mxu0 0.0
        %1548 = vmatprep.subr.mxu0 0.0
        %1549 = vmatpush1.msra.mxu0 0.0
        %1550 = vmatprep.subr.mxu0 0.0
        %1551 = vmatpush1.msra.mxu0 0.0
        %1552 = vmatprep.subr.mxu0 0.0
        %1553 = vmatpush1.msra.mxu0 0.0
        %1554 = vmatprep.subr.mxu0 0.0
        %1555 = vmatpush1.msra.mxu0 0.0
        %1556 = vmatprep.subr.mxu0 0.0
        %1557 = vmatpush1.msra.mxu0 0.0
        %1558 = vmatprep.mubr.f32.mxu0 0.0
        %1559 = vmatmul.mubr.f32.gmra.mrb[0].mxu0 %v1492
        %v1560 = vpop.f32.mrb[0].mxu0
        %v1561 = vadd.f32 0.0, %v1560
        %v1562 = vpop.f32.mrb[0].mxu0
        %1563 = vdwg.mxu0
        %1564 = vxpose.xlu0.b32.start [1/16] %v1561, 128
        %1565 = vxpose.xlu0.b32.cont [2/16] 0.0, 128
        %1566 = vxpose.xlu0.b32.cont [3/16] 0.0, 128
        %1567 = vxpose.xlu0.b32.cont [4/16] 0.0, 128
        %1568 = vxpose.xlu0.b32.cont [5/16] 0.0, 128
        %1569 = vxpose.xlu0.b32.cont [6/16] 0.0, 128
        %1570 = vxpose.xlu0.b32.cont [7/16] 0.0, 128
        %1571 = vxpose.xlu0.b32.cont [8/16] 0.0, 128
        %1572 = vxpose.xlu0.b32.cont [9/16] 0.0, 128
        %1573 = vxpose.xlu0.b32.cont [10/16] 0.0, 128
        %1574 = vxpose.xlu0.b32.cont [11/16] 0.0, 128
        %1575 = vxpose.xlu0.b32.cont [12/16] 0.0, 128
        %1576 = vxpose.xlu0.b32.cont [13/16] 0.0, 128
        %1577 = vxpose.xlu0.b32.cont [14/16] 0.0, 128
        %1578 = vxpose.xlu0.b32.cont [15/16] 0.0, 128
        %1579 = vxpose.xlu0.b32.end [16/16] 0.0, 128
        %v1580 = vpop.trf.xlu0
        %v1581 = vpop.trf.xlu0
        %v1582 = vpop.trf.xlu0
        %v1583 = vpop.trf.xlu0
        %v1584 = vpop.trf.xlu0
        %v1585 = vpop.trf.xlu0
        %v1586 = vpop.trf.xlu0
        %v1587 = vpop.trf.xlu0
        %v1588 = vpop.trf.xlu0
        %v1589 = vpop.trf.xlu0
        %v1590 = vpop.trf.xlu0
        %v1591 = vpop.trf.xlu0
        %v1592 = vpop.trf.xlu0
        %v1593 = vpop.trf.xlu0
        %v1594 = vpop.trf.xlu0
        %v1595 = vpop.trf.xlu0
        %1597 = vset.pattern.permute.xlu0 0
        %1598 = vperm.xlu0 %1597, %v1561
        %v1599 = vpop.permute.xlu0 %1598
        %v1601 = vlaneseq
        %v1602 = vshrl.u32 %v1601, 7
        %v1603 = vsub.s32 2, %v1602
        %v1604 = vrot.slane %v1580, %v1603
        %v1605 = vadd.f32 %v1599, %v1604
        %vm1606 = vcmp.gt.f32.partialorder %v1605, 0.0
        %v1607 = vmul.f32 %v1605, 0.2
        %v1608 = vsel %vm1606, %v1605, %v1607
        %v1609 = vadd.f32 %v1608, %v300
        %v1610 = vsel %vm528, %v1609, -inf
        %1611 = vmax.xlane.f32.xlu0 %v1610
        %v1612 = vpop.xlane.xlu0 %1611
        %v1613 = vsub.f32 %v1609, %v1612
        %v1614 = vmul.f32 %v1613, 1.442695
        %v1615 = vpow.pop %v1614
        %v1616 = vsel %vm528, %v1615, 0.0
        %1617 = vadd.xlane.f32.xlu0 %v1616
        %v1618 = vpop.xlane.xlu0 %1617
        %v1619 = vrcp.pop %v1618
        %v1620 = vmul.f32 %v1615, %v1619
        %v1622 = vsel %vm528, %v1620, 0
        %1624 = vmatprep.subr.mxu0 0.0
        %1625 = vmatpush1.msra.mxu0 %v1484
        %1626 = vmatprep.subr.mxu0 0.0
        %1627 = vmatpush1.msra.mxu0 0.0
        %1628 = vmatprep.subr.mxu0 0.0
        %1629 = vmatpush1.msra.mxu0 0.0
        %1630 = vmatprep.subr.mxu0 0.0
        %1631 = vmatpush1.msra.mxu0 0.0
        %1632 = vmatprep.subr.mxu0 0.0
        %1633 = vmatpush1.msra.mxu0 0.0
        %1634 = vmatprep.subr.mxu0 0.0
        %1635 = vmatpush1.msra.mxu0 0.0
        %1636 = vmatprep.subr.mxu0 0.0
        %1637 = vmatpush1.msra.mxu0 0.0
        %1638 = vmatprep.subr.mxu0 0.0
        %1639 = vmatpush1.msra.mxu0 0.0
        %1640 = vmatprep.subr.mxu0 0.0
        %1641 = vmatpush1.msra.mxu0 0.0
        %1642 = vmatprep.subr.mxu0 0.0
        %1643 = vmatpush1.msra.mxu0 0.0
        %1644 = vmatprep.subr.mxu0 0.0
        %1645 = vmatpush1.msra.mxu0 0.0
        %1646 = vmatprep.subr.mxu0 0.0
        %1647 = vmatpush1.msra.mxu0 0.0
        %1648 = vmatprep.subr.mxu0 0.0
        %1649 = vmatpush1.msra.mxu0 0.0
        %1650 = vmatprep.subr.mxu0 0.0
        %1651 = vmatpush1.msra.mxu0 0.0
        %1652 = vmatprep.subr.mxu0 0.0
        %1653 = vmatpush1.msra.mxu0 0.0
        %1654 = vmatprep.subr.mxu0 0.0
        %1655 = vmatpush1.msra.mxu0 0.0
        %1656 = vmatprep.subr.mxu0 0.0
        %1657 = vmatpush1.msra.mxu0 0.0
        %1658 = vmatprep.subr.mxu0 0.0
        %1659 = vmatpush1.msra.mxu0 0.0
        %1660 = vmatprep.subr.mxu0 0.0
        %1661 = vmatpush1.msra.mxu0 0.0
        %1662 = vmatprep.subr.mxu0 0.0
        %1663 = vmatpush1.msra.mxu0 0.0
        %1664 = vmatprep.subr.mxu0 0.0
        %1665 = vmatpush1.msra.mxu0 0.0
        %1666 = vmatprep.subr.mxu0 0.0
        %1667 = vmatpush1.msra.mxu0 0.0
        %1668 = vmatprep.subr.mxu0 0.0
        %1669 = vmatpush1.msra.mxu0 0.0
        %1670 = vmatprep.subr.mxu0 0.0
        %1671 = vmatpush1.msra.mxu0 0.0
        %1672 = vmatprep.subr.mxu0 0.0
        %1673 = vmatpush1.msra.mxu0 0.0
        %1674 = vmatprep.subr.mxu0 0.0
        %1675 = vmatpush1.msra.mxu0 0.0
        %1676 = vmatprep.subr.mxu0 0.0
        %1677 = vmatpush1.msra.mxu0 0.0
        %1678 = vmatprep.subr.mxu0 0.0
        %1679 = vmatpush1.msra.mxu0 0.0
        %1680 = vmatprep.subr.mxu0 0.0
        %1681 = vmatpush1.msra.mxu0 0.0
        %1682 = vmatprep.subr.mxu0 0.0
        %1683 = vmatpush1.msra.mxu0 0.0
        %1684 = vmatprep.subr.mxu0 0.0
        %1685 = vmatpush1.msra.mxu0 0.0
        %1686 = vmatprep.subr.mxu0 0.0
        %1687 = vmatpush1.msra.mxu0 0.0
        %1688 = vmatprep.mubr.f32.mxu0 0.0
        %1689 = vmatmul.mubr.f32.gmra.mrb[0].mxu0 %v1622
        %v1690 = vpop.f32.mrb[0].mxu0
        %v1691 = vadd.f32 0.0, %v1690
        %v1692 = vpop.f32.mrb[0].mxu0
        %1693 = vdwg.mxu0
        %vm1694 = vcmp.gt.f32.partialorder %v1691, 0.0
        %v1695 = vmul.f32 %v1691, 1.442695
        %v1696 = vpow.pop %v1695
        %v1697 = vsub.f32 %v1696, 1.0
        %v1698 = vsel %vm1694, %v1691, %v1697
        %1699 = vset.pattern.permute.xlu0 1
        %1700 = vperm.xlu0 %1699, %v1561
        %v1701 = vpop.permute.xlu0 %1700
        %v1703 = vlaneseq
        %v1704 = vshrl.u32 %v1703, 7
        %v1705 = vsub.s32 3, %v1704
        %v1706 = vrot.slane %v1580, %v1705
        %v1707 = vadd.f32 %v1701, %v1706
        %vm1708 = vcmp.gt.f32.partialorder %v1707, 0.0
        %v1709 = vmul.f32 %v1707, 0.2
        %v1710 = vsel %vm1708, %v1707, %v1709
        %v1711 = vadd.f32 %v1710, %v300
        %v1712 = vsel %vm528, %v1711, -inf
        %1713 = vmax.xlane.f32.xlu0 %v1712
        %v1714 = vpop.xlane.xlu0 %1713
        %v1715 = vsub.f32 %v1711, %v1714
        %v1716 = vmul.f32 %v1715, 1.442695
        %v1717 = vpow.pop %v1716
        %v1718 = vsel %vm528, %v1717, 0.0
        %1719 = vadd.xlane.f32.xlu0 %v1718
        %v1720 = vpop.xlane.xlu0 %1719
        %v1721 = vrcp.pop %v1720
        %v1722 = vmul.f32 %v1717, %v1721
        %1723 = vrot.lane.b32.xlu0 %v1484, 112
        %v1724 = vpop.permute.xlu0 %1723
        %v1727 = vsel %vm528, %v1722, 0
        %1729 = vmatprep.subr.mxu0 0.0
        %1730 = vmatpush1.msra.mxu0 %v1724
        %1731 = vmatprep.subr.mxu0 0.0
        %1732 = vmatpush1.msra.mxu0 0.0
        %1733 = vmatprep.subr.mxu0 0.0
        %1734 = vmatpush1.msra.mxu0 0.0
        %1735 = vmatprep.subr.mxu0 0.0
        %1736 = vmatpush1.msra.mxu0 0.0
        %1737 = vmatprep.subr.mxu0 0.0
        %1738 = vmatpush1.msra.mxu0 0.0
        %1739 = vmatprep.subr.mxu0 0.0
        %1740 = vmatpush1.msra.mxu0 0.0
        %1741 = vmatprep.subr.mxu0 0.0
        %1742 = vmatpush1.msra.mxu0 0.0
        %1743 = vmatprep.subr.mxu0 0.0
        %1744 = vmatpush1.msra.mxu0 0.0
        %1745 = vmatprep.subr.mxu0 0.0
        %1746 = vmatpush1.msra.mxu0 0.0
        %1747 = vmatprep.subr.mxu0 0.0
        %1748 = vmatpush1.msra.mxu0 0.0
        %1749 = vmatprep.subr.mxu0 0.0
        %1750 = vmatpush1.msra.mxu0 0.0
        %1751 = vmatprep.subr.mxu0 0.0
        %1752 = vmatpush1.msra.mxu0 0.0
        %1753 = vmatprep.subr.mxu0 0.0
        %1754 = vmatpush1.msra.mxu0 0.0
        %1755 = vmatprep.subr.mxu0 0.0
        %1756 = vmatpush1.msra.mxu0 0.0
        %1757 = vmatprep.subr.mxu0 0.0
        %1758 = vmatpush1.msra.mxu0 0.0
        %1759 = vmatprep.subr.mxu0 0.0
        %1760 = vmatpush1.msra.mxu0 0.0
        %1761 = vmatprep.subr.mxu0 0.0
        %1762 = vmatpush1.msra.mxu0 0.0
        %1763 = vmatprep.subr.mxu0 0.0
        %1764 = vmatpush1.msra.mxu0 0.0
        %1765 = vmatprep.subr.mxu0 0.0
        %1766 = vmatpush1.msra.mxu0 0.0
        %1767 = vmatprep.subr.mxu0 0.0
        %1768 = vmatpush1.msra.mxu0 0.0
        %1769 = vmatprep.subr.mxu0 0.0
        %1770 = vmatpush1.msra.mxu0 0.0
        %1771 = vmatprep.subr.mxu0 0.0
        %1772 = vmatpush1.msra.mxu0 0.0
        %1773 = vmatprep.subr.mxu0 0.0
        %1774 = vmatpush1.msra.mxu0 0.0
        %1775 = vmatprep.subr.mxu0 0.0
        %1776 = vmatpush1.msra.mxu0 0.0
        %1777 = vmatprep.subr.mxu0 0.0
        %1778 = vmatpush1.msra.mxu0 0.0
        %1779 = vmatprep.subr.mxu0 0.0
        %1780 = vmatpush1.msra.mxu0 0.0
        %1781 = vmatprep.subr.mxu0 0.0
        %1782 = vmatpush1.msra.mxu0 0.0
        %1783 = vmatprep.subr.mxu0 0.0
        %1784 = vmatpush1.msra.mxu0 0.0
        %1785 = vmatprep.subr.mxu0 0.0
        %1786 = vmatpush1.msra.mxu0 0.0
        %1787 = vmatprep.subr.mxu0 0.0
        %1788 = vmatpush1.msra.mxu0 0.0
        %1789 = vmatprep.subr.mxu0 0.0
        %1790 = vmatpush1.msra.mxu0 0.0
        %1791 = vmatprep.subr.mxu0 0.0
        %1792 = vmatpush1.msra.mxu0 0.0
        %1793 = vmatprep.mubr.f32.mxu0 0.0
        %1794 = vmatmul.mubr.f32.gmra.mrb[0].mxu0 %v1727
        %v1795 = vpop.f32.mrb[0].mxu0
        %v1796 = vadd.f32 0.0, %v1795
        %v1797 = vpop.f32.mrb[0].mxu0
        %1798 = vdwg.mxu0
        %vm1799 = vcmp.gt.f32.partialorder %v1796, 0.0
        %v1800 = vmul.f32 %v1796, 1.442695
        %v1801 = vpow.pop %v1800
        %v1802 = vsub.f32 %v1801, 1.0
        %v1803 = vsel %vm1799, %v1796, %v1802
        %v1804 = vld [vmem:[#allocation8 + $0x460] sm:$0xff]
        %v1805 = vld [vmem:[#allocation8 + $0x470] ss:$0 sm:$0xff]
        %v1807 = vsel %vm528, %v297, 0
        %1809 = vmatprep.subr.mxu0 0.0
        %1810 = vmatpush1.msra.mxu0 %v1804
        %1811 = vmatprep.subr.mxu0 0.0
        %1812 = vmatpush1.msra.mxu0 0.0
        %1813 = vmatprep.subr.mxu0 0.0
        %1814 = vmatpush1.msra.mxu0 0.0
        %1815 = vmatprep.subr.mxu0 0.0
        %1816 = vmatpush1.msra.mxu0 0.0
        %1817 = vmatprep.subr.mxu0 0.0
        %1818 = vmatpush1.msra.mxu0 0.0
        %1819 = vmatprep.subr.mxu0 0.0
        %1820 = vmatpush1.msra.mxu0 0.0
        %1821 = vmatprep.subr.mxu0 0.0
        %1822 = vmatpush1.msra.mxu0 0.0
        %1823 = vmatprep.subr.mxu0 0.0
        %1824 = vmatpush1.msra.mxu0 0.0
        %1825 = vmatprep.subr.mxu0 0.0
        %1826 = vmatpush1.msra.mxu0 0.0
        %1827 = vmatprep.subr.mxu0 0.0
        %1828 = vmatpush1.msra.mxu0 0.0
        %1829 = vmatprep.subr.mxu0 0.0
        %1830 = vmatpush1.msra.mxu0 0.0
        %1831 = vmatprep.subr.mxu0 0.0
        %1832 = vmatpush1.msra.mxu0 0.0
        %1833 = vmatprep.subr.mxu0 0.0
        %1834 = vmatpush1.msra.mxu0 0.0
        %1835 = vmatprep.subr.mxu0 0.0
        %1836 = vmatpush1.msra.mxu0 0.0
        %1837 = vmatprep.subr.mxu0 0.0
        %1838 = vmatpush1.msra.mxu0 0.0
        %1839 = vmatprep.subr.mxu0 0.0
        %1840 = vmatpush1.msra.mxu0 0.0
        %1841 = vmatprep.subr.mxu0 0.0
        %1842 = vmatpush1.msra.mxu0 0.0
        %1843 = vmatprep.subr.mxu0 0.0
        %1844 = vmatpush1.msra.mxu0 0.0
        %1845 = vmatprep.subr.mxu0 0.0
        %1846 = vmatpush1.msra.mxu0 0.0
        %1847 = vmatprep.subr.mxu0 0.0
        %1848 = vmatpush1.msra.mxu0 0.0
        %1849 = vmatprep.subr.mxu0 0.0
        %1850 = vmatpush1.msra.mxu0 0.0
        %1851 = vmatprep.subr.mxu0 0.0
        %1852 = vmatpush1.msra.mxu0 0.0
        %1853 = vmatprep.subr.mxu0 0.0
        %1854 = vmatpush1.msra.mxu0 0.0
        %1855 = vmatprep.subr.mxu0 0.0
        %1856 = vmatpush1.msra.mxu0 0.0
        %1857 = vmatprep.subr.mxu0 0.0
        %1858 = vmatpush1.msra.mxu0 0.0
        %1859 = vmatprep.subr.mxu0 0.0
        %1860 = vmatpush1.msra.mxu0 0.0
        %1861 = vmatprep.subr.mxu0 0.0
        %1862 = vmatpush1.msra.mxu0 0.0
        %1863 = vmatprep.subr.mxu0 0.0
        %1864 = vmatpush1.msra.mxu0 0.0
        %1865 = vmatprep.subr.mxu0 0.0
        %1866 = vmatpush1.msra.mxu0 0.0
        %1867 = vmatprep.subr.mxu0 0.0
        %1868 = vmatpush1.msra.mxu0 0.0
        %1869 = vmatprep.subr.mxu0 0.0
        %1870 = vmatpush1.msra.mxu0 0.0
        %1871 = vmatprep.subr.mxu0 0.0
        %1872 = vmatpush1.msra.mxu0 0.0
        %1873 = vmatprep.mubr.f32.mxu0 0.0
        %1874 = vmatmul.mubr.f32.gmra.mrb[0].mxu0 %v1807
        %v1875 = vpop.f32.mrb[0].mxu0
        %v1876 = vadd.f32 %v1805, %v1875
        %v1877 = vpop.f32.mrb[0].mxu0
        %1878 = vdwg.mxu0
        %v1879 = vmax.f32 %v1876, 0.0
        %v1880 = vld [vmem:[#allocation8 + $0x4a0] sm:$0xff]
        %v1881 = vld [vmem:[#allocation8 + $0x4b0] sm:$0xff]
        %v1882 = vld [vmem:[#allocation8 + $0x4c0] sm:$0xff]
        %v1883 = vld [vmem:[#allocation8 + $0x4d0] sm:$0xff]
        %v1884 = vld [vmem:[#allocation8 + $0x4e0] ss:$0 sm:$0xff]
        %v1886 = vsel %vm1376, %v1879, 0
        %1888 = vmatprep.subr.mxu0 0.0
        %1889 = vmatpush1.msra.mxu0 %v1880
        %1890 = vmatprep.subr.mxu0 0.0
        %1891 = vmatpush1.msra.mxu0 %v1881
        %1892 = vmatprep.subr.mxu0 0.0
        %1893 = vmatpush1.msra.mxu0 %v1882
        %1894 = vmatprep.subr.mxu0 0.0
        %1895 = vmatpush1.msra.mxu0 %v1883
        %1896 = vmatprep.subr.mxu0 0.0
        %1897 = vmatpush1.msra.mxu0 0.0
        %1898 = vmatprep.subr.mxu0 0.0
        %1899 = vmatpush1.msra.mxu0 0.0
        %1900 = vmatprep.subr.mxu0 0.0
        %1901 = vmatpush1.msra.mxu0 0.0
        %1902 = vmatprep.subr.mxu0 0.0
        %1903 = vmatpush1.msra.mxu0 0.0
        %1904 = vmatprep.subr.mxu0 0.0
        %1905 = vmatpush1.msra.mxu0 0.0
        %1906 = vmatprep.subr.mxu0 0.0
        %1907 = vmatpush1.msra.mxu0 0.0
        %1908 = vmatprep.subr.mxu0 0.0
        %1909 = vmatpush1.msra.mxu0 0.0
        %1910 = vmatprep.subr.mxu0 0.0
        %1911 = vmatpush1.msra.mxu0 0.0
        %1912 = vmatprep.subr.mxu0 0.0
        %1913 = vmatpush1.msra.mxu0 0.0
        %1914 = vmatprep.subr.mxu0 0.0
        %1915 = vmatpush1.msra.mxu0 0.0
        %1916 = vmatprep.subr.mxu0 0.0
        %1917 = vmatpush1.msra.mxu0 0.0
        %1918 = vmatprep.subr.mxu0 0.0
        %1919 = vmatpush1.msra.mxu0 0.0
        %1920 = vmatprep.subr.mxu0 0.0
        %1921 = vmatpush1.msra.mxu0 0.0
        %1922 = vmatprep.subr.mxu0 0.0
        %1923 = vmatpush1.msra.mxu0 0.0
        %1924 = vmatprep.subr.mxu0 0.0
        %1925 = vmatpush1.msra.mxu0 0.0
        %1926 = vmatprep.subr.mxu0 0.0
        %1927 = vmatpush1.msra.mxu0 0.0
        %1928 = vmatprep.subr.mxu0 0.0
        %1929 = vmatpush1.msra.mxu0 0.0
        %1930 = vmatprep.subr.mxu0 0.0
        %1931 = vmatpush1.msra.mxu0 0.0
        %1932 = vmatprep.subr.mxu0 0.0
        %1933 = vmatpush1.msra.mxu0 0.0
        %1934 = vmatprep.subr.mxu0 0.0
        %1935 = vmatpush1.msra.mxu0 0.0
        %1936 = vmatprep.subr.mxu0 0.0
        %1937 = vmatpush1.msra.mxu0 0.0
        %1938 = vmatprep.subr.mxu0 0.0
        %1939 = vmatpush1.msra.mxu0 0.0
        %1940 = vmatprep.subr.mxu0 0.0
        %1941 = vmatpush1.msra.mxu0 0.0
        %1942 = vmatprep.subr.mxu0 0.0
        %1943 = vmatpush1.msra.mxu0 0.0
        %1944 = vmatprep.subr.mxu0 0.0
        %1945 = vmatpush1.msra.mxu0 0.0
        %1946 = vmatprep.subr.mxu0 0.0
        %1947 = vmatpush1.msra.mxu0 0.0
        %1948 = vmatprep.subr.mxu0 0.0
        %1949 = vmatpush1.msra.mxu0 0.0
        %1950 = vmatprep.subr.mxu0 0.0
        %1951 = vmatpush1.msra.mxu0 0.0
        %1952 = vmatprep.mubr.f32.mxu0 0.0
        %1953 = vmatmul.mubr.f32.gmra.mrb[0].mxu0 %v1886
        %v1954 = vpop.f32.mrb[0].mxu0
        %v1955 = vadd.f32 %v1884, %v1954
        %v1956 = vpop.f32.mrb[0].mxu0
        %1957 = vdwg.mxu0
        %v1958 = vld [vmem:[#allocation8 + $0x480] sm:$0xff]
        %v1959 = vld [vmem:[#allocation8 + $0x490] sm:$0xff]
        %v1960 = vlaneseq
        %v1961 = vshrl.u32 %v1960, 7
        %v1962 = vsub.s32 0, %v1961
        %v1963 = vrot.slane %v1955, %v1962
        %v1965 = vsel %vm305, %v1698, 0
        %1967 = vmatprep.subr.mxu0 0.0
        %1968 = vmatpush1.msra.mxu0 %v1958
        %1969 = vmatprep.subr.mxu0 0.0
        %1970 = vmatpush1.msra.mxu0 %v1959
        %1971 = vmatprep.subr.mxu0 0.0
        %1972 = vmatpush1.msra.mxu0 0.0
        %1973 = vmatprep.subr.mxu0 0.0
        %1974 = vmatpush1.msra.mxu0 0.0
        %1975 = vmatprep.subr.mxu0 0.0
        %1976 = vmatpush1.msra.mxu0 0.0
        %1977 = vmatprep.subr.mxu0 0.0
        %1978 = vmatpush1.msra.mxu0 0.0
        %1979 = vmatprep.subr.mxu0 0.0
        %1980 = vmatpush1.msra.mxu0 0.0
        %1981 = vmatprep.subr.mxu0 0.0
        %1982 = vmatpush1.msra.mxu0 0.0
        %1983 = vmatprep.subr.mxu0 0.0
        %1984 = vmatpush1.msra.mxu0 0.0
        %1985 = vmatprep.subr.mxu0 0.0
        %1986 = vmatpush1.msra.mxu0 0.0
        %1987 = vmatprep.subr.mxu0 0.0
        %1988 = vmatpush1.msra.mxu0 0.0
        %1989 = vmatprep.subr.mxu0 0.0
        %1990 = vmatpush1.msra.mxu0 0.0
        %1991 = vmatprep.subr.mxu0 0.0
        %1992 = vmatpush1.msra.mxu0 0.0
        %1993 = vmatprep.subr.mxu0 0.0
        %1994 = vmatpush1.msra.mxu0 0.0
        %1995 = vmatprep.subr.mxu0 0.0
        %1996 = vmatpush1.msra.mxu0 0.0
        %1997 = vmatprep.subr.mxu0 0.0
        %1998 = vmatpush1.msra.mxu0 0.0
        %1999 = vmatprep.subr.mxu0 0.0
        %2000 = vmatpush1.msra.mxu0 0.0
        %2001 = vmatprep.subr.mxu0 0.0
        %2002 = vmatpush1.msra.mxu0 0.0
        %2003 = vmatprep.subr.mxu0 0.0
        %2004 = vmatpush1.msra.mxu0 0.0
        %2005 = vmatprep.subr.mxu0 0.0
        %2006 = vmatpush1.msra.mxu0 0.0
        %2007 = vmatprep.subr.mxu0 0.0
        %2008 = vmatpush1.msra.mxu0 0.0
        %2009 = vmatprep.subr.mxu0 0.0
        %2010 = vmatpush1.msra.mxu0 0.0
        %2011 = vmatprep.subr.mxu0 0.0
        %2012 = vmatpush1.msra.mxu0 0.0
        %2013 = vmatprep.subr.mxu0 0.0
        %2014 = vmatpush1.msra.mxu0 0.0
        %2015 = vmatprep.subr.mxu0 0.0
        %2016 = vmatpush1.msra.mxu0 0.0
        %2017 = vmatprep.subr.mxu0 0.0
        %2018 = vmatpush1.msra.mxu0 0.0
        %2019 = vmatprep.subr.mxu0 0.0
        %2020 = vmatpush1.msra.mxu0 0.0
        %2021 = vmatprep.subr.mxu0 0.0
        %2022 = vmatpush1.msra.mxu0 0.0
        %2023 = vmatprep.subr.mxu0 0.0
        %2024 = vmatpush1.msra.mxu0 0.0
        %2025 = vmatprep.subr.mxu0 0.0
        %2026 = vmatpush1.msra.mxu0 0.0
        %2027 = vmatprep.subr.mxu0 0.0
        %2028 = vmatpush1.msra.mxu0 0.0
        %2029 = vmatprep.subr.mxu0 0.0
        %2030 = vmatpush1.msra.mxu0 0.0
        %2031 = vmatprep.mubr.f32.mxu0 0.0
        %2032 = vmatmul.mubr.f32.gmra.mrb[0].mxu0 %v1965
        %v2033 = vpop.f32.mrb[0].mxu0
        %v2034 = vadd.f32 %v1963, %v2033
        %v2035 = vpop.f32.mrb[0].mxu0
        %2036 = vdwg.mxu0
        %v2037 = vmax.f32 %v2034, 0.0
        %v2038 = vld [vmem:[#allocation8 + $0x4f0] sm:$0xff]
        %v2039 = vld [vmem:[#allocation8 + $0x500] sm:$0xff]
        %v2040 = vld [vmem:[#allocation8 + $0x510] sm:$0xff]
        %v2041 = vld [vmem:[#allocation8 + $0x520] sm:$0xff]
        %v2042 = vld [vmem:[#allocation8 + $0x530] ss:$0 sm:$0xff]
        %v2044 = vsel %vm1376, %v2037, 0
        %2046 = vmatprep.subr.mxu0 0.0
        %2047 = vmatpush1.msra.mxu0 %v2038
        %2048 = vmatprep.subr.mxu0 0.0
        %2049 = vmatpush1.msra.mxu0 %v2039
        %2050 = vmatprep.subr.mxu0 0.0
        %2051 = vmatpush1.msra.mxu0 %v2040
        %2052 = vmatprep.subr.mxu0 0.0
        %2053 = vmatpush1.msra.mxu0 %v2041
        %2054 = vmatprep.subr.mxu0 0.0
        %2055 = vmatpush1.msra.mxu0 0.0
        %2056 = vmatprep.subr.mxu0 0.0
        %2057 = vmatpush1.msra.mxu0 0.0
        %2058 = vmatprep.subr.mxu0 0.0
        %2059 = vmatpush1.msra.mxu0 0.0
        %2060 = vmatprep.subr.mxu0 0.0
        %2061 = vmatpush1.msra.mxu0 0.0
        %2062 = vmatprep.subr.mxu0 0.0
        %2063 = vmatpush1.msra.mxu0 0.0
        %2064 = vmatprep.subr.mxu0 0.0
        %2065 = vmatpush1.msra.mxu0 0.0
        %2066 = vmatprep.subr.mxu0 0.0
        %2067 = vmatpush1.msra.mxu0 0.0
        %2068 = vmatprep.subr.mxu0 0.0
        %2069 = vmatpush1.msra.mxu0 0.0
        %2070 = vmatprep.subr.mxu0 0.0
        %2071 = vmatpush1.msra.mxu0 0.0
        %2072 = vmatprep.subr.mxu0 0.0
        %2073 = vmatpush1.msra.mxu0 0.0
        %2074 = vmatprep.subr.mxu0 0.0
        %2075 = vmatpush1.msra.mxu0 0.0
        %2076 = vmatprep.subr.mxu0 0.0
        %2077 = vmatpush1.msra.mxu0 0.0
        %2078 = vmatprep.subr.mxu0 0.0
        %2079 = vmatpush1.msra.mxu0 0.0
        %2080 = vmatprep.subr.mxu0 0.0
        %2081 = vmatpush1.msra.mxu0 0.0
        %2082 = vmatprep.subr.mxu0 0.0
        %2083 = vmatpush1.msra.mxu0 0.0
        %2084 = vmatprep.subr.mxu0 0.0
        %2085 = vmatpush1.msra.mxu0 0.0
        %2086 = vmatprep.subr.mxu0 0.0
        %2087 = vmatpush1.msra.mxu0 0.0
        %2088 = vmatprep.subr.mxu0 0.0
        %2089 = vmatpush1.msra.mxu0 0.0
        %2090 = vmatprep.subr.mxu0 0.0
        %2091 = vmatpush1.msra.mxu0 0.0
        %2092 = vmatprep.subr.mxu0 0.0
        %2093 = vmatpush1.msra.mxu0 0.0
        %2094 = vmatprep.subr.mxu0 0.0
        %2095 = vmatpush1.msra.mxu0 0.0
        %2096 = vmatprep.subr.mxu0 0.0
        %2097 = vmatpush1.msra.mxu0 0.0
        %2098 = vmatprep.subr.mxu0 0.0
        %2099 = vmatpush1.msra.mxu0 0.0
        %2100 = vmatprep.subr.mxu0 0.0
        %2101 = vmatpush1.msra.mxu0 0.0
        %2102 = vmatprep.subr.mxu0 0.0
        %2103 = vmatpush1.msra.mxu0 0.0
        %2104 = vmatprep.subr.mxu0 0.0
        %2105 = vmatpush1.msra.mxu0 0.0
        %2106 = vmatprep.subr.mxu0 0.0
        %2107 = vmatpush1.msra.mxu0 0.0
        %2108 = vmatprep.subr.mxu0 0.0
        %2109 = vmatpush1.msra.mxu0 0.0
        %2110 = vmatprep.mubr.f32.mxu0 0.0
        %2111 = vmatmul.mubr.f32.gmra.mrb[0].mxu0 %v2044
        %v2112 = vpop.f32.mrb[0].mxu0
        %v2113 = vadd.f32 %v2042, %v2112
        %v2114 = vpop.f32.mrb[0].mxu0
        %2115 = vdwg.mxu0
        %2116 = vmax.xlane.f32.xlu0 %v2113
        %v2117 = vpop.xlane.xlu0 %2116
        %v2118 = vsub.f32 %v2113, %v2117
        %v2119 = vmul.f32 %v2118, 1.442695
        %v2120 = vpow.pop %v2119
        %2121 = vadd.xlane.f32.xlu0 %v2120
        %v2122 = vpop.xlane.xlu0 %2121
        %v2123 = vrcp.pop %v2122
        %v2124 = vmul.f32 %v2120, %v2123
        %v2125 = vsel %vm305, %v1803, 0.0
        %v2126 = vrot.slane %v2125, 4
        %v2127 = vadd.f32 %v2125, %v2126
        %v2128 = vrot.slane %v2127, 2
        %v2129 = vadd.f32 %v2127, %v2128
        %v2130 = vrot.slane %v2129, 1
        %v2131 = vadd.f32 %v2129, %v2130
        %v2132 = vrcp.pop 8.0
        %v2133 = vmul.f32 %v2131, %v2132
        %v2134 = vld [vmem:[#allocation8 + $0x540] sm:$0xff]
        %v2135 = vld [vmem:[#allocation8 + $0x550] sm:$0xff]
        %v2136 = vld [vmem:[#allocation8 + $0x560] sm:$0xff]
        %v2137 = vld [vmem:[#allocation8 + $0x570] sm:$0xff]
        %v2138 = vld [vmem:[#allocation8 + $0x580] sm:$0xff]
        %v2139 = vld [vmem:[#allocation8 + $0x590] sm:$0xff]
        %2140 = vrot.lane.b32.xlu0 %v1879, 96
        %v2141 = vpop.permute.xlu0 %2140
        %v2142 = vsel %vm1376, %v2141, 0
        %2144 = vmatprep.subr.mxu0 0.0
        %2145 = vmatpush1.msra.mxu0 %v2136
        %2146 = vmatprep.subr.mxu0 0.0
        %2147 = vmatpush1.msra.mxu0 %v2137
        %2148 = vmatprep.subr.mxu0 0.0
        %2149 = vmatpush1.msra.mxu0 %v2138
        %2150 = vmatprep.subr.mxu0 0.0
        %2151 = vmatpush1.msra.mxu0 %v2139
        %2152 = vmatprep.subr.mxu0 0.0
        %2153 = vmatpush1.msra.mxu0 0.0
        %2154 = vmatprep.subr.mxu0 0.0
        %2155 = vmatpush1.msra.mxu0 0.0
        %2156 = vmatprep.subr.mxu0 0.0
        %2157 = vmatpush1.msra.mxu0 0.0
        %2158 = vmatprep.subr.mxu0 0.0
        %2159 = vmatpush1.msra.mxu0 0.0
        %2160 = vmatprep.subr.mxu0 0.0
        %2161 = vmatpush1.msra.mxu0 0.0
        %2162 = vmatprep.subr.mxu0 0.0
        %2163 = vmatpush1.msra.mxu0 0.0
        %2164 = vmatprep.subr.mxu0 0.0
        %2165 = vmatpush1.msra.mxu0 0.0
        %2166 = vmatprep.subr.mxu0 0.0
        %2167 = vmatpush1.msra.mxu0 0.0
        %2168 = vmatprep.subr.mxu0 0.0
        %2169 = vmatpush1.msra.mxu0 0.0
        %2170 = vmatprep.subr.mxu0 0.0
        %2171 = vmatpush1.msra.mxu0 0.0
        %2172 = vmatprep.subr.mxu0 0.0
        %2173 = vmatpush1.msra.mxu0 0.0
        %2174 = vmatprep.subr.mxu0 0.0
        %2175 = vmatpush1.msra.mxu0 0.0
        %2176 = vmatprep.subr.mxu0 0.0
        %2177 = vmatpush1.msra.mxu0 0.0
        %2178 = vmatprep.subr.mxu0 0.0
        %2179 = vmatpush1.msra.mxu0 0.0
        %2180 = vmatprep.subr.mxu0 0.0
        %2181 = vmatpush1.msra.mxu0 0.0
        %2182 = vmatprep.subr.mxu0 0.0
        %2183 = vmatpush1.msra.mxu0 0.0
        %2184 = vmatprep.subr.mxu0 0.0
        %2185 = vmatpush1.msra.mxu0 0.0
        %2186 = vmatprep.subr.mxu0 0.0
        %2187 = vmatpush1.msra.mxu0 0.0
        %2188 = vmatprep.subr.mxu0 0.0
        %2189 = vmatpush1.msra.mxu0 0.0
        %2190 = vmatprep.subr.mxu0 0.0
        %2191 = vmatpush1.msra.mxu0 0.0
        %2192 = vmatprep.subr.mxu0 0.0
        %2193 = vmatpush1.msra.mxu0 0.0
        %2194 = vmatprep.subr.mxu0 0.0
        %2195 = vmatpush1.msra.mxu0 0.0
        %2196 = vmatprep.subr.mxu0 0.0
        %2197 = vmatpush1.msra.mxu0 0.0
        %2198 = vmatprep.subr.mxu0 0.0
        %2199 = vmatpush1.msra.mxu0 0.0
        %2200 = vmatprep.subr.mxu0 0.0
        %2201 = vmatpush1.msra.mxu0 0.0
        %2202 = vmatprep.subr.mxu0 0.0
        %2203 = vmatpush1.msra.mxu0 0.0
        %2204 = vmatprep.subr.mxu0 0.0
        %2205 = vmatpush1.msra.mxu0 0.0
        %2206 = vmatprep.subr.mxu0 0.0
        %2207 = vmatpush1.msra.mxu0 0.0
        %2208 = vmatprep.mubr.f32.mxu0 0.0
        %2209 = vmatmul.mubr.f32.gmra.mrb[0].mxu0 %v2142
        %v2210 = vpop.f32.mrb[0].mxu0
        %v2211 = vadd.f32 0.0, %v2210
        %v2212 = vpop.f32.mrb[0].mxu0
        %2213 = vdwg.mxu0
        %v2215 = vsel %vm305, %v2133, 0
        %2217 = vmatprep.subr.mxu0 0.0
        %2218 = vmatpush1.msra.mxu0 %v2134
        %2219 = vmatprep.subr.mxu0 0.0
        %2220 = vmatpush1.msra.mxu0 %v2135
        %2221 = vmatprep.subr.mxu0 0.0
        %2222 = vmatpush1.msra.mxu0 0.0
        %2223 = vmatprep.subr.mxu0 0.0
        %2224 = vmatpush1.msra.mxu0 0.0
        %2225 = vmatprep.subr.mxu0 0.0
        %2226 = vmatpush1.msra.mxu0 0.0
        %2227 = vmatprep.subr.mxu0 0.0
        %2228 = vmatpush1.msra.mxu0 0.0
        %2229 = vmatprep.subr.mxu0 0.0
        %2230 = vmatpush1.msra.mxu0 0.0
        %2231 = vmatprep.subr.mxu0 0.0
        %2232 = vmatpush1.msra.mxu0 0.0
        %2233 = vmatprep.subr.mxu0 0.0
        %2234 = vmatpush1.msra.mxu0 0.0
        %2235 = vmatprep.subr.mxu0 0.0
        %2236 = vmatpush1.msra.mxu0 0.0
        %2237 = vmatprep.subr.mxu0 0.0
        %2238 = vmatpush1.msra.mxu0 0.0
        %2239 = vmatprep.subr.mxu0 0.0
        %2240 = vmatpush1.msra.mxu0 0.0
        %2241 = vmatprep.subr.mxu0 0.0
        %2242 = vmatpush1.msra.mxu0 0.0
        %2243 = vmatprep.subr.mxu0 0.0
        %2244 = vmatpush1.msra.mxu0 0.0
        %2245 = vmatprep.subr.mxu0 0.0
        %2246 = vmatpush1.msra.mxu0 0.0
        %2247 = vmatprep.subr.mxu0 0.0
        %2248 = vmatpush1.msra.mxu0 0.0
        %2249 = vmatprep.subr.mxu0 0.0
        %2250 = vmatpush1.msra.mxu0 0.0
        %2251 = vmatprep.subr.mxu0 0.0
        %2252 = vmatpush1.msra.mxu0 0.0
        %2253 = vmatprep.subr.mxu0 0.0
        %2254 = vmatpush1.msra.mxu0 0.0
        %2255 = vmatprep.subr.mxu0 0.0
        %2256 = vmatpush1.msra.mxu0 0.0
        %2257 = vmatprep.subr.mxu0 0.0
        %2258 = vmatpush1.msra.mxu0 0.0
        %2259 = vmatprep.subr.mxu0 0.0
        %2260 = vmatpush1.msra.mxu0 0.0
        %2261 = vmatprep.subr.mxu0 0.0
        %2262 = vmatpush1.msra.mxu0 0.0
        %2263 = vmatprep.subr.mxu0 0.0
        %2264 = vmatpush1.msra.mxu0 0.0
        %2265 = vmatprep.subr.mxu0 0.0
        %2266 = vmatpush1.msra.mxu0 0.0
        %2267 = vmatprep.subr.mxu0 0.0
        %2268 = vmatpush1.msra.mxu0 0.0
        %2269 = vmatprep.subr.mxu0 0.0
        %2270 = vmatpush1.msra.mxu0 0.0
        %2271 = vmatprep.subr.mxu0 0.0
        %2272 = vmatpush1.msra.mxu0 0.0
        %2273 = vmatprep.subr.mxu0 0.0
        %2274 = vmatpush1.msra.mxu0 0.0
        %2275 = vmatprep.subr.mxu0 0.0
        %2276 = vmatpush1.msra.mxu0 0.0
        %2277 = vmatprep.subr.mxu0 0.0
        %2278 = vmatpush1.msra.mxu0 0.0
        %2279 = vmatprep.subr.mxu0 0.0
        %2280 = vmatpush1.msra.mxu0 0.0
        %2281 = vmatprep.mubr.f32.mxu0 0.0
        %2282 = vmatmul.mubr.f32.gmra.mrb[0].mxu0 %v2215
        %v2283 = vpop.f32.mrb[0].mxu0
        %v2284 = vadd.f32 %v2211, %v2283
        %v2285 = vpop.f32.mrb[0].mxu0
        %2286 = vdwg.mxu0
        %v2287 = vld [vmem:[#allocation8 + $0x5a0] ss:$0 sm:$0xff]
        %v2288 = vadd.f32 %v2284, %v2287
        %v2289 = vmax.f32 %v2288, 0.0
        %v2290 = vld [vmem:[#allocation8 + $0x5b0] sm:$0xff]
        %v2291 = vld [vmem:[#allocation8 + $0x5c0] sm:$0xff]
        %v2292 = vld [vmem:[#allocation8 + $0x5d0] sm:$0xff]
        %v2293 = vld [vmem:[#allocation8 + $0x5e0] sm:$0xff]
        %v2294 = vld [vmem:[#allocation8 + $0x5f0] ss:$0 sm:$0xff]
        %v2296 = vsel %vm1376, %v2289, 0
        %2298 = vmatprep.subr.mxu0 0.0
        %2299 = vmatpush1.msra.mxu0 %v2290
        %2300 = vmatprep.subr.mxu0 0.0
        %2301 = vmatpush1.msra.mxu0 %v2291
        %2302 = vmatprep.subr.mxu0 0.0
        %2303 = vmatpush1.msra.mxu0 %v2292
        %2304 = vmatprep.subr.mxu0 0.0
        %2305 = vmatpush1.msra.mxu0 %v2293
        %2306 = vmatprep.subr.mxu0 0.0
        %2307 = vmatpush1.msra.mxu0 0.0
        %2308 = vmatprep.subr.mxu0 0.0
        %2309 = vmatpush1.msra.mxu0 0.0
        %2310 = vmatprep.subr.mxu0 0.0
        %2311 = vmatpush1.msra.mxu0 0.0
        %2312 = vmatprep.subr.mxu0 0.0
        %2313 = vmatpush1.msra.mxu0 0.0
        %2314 = vmatprep.subr.mxu0 0.0
        %2315 = vmatpush1.msra.mxu0 0.0
        %2316 = vmatprep.subr.mxu0 0.0
        %2317 = vmatpush1.msra.mxu0 0.0
        %2318 = vmatprep.subr.mxu0 0.0
        %2319 = vmatpush1.msra.mxu0 0.0
        %2320 = vmatprep.subr.mxu0 0.0
        %2321 = vmatpush1.msra.mxu0 0.0
        %2322 = vmatprep.subr.mxu0 0.0
        %2323 = vmatpush1.msra.mxu0 0.0
        %2324 = vmatprep.subr.mxu0 0.0
        %2325 = vmatpush1.msra.mxu0 0.0
        %2326 = vmatprep.subr.mxu0 0.0
        %2327 = vmatpush1.msra.mxu0 0.0
        %2328 = vmatprep.subr.mxu0 0.0
        %2329 = vmatpush1.msra.mxu0 0.0
        %2330 = vmatprep.subr.mxu0 0.0
        %2331 = vmatpush1.msra.mxu0 0.0
        %2332 = vmatprep.subr.mxu0 0.0
        %2333 = vmatpush1.msra.mxu0 0.0
        %2334 = vmatprep.subr.mxu0 0.0
        %2335 = vmatpush1.msra.mxu0 0.0
        %2336 = vmatprep.subr.mxu0 0.0
        %2337 = vmatpush1.msra.mxu0 0.0
        %2338 = vmatprep.subr.mxu0 0.0
        %2339 = vmatpush1.msra.mxu0 0.0
        %2340 = vmatprep.subr.mxu0 0.0
        %2341 = vmatpush1.msra.mxu0 0.0
        %2342 = vmatprep.subr.mxu0 0.0
        %2343 = vmatpush1.msra.mxu0 0.0
        %2344 = vmatprep.subr.mxu0 0.0
        %2345 = vmatpush1.msra.mxu0 0.0
        %2346 = vmatprep.subr.mxu0 0.0
        %2347 = vmatpush1.msra.mxu0 0.0
        %2348 = vmatprep.subr.mxu0 0.0
        %2349 = vmatpush1.msra.mxu0 0.0
        %2350 = vmatprep.subr.mxu0 0.0
        %2351 = vmatpush1.msra.mxu0 0.0
        %2352 = vmatprep.subr.mxu0 0.0
        %2353 = vmatpush1.msra.mxu0 0.0
        %2354 = vmatprep.subr.mxu0 0.0
        %2355 = vmatpush1.msra.mxu0 0.0
        %2356 = vmatprep.subr.mxu0 0.0
        %2357 = vmatpush1.msra.mxu0 0.0
        %2358 = vmatprep.subr.mxu0 0.0
        %2359 = vmatpush1.msra.mxu0 0.0
        %2360 = vmatprep.subr.mxu0 0.0
        %2361 = vmatpush1.msra.mxu0 0.0
        %2362 = vmatprep.mubr.f32.mxu0 0.0
        %2363 = vmatmul.mubr.f32.gmra.mrb[0].mxu0 %v2296
        %v2364 = vpop.f32.mrb[0].mxu0
        %v2365 = vadd.f32 %v2294, %v2364
        %v2366 = vpop.f32.mrb[0].mxu0
        %2367 = vdwg.mxu0
        %2368 = vst [vmem:[%s295] sm:$0xff] %v2124
        %v2369 = vlaneseq
        %v2370 = vshrl.u32 %v2369, 7
        %v2371 = vsub.s32 0, %v2370
        %v2372 = vrot.slane %v2365, %v2371
        %2373 = vst [vmem:[%s295 + $0x8] sm:$0xff] %v2372
        %s2374 = sand.u32 %s132, 1
        %s2375 = scalar_lea.sflag [#allocation4], %s2374
        %s2376 = sand.u32 %s132, 1
        %s2377 = smul.addr %s2376, 16
        %s2378 = scalar_lea.vmem [#allocation10], %s2377
        // Predicated region
        $region53: #{tpu_custom_call.1} parent=35 // pred_check
          %p2379 = pneg %p142
        $region54: #{tpu_custom_call.1} parent=35 // pred_check_branch
          %2381 = sbr.rel (%p2379) target = $region56
        $region55: #{tpu_custom_call.1} parent=35 // pred_region
          %s2383 = ssub.s32 256, 256
          %2384 = vsyncadd %s2375, %s2383
          %s2385 = smul.addr %s25, 2
          %s2386 = smul.addr %s2385, 128
          %s2387 = scalar_lea.hbm %s4, %s2386
          %s2388 = sshll.u32 %s2378, 4
          %s2389 = int_to_ptr.vmem [resolvable:$true] %s2388
          %2394 = dma.vmem_to_hbm [thread:$0]  %s2389, 256, %s2387, %s2375, 128, 128, 8
        $region56: #{tpu_custom_call.1} parent=35 // pred_fallthru
          _
      $region36: #{tpu_custom_call.1} parent=5 // pred_fallthru
        _
      %p2395 = scmp.le.s32.totalorder 2, %s20
      // Predicated region
      $region57: #{tpu_custom_call.1} parent=5 // pred_check
        %p2396 = pneg %p2395
      $region58: #{tpu_custom_call.1} parent=5 // pred_check_branch
        %2398 = sbr.rel (%p2396) target = $region60
      $region59: #{tpu_custom_call.1} parent=5 // pred_region
        %s2399 = ssub.s32 %s20, 2
        // Predicated region
        $region61: #{tpu_custom_call.1} parent=59 // pred_check
          %p2400 = pneg %p148
        $region62: #{tpu_custom_call.1} parent=59 // pred_check_branch
          %2402 = sbr.rel (%p2400) target = $region64
        $region63: #{tpu_custom_call.1} parent=59 // pred_region
          %s2403 = sand.u32 %s133, 1
          %s2404 = scalar_lea.sflag [#allocation4], %s2403
          %s2405 = sand.u32 %s133, 1
          %s2406 = smul.addr %s2405, 16
          %s2407 = scalar_lea.vmem [#allocation10], %s2406
          %2408 = dma.done %s2404, 256
        $region64: #{tpu_custom_call.1} parent=59 // pred_fallthru
          _
      $region60: #{tpu_custom_call.1} parent=5 // pred_fallthru
        _
    $region6: #{tpu_custom_call.1} parent=1 // loop_footer
      %s24 = sadd.s32 1, %s20
    $region7: #{tpu_custom_call.1} parent=1 // loop_footer_branch
      %19 = sbr.rel target = $region3
    $region8: #{tpu_custom_call.1} parent=1 // loop_exit
      _
    %2409 = vsyncpa [#allocation3], 1
    %s2410 = scalar_lea.sflag [#allocation3], 1
    %2411 = vsyncpa %s2410, 1
    %2412 = vsyncpa [#allocation6], 1
    %s2413 = scalar_lea.sflag [#allocation6], 1
    %2414 = vsyncpa %s2413, 1
    %2415 = vsyncpa [#allocation9], 1
    %2416 = vsyncpa [#allocation4], 1
    %s2417 = scalar_lea.sflag [#allocation4], 1
    %2418 = vsyncpa %s2417, 1

</llo_original>
